<compile_context>
chip_gen: v5e
topology: v5e:2x2
jax: 0.10.0
libtpu: 0.0.40
codegen_flags: <defaults>
</compile_context>

<pallas_src>
import functools
import math

import numpy as np
import jax
import jax.numpy as jnp
from jax.experimental import pallas as pl
from jax.experimental.pallas import tpu as pltpu

_SELU_ALPHA = 1.6732632423543772848170429916717
_SELU_SCALE = 1.0507009873554804934193349852946
_TWO_PI = 2.0 * math.pi


# ----------------------------- small helpers ---------------------------------
def _round_up(x, m):
    return ((x + m - 1) // m) * m


def _selu(x):
    # overflow-safe: exp only sees non-positive arguments
    return _SELU_SCALE * jnp.where(
        x > 0, x, _SELU_ALPHA * (jnp.exp(jnp.minimum(x, 0.0)) - 1.0))


def _sigmoid(x):
    e = jnp.exp(-jnp.abs(x))
    return jnp.where(x >= 0, 1.0 / (1.0 + e), e / (1.0 + e))


def _log_sigmoid(x):
    # stable log(sigmoid(x)) = -(max(-x,0) + log1p(exp(-|x|)))
    return -(jnp.maximum(-x, 0.0) + jnp.log1p(jnp.exp(-jnp.abs(x))))


def _mm(x, w):
    # MXU matmul with f32 accumulation; activations cast to the weight dtype
    # (bf16 weights -> bf16 x bf16 -> f32, f32 weights -> plain f32 matmul).
    return jnp.dot(x.astype(w.dtype), w, preferred_element_type=jnp.float32)


def _const_spec(shape):
    nd = len(shape)
    return pl.BlockSpec(shape, lambda b, _nd=nd: (0,) * _nd)


def _batch_spec(bt, *tail):
    shape = (bt,) + tail
    nd = len(shape)
    return pl.BlockSpec(shape, lambda b, _nd=nd: (b,) + (0,) * (_nd - 1))


# ------------------------------ fused kernel ----------------------------------
def _capsule_fused_kernel(feat_ref, pp_w1_ref, pp_b1_ref, pp_w2_ref, pp_b2_ref,
                          cw1_ref, cb1_ref, cw2_ref, cb2_ref,
                          cpr_stat_ref, b_ccr_ref, b_plpc_ref, b_plpv_ref,
                          rep_ref,
                          raw_ref, main_ref, plpc_ref, sq_ref,
                          *, n_caps, n_votes):
    NC, V = n_caps, n_votes
    NCV = NC * V                       # component slab width (128 in the demo)

    # ---- param_predict_mlp: [Bt, D] -> [Bt, NC*NCP] ----
    h1 = _selu(_mm(feat_ref[...], pp_w1_ref[...]) + pp_b1_ref[...])
    raw = _mm(h1, pp_w2_ref[...]) + pp_b2_ref[...]
    raw_ref[...] = raw.astype(raw_ref.dtype)

    # ---- caps_mlp, batched across capsules via block-diagonal weights ----
    # (the always-1.0 caps_exist column is folded into cb1; c_b2 is carried)
    h2 = _selu(_mm(raw, cw1_ref[...]) + cb1_ref[...])
    p = _mm(h2, cw2_ref[...]) + cb2_ref[...]

    # ---- cpr_dynamic: 6 component slabs of NCV lanes each ----
    cpr_dyn = p[:, :6 * NCV]
    # per-row sum of squares (l2 term finished in the wrapper so batch padding
    # rows can be excluded by slicing)
    sq_ref[...] = jnp.sum(cpr_dyn * cpr_dyn, axis=-1,
                          keepdims=True).astype(sq_ref.dtype)

    cpr = cpr_dyn + cpr_stat_ref[...]
    # geometric_transform(similarity=True, nonlinear=True) on full-width vregs
    b_scale = _sigmoid(cpr[:, 0 * NCV:1 * NCV]) + 1e-2
    b_theta = cpr[:, 2 * NCV:3 * NCV] * _TWO_PI
    b_tx = jnp.tanh(cpr[:, 4 * NCV:5 * NCV] * 5.0)
    b_ty = jnp.tanh(cpr[:, 5 * NCV:6 * NCV] * 5.0)
    b_cos = jnp.cos(b_theta)
    b_sin = jnp.sin(b_theta)
    b00 = b_scale * b_cos
    b01 = -b_scale * b_sin
    b02 = b_tx
    b10 = b_scale * b_sin
    b11 = b_scale * b_cos
    b12 = b_ty

    # ---- ccr: per-capsule pose (NC lanes/component), then vote replication ----
    ccr = p[:, 7 * NCV:7 * NCV + 6 * NC] + b_ccr_ref[...]
    a_scale = _sigmoid(ccr[:, 0 * NC:1 * NC]) + 1e-2
    a_theta = ccr[:, 2 * NC:3 * NC] * _TWO_PI
    a_tx = jnp.tanh(ccr[:, 4 * NC:5 * NC] * 5.0)
    a_ty = jnp.tanh(ccr[:, 5 * NC:6 * NC] * 5.0)
    a_cos = jnp.cos(a_theta)
    a_sin = jnp.sin(a_theta)

    rep_m = rep_ref[...]

    def rep(x):                        # [Bt, NC] -> [Bt, NC*V], exact 0/1 matmul
        return jnp.dot(x, rep_m, preferred_element_type=jnp.float32)

    a00 = rep(a_scale * a_cos)
    a01 = rep(-a_scale * a_sin)
    a02 = rep(a_tx)
    a10 = rep(a_scale * a_sin)
    a11 = rep(a_scale * a_cos)
    a12 = rep(a_ty)

    # ---- votes = CCR @ CPR (top 2x3; constant [0,0,1] row added in wrapper) ----
    v00 = a00 * b00 + a01 * b10
    v01 = a00 * b01 + a01 * b11
    v02 = a00 * b02 + a01 * b12 + a02
    v10 = a10 * b00 + a11 * b10
    v11 = a10 * b01 + a11 * b11
    v12 = a10 * b02 + a11 * b12 + a12

    # ---- presence logits ----
    plpv = p[:, 6 * NCV:7 * NCV] + b_plpv_ref[...]                       # [Bt, NCV]
    plpc = p[:, 7 * NCV + 6 * NC:7 * NCV + 7 * NC] + b_plpc_ref[...]     # [Bt, NC]
    lpv = rep(_log_sigmoid(plpc)) + _log_sigmoid(plpv)

    # ---- lane-dense, NCV-aligned component stores ----
    od = main_ref.dtype
    main_ref[:, 0 * NCV:1 * NCV] = v00.astype(od)
    main_ref[:, 1 * NCV:2 * NCV] = v01.astype(od)
    main_ref[:, 2 * NCV:3 * NCV] = v02.astype(od)
    main_ref[:, 3 * NCV:4 * NCV] = v10.astype(od)
    main_ref[:, 4 * NCV:5 * NCV] = v11.astype(od)
    main_ref[:, 5 * NCV:6 * NCV] = v12.astype(od)
    main_ref[:, 6 * NCV:7 * NCV] = lpv.astype(od)
    main_ref[:, 7 * NCV:8 * NCV] = plpv.astype(od)
    plpc_ref[...] = plpc.astype(plpc_ref.dtype)


# ------------------------------ parameters -----------------------------------
def init_params(key, *, in_dim, n_hidden, n_caps, n_caps_params, n_votes):
    """Parameters in the same layout as the PyTorch module."""
    n_outputs = n_votes * 6 + 6 + 1 + n_votes + n_votes
    k = jax.random.split(key, 5)
    return {
        # param_predict_mlp: Linear(D,H)+SELU+Linear(H, n_caps*n_caps_params)
        "pp_w1": jax.random.normal(k[0], (in_dim, n_hidden), jnp.float32) * 0.1,
        "pp_b1": jnp.zeros((1, n_hidden), jnp.float32),
        "pp_w2": jax.random.normal(
            k[1], (n_hidden, n_caps * n_caps_params), jnp.float32) * 0.1,
        "pp_b2": jnp.zeros((1, n_caps * n_caps_params), jnp.float32),
        # caps_mlp (use_bias=False -> zero biases, but carried anyway)
        "c_w1": jax.random.normal(
            k[2], (n_caps_params + 1, n_hidden), jnp.float32) * 0.1,
        "c_b1": jnp.zeros((1, n_hidden), jnp.float32),
        "c_w2": jax.random.normal(k[3], (n_hidden, n_outputs), jnp.float32) * 0.1,
        "c_b2": jnp.zeros((1, n_outputs), jnp.float32),
        # capsule-layer parameters (torch layout)
        "cpr_static": jax.random.normal(
            k[4], (1, n_caps, n_votes, 6), jnp.float32) * 0.1,
        "bias_ccr": jnp.zeros((1, n_caps, 1, 6), jnp.float32),
        "bias_plpc": jnp.zeros((1, n_caps, 1), jnp.float32),
        "bias_plpv": jnp.zeros((1, n_caps, n_votes), jnp.float32),
        "bias_spv": jnp.zeros((1, n_caps, n_votes), jnp.float32),  # unused
    }


def prepare_params(params, *, n_caps, n_caps_params, n_votes,
                   mxu_dtype=jnp.float32):
    """One-time host-side weight massaging for the fused kernel.

    Builds block-diagonal caps_mlp weights (batched across capsules) with a
    component-across-capsules output column layout, folds the caps_exist
    column into the first-layer bias, and re-lays per-capsule constants.
    `mxu_dtype=jnp.bfloat16` is the v6e/v7x MXU path (biases stay f32).
    """
    NC, V, NCP = n_caps, n_votes, n_caps_params
    H = params["pp_w1"].shape[1]
    NCV = NC * V

    # caps_mlp layer 1: fold caps_exist(=1) row into the bias, block-diag it.
    w1 = np.asarray(params["c_w1"], np.float32)
    b1 = np.asarray(params["c_b1"], np.float32) + w1[NCP:NCP + 1, :]
    cw1_bd = np.kron(np.eye(NC, dtype=np.float32), w1[:NCP, :])  # [NC*NCP, NC*H]
    cb1_rep = np.tile(b1, (1, NC))                                # [1, NC*H]

    # caps_mlp layer 2: block-diag + column scatter. Global column layout:
    #   [0,          6*NCV)  cpr_dynamic comp r : col = r*NCV + c*V + v
    #   [6*NCV,      7*NCV)  pres_logit_per_vote: col = 6*NCV + c*V + v
    #   [7*NCV, 7*NCV+6*NC)  ccr comp r         : col = 7*NCV + r*NC + c
    #   [.. +6*NC, ..+7*NC)  pres_logit_per_caps: col = 7*NCV + 6*NC + c
    # scale_per_vote columns dropped (learn_vote_scale=False); pad to 128 lanes.
    w2 = np.asarray(params["c_w2"], np.float32)
    b2 = np.asarray(params["c_b2"], np.float32)
    out2 = 7 * NCV + 7 * NC
    P2 = _round_up(out2, 128)
    cw2_bd = np.zeros((NC * H, P2), np.float32)
    cb2_bd = np.zeros((1, P2), np.float32)
    v_idx = np.arange(V)
    for c in range(NC):
        rows = slice(c * H, (c + 1) * H)
        for r in range(6):                                  # cpr_dynamic
            src = v_idx * 6 + r
            dst = r * NCV + c * V + v_idx
            cw2_bd[rows, dst] = w2[:, src]
            cb2_bd[0, dst] = b2[0, src]
        src = 6 * V + 6 + 1 + v_idx                         # pres_logit_per_vote
        dst = 6 * NCV + c * V + v_idx
        cw2_bd[rows, dst] = w2[:, src]
        cb2_bd[0, dst] = b2[0, src]
        src = 6 * V + np.arange(6)                          # ccr
        dst = 7 * NCV + np.arange(6) * NC + c
        cw2_bd[rows, dst] = w2[:, src]
        cb2_bd[0, dst] = b2[0, src]
        cw2_bd[rows, 7 * NCV + 6 * NC + c] = w2[:, 6 * V + 6]   # plpc
        cb2_bd[0, 7 * NCV + 6 * NC + c] = b2[0, 6 * V + 6]

    # per-capsule constants in the component-major layouts
    cpr_static = np.transpose(np.asarray(params["cpr_static"], np.float32)[0],
                              (2, 0, 1)).reshape(1, 6 * NCV)
    bias_ccr = np.transpose(
        np.asarray(params["bias_ccr"], np.float32)[0, :, 0, :],
        (1, 0)).reshape(1, 6 * NC)
    bias_plpc = np.asarray(params["bias_plpc"], np.float32).reshape(1, NC)
    bias_plpv = np.asarray(params["bias_plpv"], np.float32).reshape(1, NCV)

    # exact 0/1 capsule -> per-vote replication matrix (used on the MXU)
    rep = np.kron(np.eye(NC, dtype=np.float32), np.ones((1, V), np.float32))

    f32 = jnp.float32
    return {
        "pp_w1": jnp.asarray(params["pp_w1"], mxu_dtype),
        "pp_b1": jnp.asarray(params["pp_b1"], f32),
        "pp_w2": jnp.asarray(params["pp_w2"], mxu_dtype),
        "pp_b2": jnp.asarray(params["pp_b2"], f32),
        "c_w1_bd": jnp.asarray(cw1_bd, mxu_dtype),
        "c_b1_rep": jnp.asarray(cb1_rep, f32),
        "c_w2_bd": jnp.asarray(cw2_bd, mxu_dtype),
        "c_b2_bd": jnp.asarray(cb2_bd, f32),
        "cpr_static": jnp.asarray(cpr_static, f32),
        "bias_ccr": jnp.asarray(bias_ccr, f32),
        "bias_plpc": jnp.asarray(bias_plpc, f32),
        "bias_plpv": jnp.asarray(bias_plpv, f32),
        "rep": jnp.asarray(rep, f32),
    }


# ------------------------------ forward pass ----------------------------------
def capsule_layer_forward(features, kparams, *, n_caps, n_caps_params, n_votes,
                          b_tile=128):
    """Eval-mode forward pass (caps_dropout_rate=0, no noise, no parents)."""
    features = features.astype(jnp.float32)
    B, D = features.shape
    NC, V, NCP = n_caps, n_votes, n_caps_params
    NCV = NC * V

    # pad the batch to a multiple of the batch tile (sublane multiple of 8)
    Bp = _round_up(B, 8)
    bt = min(_round_up(b_tile, 8), Bp)
    Bp = _round_up(Bp, bt)
    grid = (Bp // bt,)
    feat = jnp.pad(features, ((0, Bp - B), (0, 0)))

    kernel = functools.partial(_capsule_fused_kernel, n_caps=NC, n_votes=V)

    weight_names = ["pp_w1", "pp_b1", "pp_w2", "pp_b2",
                    "c_w1_bd", "c_b1_rep", "c_w2_bd", "c_b2_bd",
                    "cpr_static", "bias_ccr", "bias_plpc", "bias_plpv", "rep"]
    weights = [kparams[n] for n in weight_names]

    in_specs = [_batch_spec(bt, D)] + [_const_spec(w.shape) for w in weights]
    out_shapes = (
        jax.ShapeDtypeStruct((Bp, NC * NCP), jnp.float32),   # raw caps params
        jax.ShapeDtypeStruct((Bp, 8 * NCV), jnp.float32),    # 8 component slabs
        jax.ShapeDtypeStruct((Bp, NC), jnp.float32),         # pres_logit_per_caps
        jax.ShapeDtypeStruct((Bp, 1), jnp.float32),          # per-row sum(cpr^2)
    )
    out_specs = (_batch_spec(bt, NC * NCP), _batch_spec(bt, 8 * NCV),
                 _batch_spec(bt, NC), _batch_spec(bt, 1))

    raw, main, plpc, sq = pl.pallas_call(
        kernel,
        grid=grid,
        in_specs=in_specs,
        out_specs=out_specs,
        out_shape=out_shapes,
        compiler_params=pltpu.CompilerParams(
            dimension_semantics=("parallel",),      # megacore-shardable batch
            vmem_limit_bytes=48 * 1024 * 1024),     # fits v7x's 64 MiB VMEM
    )(feat, *weights)

    # ---- thin glue: drop padding rows, metadata reshapes, constant row ----
    raw = raw[:B]
    main = main[:B].reshape(B, 8, NC, V)
    plpc = plpc[:B]

    vote_6d = jnp.transpose(main[:, :6], (0, 2, 3, 1))        # [B, NC, V, 6]
    bottom = jnp.broadcast_to(jnp.array([0.0, 0.0, 1.0], jnp.float32),
                              (B, NC, V, 1, 3))
    vote = jnp.concatenate([vote_6d.reshape(B, NC, V, 2, 3), bottom], axis=-2)

    return dict(
        vote=vote,
        vote_6d=vote_6d,
        scale=jnp.ones((B, NC, V), jnp.float32),    # learn_vote_scale=False
        vote_presence_logit=main[:, 6],
        pres_logit_per_caps=plpc.reshape(B, NC, 1),
        pres_logit_per_vote=main[:, 7],
        object_caps_presence_prob=jax.nn.sigmoid(plpc),
        dynamic_weights_l2=0.5 * jnp.sum(sq[:B, 0]) / float(B),
        raw_caps_params=raw.reshape(B, NC, NCP),
    )
    # TODO(synk): training-only paths (bernoulli caps dropout, noise_type) and
    # parent_transform / parent_presence inputs are not implemented; eval-mode
    # semantics only.


# --------------------------- pure-JAX reference --------------------------------
def reference_forward(features, params, *, n_caps, n_caps_params, n_votes):
    """Direct jnp port of the torch forward (eval mode), for validation."""
    B = features.shape[0]
    V = n_votes
    NC = n_caps
    hi = jax.lax.Precision.HIGHEST

    def geo(pose):  # [..., 6] -> [..., 3, 3]
        scale = jax.nn.sigmoid(pose[..., 0:1]) + 1e-2
        theta = pose[..., 2:3] * _TWO_PI
        tx = jnp.tanh(pose[..., 4:5] * 5.0)
        ty = jnp.tanh(pose[..., 5:6] * 5.0)
        c, s = jnp.cos(theta), jnp.sin(theta)
        zeros, ones = jnp.zeros_like(tx), jnp.ones_like(tx)
        row0 = jnp.concatenate([scale * c, -scale * s, tx], -1)
        row1 = jnp.concatenate([scale * s, scale * c, ty], -1)
        row2 = jnp.concatenate([zeros, zeros, ones], -1)
        return jnp.stack([row0, row1, row2], -2)

    h = jax.nn.selu(jnp.dot(features, params["pp_w1"], precision=hi)
                    + params["pp_b1"])
    raw = jnp.dot(h, params["pp_w2"], precision=hi) + params["pp_b2"]
    caps_params = raw.reshape(B, NC, n_caps_params)
    caps_exist = jnp.ones((B, NC, 1), jnp.float32)
    x = jnp.concatenate([caps_params, caps_exist], -1)
    h2 = jax.nn.selu(jnp.dot(x, params["c_w1"], precision=hi) + params["c_b1"])
    allp = jnp.dot(h2, params["c_w2"], precision=hi) + params["c_b2"]

    cpr_dynamic = allp[..., :6 * V].reshape(B, NC, V, 6)
    ccr = allp[..., 6 * V:6 * V + 6].reshape(B, NC, 1, 6) + params["bias_ccr"]
    plpc = allp[..., 6 * V + 6:6 * V + 7] + params["bias_plpc"]
    plpv = allp[..., 6 * V + 7:7 * V + 7] + params["bias_plpv"]

    ccr_mat = geo(ccr[:, :, 0])                                   # [B,NC,3,3]
    cpr_mat = geo(cpr_dynamic + params["cpr_static"])             # [B,NC,V,3,3]
    votes = jnp.einsum("bcij,bcvjk->bcvik", ccr_mat, cpr_mat, precision=hi)
    vote_6d = votes[..., :2, :].reshape(B, NC, V, 6)
    lpv = jax.nn.log_sigmoid(plpc) + jax.nn.log_sigmoid(plpv)
    return dict(
        vote=votes, vote_6d=vote_6d,
        scale=jnp.ones((B, NC, V), jnp.float32),
        vote_presence_logit=lpv,
        pres_logit_per_caps=plpc,
        pres_logit_per_vote=plpv,
        object_caps_presence_prob=jax.nn.sigmoid(plpc[..., 0]),
        dynamic_weights_l2=jnp.sum(cpr_dynamic ** 2) * 0.5 / float(B),
        raw_caps_params=caps_params,
    )


# --------------------------------- main ---------------------------------------
if __name__ == "__main__":
    B, D = 2, 64
    n_caps, n_caps_params, n_votes, n_hidden = 8, 32, 16, 128   # NC*V = 128 lanes

    key = jax.random.PRNGKey(0)
    k_x, k_p = jax.random.split(key)
    features = jax.random.normal(k_x, (B, D), jnp.float32)
    params = init_params(k_p, in_dim=D, n_hidden=n_hidden, n_caps=n_caps,
                         n_caps_params=n_caps_params, n_votes=n_votes)

    fwd = jax.jit(functools.partial(
        capsule_layer_forward, n_caps=n_caps, n_caps_params=n_caps_params,
        n_votes=n_votes))

    # ---- f32-weight run: validated against the pure-JAX torch port ----
    kparams = prepare_params(params, n_caps=n_caps,
                             n_caps_params=n_caps_params, n_votes=n_votes,
                             mxu_dtype=jnp.float32)
    out = jax.block_until_ready(fwd(features, kparams))

    assert out["vote"].shape == (B, n_caps, n_votes, 3, 3)
    assert out["vote_6d"].shape == (B, n_caps, n_votes, 6)
    assert out["scale"].shape == (B, n_caps, n_votes)
    assert out["vote_presence_logit"].shape == (B, n_caps, n_votes)
    assert out["pres_logit_per_caps"].shape == (B, n_caps, 1)
    assert out["pres_logit_per_vote"].shape == (B, n_caps, n_votes)
    assert out["object_caps_presence_prob"].shape == (B, n_caps)
    assert out["raw_caps_params"].shape == (B, n_caps, n_caps_params)
    assert out["dynamic_weights_l2"].shape == ()

    ref = jax.block_until_ready(
        reference_forward(features, params, n_caps=n_caps,
                          n_caps_params=n_caps_params, n_votes=n_votes))
    for name in ("vote", "vote_6d", "scale", "vote_presence_logit",
                 "pres_logit_per_caps", "pres_logit_per_vote",
                 "object_caps_presence_prob", "dynamic_weights_l2",
                 "raw_caps_params"):
        assert jnp.allclose(out[name], ref[name], atol=2e-2, rtol=2e-2), name

    # ---- bf16-weight run (v6e/v7x MXU path): compile + run sanity check ----
    kparams_bf16 = prepare_params(params, n_caps=n_caps,
                                  n_caps_params=n_caps_params, n_votes=n_votes,
                                  mxu_dtype=jnp.bfloat16)
    out_bf16 = jax.block_until_ready(fwd(features, kparams_bf16))
    assert bool(jnp.all(jnp.isfinite(out_bf16["vote"])))
    assert bool(jnp.isfinite(out_bf16["dynamic_weights_l2"]))

    print("KERNEL_OK")
</pallas_src>

<mosaic_0001>
module attributes {stable_mosaic.version = 11 : i64} {
  func.func @_capsule_fused_kernel(%arg0: i32, %arg1: memref<8x64xf32, #tpu.memory_space<vmem>>, %arg2: memref<64x128xf32, #tpu.memory_space<vmem>>, %arg3: memref<1x128xf32, #tpu.memory_space<vmem>>, %arg4: memref<128x256xf32, #tpu.memory_space<vmem>>, %arg5: memref<1x256xf32, #tpu.memory_space<vmem>>, %arg6: memref<256x1024xf32, #tpu.memory_space<vmem>>, %arg7: memref<1x1024xf32, #tpu.memory_space<vmem>>, %arg8: memref<1024x1024xf32, #tpu.memory_space<vmem>>, %arg9: memref<1x1024xf32, #tpu.memory_space<vmem>>, %arg10: memref<1x768xf32, #tpu.memory_space<vmem>>, %arg11: memref<1x48xf32, #tpu.memory_space<vmem>>, %arg12: memref<1x8xf32, #tpu.memory_space<vmem>>, %arg13: memref<1x128xf32, #tpu.memory_space<vmem>>, %arg14: memref<8x128xf32, #tpu.memory_space<vmem>>, %arg15: memref<8x256xf32, #tpu.memory_space<vmem>>, %arg16: memref<8x1024xf32, #tpu.memory_space<vmem>>, %arg17: memref<8x8xf32, #tpu.memory_space<vmem>>, %arg18: memref<8x1xf32, #tpu.memory_space<vmem>>) attributes {dimension_semantics = [#tpu.dimension_semantics<parallel>], iteration_bounds = array<i64: 1>, scalar_prefetch = 0 : i64, scratch_operands = 0 : i64, tpu.core_type = #tpu.core_type<tc>, window_params = [{transform_indices = @transform_0, window_bounds = array<i64: 8, 64>}, {pipeline_mode = #tpu.pipeline_mode<synchronous>, transform_indices = @transform_1, window_bounds = array<i64: 64, 128>}, {pipeline_mode = #tpu.pipeline_mode<synchronous>, transform_indices = @transform_2, window_bounds = array<i64: 1, 128>}, {pipeline_mode = #tpu.pipeline_mode<synchronous>, transform_indices = @transform_3, window_bounds = array<i64: 128, 256>}, {pipeline_mode = #tpu.pipeline_mode<synchronous>, transform_indices = @transform_4, window_bounds = array<i64: 1, 256>}, {pipeline_mode = #tpu.pipeline_mode<synchronous>, transform_indices = @transform_5, window_bounds = array<i64: 256, 1024>}, {pipeline_mode = #tpu.pipeline_mode<synchronous>, transform_indices = @transform_6, window_bounds = array<i64: 1, 1024>}, {pipeline_mode = #tpu.pipeline_mode<synchronous>, transform_indices = @transform_7, window_bounds = array<i64: 1024, 1024>}, {pipeline_mode = #tpu.pipeline_mode<synchronous>, transform_indices = @transform_8, window_bounds = array<i64: 1, 1024>}, {pipeline_mode = #tpu.pipeline_mode<synchronous>, transform_indices = @transform_9, window_bounds = array<i64: 1, 768>}, {pipeline_mode = #tpu.pipeline_mode<synchronous>, transform_indices = @transform_10, window_bounds = array<i64: 1, 48>}, {pipeline_mode = #tpu.pipeline_mode<synchronous>, transform_indices = @transform_11, window_bounds = array<i64: 1, 8>}, {pipeline_mode = #tpu.pipeline_mode<synchronous>, transform_indices = @transform_12, window_bounds = array<i64: 1, 128>}, {pipeline_mode = #tpu.pipeline_mode<synchronous>, transform_indices = @transform_13, window_bounds = array<i64: 8, 128>}, {transform_indices = @transform_14, window_bounds = array<i64: 8, 256>}, {transform_indices = @transform_15, window_bounds = array<i64: 8, 1024>}, {transform_indices = @transform_16, window_bounds = array<i64: 8, 8>}, {transform_indices = @transform_17, window_bounds = array<i64: 8, 1>}]} {
    %c0 = arith.constant 0 : index
    %c0_0 = arith.constant 0 : index
    %0 = vector.load %arg1[%c0, %c0_0] : memref<8x64xf32, #tpu.memory_space<vmem>>, vector<8x64xf32>
    %c0_1 = arith.constant 0 : index
    %c0_2 = arith.constant 0 : index
    %1 = vector.load %arg2[%c0_1, %c0_2] : memref<64x128xf32, #tpu.memory_space<vmem>>, vector<64x128xf32>
    %cst = arith.constant dense<0.000000e+00> : vector<8x128xf32>
    %2 = tpu.matmul %0, %1, %cst {dimension_numbers = #tpu.dot_dimension_numbers<[1], [0], [0], [1], [0, 0, 1, 1], [], []>} : vector<8x64xf32>, vector<64x128xf32>, vector<8x128xf32> -> vector<8x128xf32>
    %c0_3 = arith.constant 0 : index
    %c0_4 = arith.constant 0 : index
    %3 = vector.load %arg3[%c0_3, %c0_4] : memref<1x128xf32, #tpu.memory_space<vmem>>, vector<1x128xf32>
    %4 = vector.broadcast %3 : vector<1x128xf32> to vector<8x128xf32>
    %5 = arith.addf %2, %4 : vector<8x128xf32>
    %cst_5 = arith.constant 0.000000e+00 : f32
    %6 = vector.broadcast %cst_5 : f32 to vector<8x128xf32>
    %7 = arith.cmpf ogt, %5, %6 : vector<8x128xf32>
    %cst_6 = arith.constant 0.000000e+00 : f32
    %8 = vector.broadcast %cst_6 : f32 to vector<8x128xf32>
    %9 = arith.minimumf %5, %8 : vector<8x128xf32>
    %10 = math.exp %9 : vector<8x128xf32>
    %cst_7 = arith.constant 1.000000e+00 : f32
    %11 = vector.broadcast %cst_7 : f32 to vector<8x128xf32>
    %12 = arith.subf %10, %11 : vector<8x128xf32>
    %cst_8 = arith.constant 1.67326319 : f32
    %13 = vector.broadcast %cst_8 : f32 to vector<8x128xf32>
    %14 = arith.mulf %13, %12 : vector<8x128xf32>
    %15 = arith.select %7, %5, %14 : vector<8x128xi1>, vector<8x128xf32>
    %cst_9 = arith.constant 1.05070102 : f32
    %16 = vector.broadcast %cst_9 : f32 to vector<8x128xf32>
    %17 = arith.mulf %16, %15 : vector<8x128xf32>
    %c0_10 = arith.constant 0 : index
    %c0_11 = arith.constant 0 : index
    %18 = vector.load %arg4[%c0_10, %c0_11] : memref<128x256xf32, #tpu.memory_space<vmem>>, vector<128x256xf32>
    %cst_12 = arith.constant dense<0.000000e+00> : vector<8x256xf32>
    %19 = tpu.matmul %17, %18, %cst_12 {dimension_numbers = #tpu.dot_dimension_numbers<[1], [0], [0], [1], [0, 0, 1, 1], [], []>} : vector<8x128xf32>, vector<128x256xf32>, vector<8x256xf32> -> vector<8x256xf32>
    %c0_13 = arith.constant 0 : index
    %c0_14 = arith.constant 0 : index
    %20 = vector.load %arg5[%c0_13, %c0_14] : memref<1x256xf32, #tpu.memory_space<vmem>>, vector<1x256xf32>
    %21 = vector.broadcast %20 : vector<1x256xf32> to vector<8x256xf32>
    %22 = arith.addf %19, %21 : vector<8x256xf32>
    %c0_15 = arith.constant 0 : index
    %c0_16 = arith.constant 0 : index
    %23 = vector.load %arg15[%c0_15, %c0_16] : memref<8x256xf32, #tpu.memory_space<vmem>>, vector<8x256xf32>
    tpu.vector_store %arg15[%c0_15, %c0_16], %22 {strides = array<i32>} : memref<8x256xf32, #tpu.memory_space<vmem>>, vector<8x256xf32>,
    %c0_17 = arith.constant 0 : index
    %c0_18 = arith.constant 0 : index
    %24 = vector.load %arg6[%c0_17, %c0_18] : memref<256x1024xf32, #tpu.memory_space<vmem>>, vector<256x1024xf32>
    %cst_19 = arith.constant dense<0.000000e+00> : vector<8x1024xf32>
    %25 = tpu.matmul %22, %24, %cst_19 {dimension_numbers = #tpu.dot_dimension_numbers<[1], [0], [0], [1], [0, 0, 1, 1], [], []>} : vector<8x256xf32>, vector<256x1024xf32>, vector<8x1024xf32> -> vector<8x1024xf32>
    %c0_20 = arith.constant 0 : index
    %c0_21 = arith.constant 0 : index
    %26 = vector.load %arg7[%c0_20, %c0_21] : memref<1x1024xf32, #tpu.memory_space<vmem>>, vector<1x1024xf32>
    %27 = vector.broadcast %26 : vector<1x1024xf32> to vector<8x1024xf32>
    %28 = arith.addf %25, %27 : vector<8x1024xf32>
    %cst_22 = arith.constant 0.000000e+00 : f32
    %29 = vector.broadcast %cst_22 : f32 to vector<8x1024xf32>
    %30 = arith.cmpf ogt, %28, %29 : vector<8x1024xf32>
    %cst_23 = arith.constant 0.000000e+00 : f32
    %31 = vector.broadcast %cst_23 : f32 to vector<8x1024xf32>
    %32 = arith.minimumf %28, %31 : vector<8x1024xf32>
    %33 = math.exp %32 : vector<8x1024xf32>
    %cst_24 = arith.constant 1.000000e+00 : f32
    %34 = vector.broadcast %cst_24 : f32 to vector<8x1024xf32>
    %35 = arith.subf %33, %34 : vector<8x1024xf32>
    %cst_25 = arith.constant 1.67326319 : f32
    %36 = vector.broadcast %cst_25 : f32 to vector<8x1024xf32>
    %37 = arith.mulf %36, %35 : vector<8x1024xf32>
    %38 = arith.select %30, %28, %37 : vector<8x1024xi1>, vector<8x1024xf32>
    %cst_26 = arith.constant 1.05070102 : f32
    %39 = vector.broadcast %cst_26 : f32 to vector<8x1024xf32>
    %40 = arith.mulf %39, %38 : vector<8x1024xf32>
    %c0_27 = arith.constant 0 : index
    %c0_28 = arith.constant 0 : index
    %41 = vector.load %arg8[%c0_27, %c0_28] : memref<1024x1024xf32, #tpu.memory_space<vmem>>, vector<1024x1024xf32>
    %cst_29 = arith.constant dense<0.000000e+00> : vector<8x1024xf32>
    %42 = tpu.matmul %40, %41, %cst_29 {dimension_numbers = #tpu.dot_dimension_numbers<[1], [0], [0], [1], [0, 0, 1, 1], [], []>} : vector<8x1024xf32>, vector<1024x1024xf32>, vector<8x1024xf32> -> vector<8x1024xf32>
    %c0_30 = arith.constant 0 : index
    %c0_31 = arith.constant 0 : index
    %43 = vector.load %arg9[%c0_30, %c0_31] : memref<1x1024xf32, #tpu.memory_space<vmem>>, vector<1x1024xf32>
    %44 = vector.broadcast %43 : vector<1x1024xf32> to vector<8x1024xf32>
    %45 = arith.addf %42, %44 : vector<8x1024xf32>
    %46 = vector.extract_strided_slice %45 {offsets = [0, 0], sizes = [8, 768], strides = [1, 1]} : vector<8x1024xf32> to vector<8x768xf32>
    %47 = arith.mulf %46, %46 : vector<8x768xf32>
    %cst_32 = arith.constant dense<0.000000e+00> : vector<8xf32>
    %48 = vector.multi_reduction <add>, %47, %cst_32 [1] : vector<8x768xf32> to vector<8xf32>
    %49 = vector.shape_cast %48 : vector<8xf32> to vector<8x1xf32>
    %c0_33 = arith.constant 0 : index
    %c0_34 = arith.constant 0 : index
    %50 = vector.load %arg18[%c0_33, %c0_34] : memref<8x1xf32, #tpu.memory_space<vmem>>, vector<8x1xf32>
    tpu.vector_store %arg18[%c0_33, %c0_34], %49 {strides = array<i32>} : memref<8x1xf32, #tpu.memory_space<vmem>>, vector<8x1xf32>,
    %c0_35 = arith.constant 0 : index
    %c0_36 = arith.constant 0 : index
    %51 = vector.load %arg10[%c0_35, %c0_36] : memref<1x768xf32, #tpu.memory_space<vmem>>, vector<1x768xf32>
    %52 = vector.broadcast %51 : vector<1x768xf32> to vector<8x768xf32>
    %53 = arith.addf %46, %52 : vector<8x768xf32>
    %54 = vector.extract_strided_slice %53 {offsets = [0, 0], sizes = [8, 128], strides = [1, 1]} : vector<8x768xf32> to vector<8x128xf32>
    %55 = math.absf %54 : vector<8x128xf32>
    %cst_37 = arith.constant 0.000000e+00 : f32
    %56 = vector.broadcast %cst_37 : f32 to vector<8x128xf32>
    %57 = arith.subf %56, %55 : vector<8x128xf32>
    %58 = math.exp %57 : vector<8x128xf32>
    %cst_38 = arith.constant 0.000000e+00 : f32
    %59 = vector.broadcast %cst_38 : f32 to vector<8x128xf32>
    %60 = arith.cmpf oge, %54, %59 : vector<8x128xf32>
    %cst_39 = arith.constant 1.000000e+00 : f32
    %61 = vector.broadcast %cst_39 : f32 to vector<8x128xf32>
    %62 = arith.addf %61, %58 : vector<8x128xf32>
    %cst_40 = arith.constant 1.000000e+00 : f32
    %63 = vector.broadcast %cst_40 : f32 to vector<8x128xf32>
    %64 = arith.divf %63, %62 : vector<8x128xf32>
    %cst_41 = arith.constant 1.000000e+00 : f32
    %65 = vector.broadcast %cst_41 : f32 to vector<8x128xf32>
    %66 = arith.addf %65, %58 : vector<8x128xf32>
    %67 = arith.divf %58, %66 : vector<8x128xf32>
    %68 = arith.select %60, %64, %67 : vector<8x128xi1>, vector<8x128xf32>
    %cst_42 = arith.constant 0.00999999977 : f32
    %69 = vector.broadcast %cst_42 : f32 to vector<8x128xf32>
    %70 = arith.addf %68, %69 : vector<8x128xf32>
    %71 = vector.extract_strided_slice %53 {offsets = [0, 256], sizes = [8, 128], strides = [1, 1]} : vector<8x768xf32> to vector<8x128xf32>
    %cst_43 = arith.constant 6.28318548 : f32
    %72 = vector.broadcast %cst_43 : f32 to vector<8x128xf32>
    %73 = arith.mulf %71, %72 : vector<8x128xf32>
    %74 = vector.extract_strided_slice %53 {offsets = [0, 512], sizes = [8, 128], strides = [1, 1]} : vector<8x768xf32> to vector<8x128xf32>
    %cst_44 = arith.constant 5.000000e+00 : f32
    %75 = vector.broadcast %cst_44 : f32 to vector<8x128xf32>
    %76 = arith.mulf %74, %75 : vector<8x128xf32>
    %77 = math.tanh %76 : vector<8x128xf32>
    %78 = vector.extract_strided_slice %53 {offsets = [0, 640], sizes = [8, 128], strides = [1, 1]} : vector<8x768xf32> to vector<8x128xf32>
    %cst_45 = arith.constant 5.000000e+00 : f32
    %79 = vector.broadcast %cst_45 : f32 to vector<8x128xf32>
    %80 = arith.mulf %78, %79 : vector<8x128xf32>
    %81 = math.tanh %80 : vector<8x128xf32>
    %82 = math.cos %73 : vector<8x128xf32>
    %83 = math.sin %73 : vector<8x128xf32>
    %84 = arith.mulf %70, %82 : vector<8x128xf32>
    %cst_46 = arith.constant 0.000000e+00 : f32
    %85 = vector.broadcast %cst_46 : f32 to vector<8x128xf32>
    %86 = arith.subf %85, %70 : vector<8x128xf32>
    %87 = arith.mulf %86, %83 : vector<8x128xf32>
    %88 = arith.mulf %70, %83 : vector<8x128xf32>
    %89 = arith.mulf %70, %82 : vector<8x128xf32>
    %90 = vector.extract_strided_slice %45 {offsets = [0, 896], sizes = [8, 48], strides = [1, 1]} : vector<8x1024xf32> to vector<8x48xf32>
    %c0_47 = arith.constant 0 : index
    %c0_48 = arith.constant 0 : index
    %91 = vector.load %arg11[%c0_47, %c0_48] : memref<1x48xf32, #tpu.memory_space<vmem>>, vector<1x48xf32>
    %92 = vector.broadcast %91 : vector<1x48xf32> to vector<8x48xf32>
    %93 = arith.addf %90, %92 : vector<8x48xf32>
    %94 = vector.extract_strided_slice %93 {offsets = [0, 0], sizes = [8, 8], strides = [1, 1]} : vector<8x48xf32> to vector<8x8xf32>
    %95 = math.absf %94 : vector<8x8xf32>
    %cst_49 = arith.constant 0.000000e+00 : f32
    %96 = vector.broadcast %cst_49 : f32 to vector<8x8xf32>
    %97 = arith.subf %96, %95 : vector<8x8xf32>
    %98 = math.exp %97 : vector<8x8xf32>
    %cst_50 = arith.constant 0.000000e+00 : f32
    %99 = vector.broadcast %cst_50 : f32 to vector<8x8xf32>
    %100 = arith.cmpf oge, %94, %99 : vector<8x8xf32>
    %cst_51 = arith.constant 1.000000e+00 : f32
    %101 = vector.broadcast %cst_51 : f32 to vector<8x8xf32>
    %102 = arith.addf %101, %98 : vector<8x8xf32>
    %cst_52 = arith.constant 1.000000e+00 : f32
    %103 = vector.broadcast %cst_52 : f32 to vector<8x8xf32>
    %104 = arith.divf %103, %102 : vector<8x8xf32>
    %cst_53 = arith.constant 1.000000e+00 : f32
    %105 = vector.broadcast %cst_53 : f32 to vector<8x8xf32>
    %106 = arith.addf %105, %98 : vector<8x8xf32>
    %107 = arith.divf %98, %106 : vector<8x8xf32>
    %108 = arith.select %100, %104, %107 : vector<8x8xi1>, vector<8x8xf32>
    %cst_54 = arith.constant 0.00999999977 : f32
    %109 = vector.broadcast %cst_54 : f32 to vector<8x8xf32>
    %110 = arith.addf %108, %109 : vector<8x8xf32>
    %111 = vector.extract_strided_slice %93 {offsets = [0, 16], sizes = [8, 8], strides = [1, 1]} : vector<8x48xf32> to vector<8x8xf32>
    %cst_55 = arith.constant 6.28318548 : f32
    %112 = vector.broadcast %cst_55 : f32 to vector<8x8xf32>
    %113 = arith.mulf %111, %112 : vector<8x8xf32>
    %114 = vector.extract_strided_slice %93 {offsets = [0, 32], sizes = [8, 8], strides = [1, 1]} : vector<8x48xf32> to vector<8x8xf32>
    %cst_56 = arith.constant 5.000000e+00 : f32
    %115 = vector.broadcast %cst_56 : f32 to vector<8x8xf32>
    %116 = arith.mulf %114, %115 : vector<8x8xf32>
    %117 = math.tanh %116 : vector<8x8xf32>
    %118 = vector.extract_strided_slice %93 {offsets = [0, 40], sizes = [8, 8], strides = [1, 1]} : vector<8x48xf32> to vector<8x8xf32>
    %cst_57 = arith.constant 5.000000e+00 : f32
    %119 = vector.broadcast %cst_57 : f32 to vector<8x8xf32>
    %120 = arith.mulf %118, %119 : vector<8x8xf32>
    %121 = math.tanh %120 : vector<8x8xf32>
    %122 = math.cos %113 : vector<8x8xf32>
    %123 = math.sin %113 : vector<8x8xf32>
    %c0_58 = arith.constant 0 : index
    %c0_59 = arith.constant 0 : index
    %124 = vector.load %arg14[%c0_58, %c0_59] : memref<8x128xf32, #tpu.memory_space<vmem>>, vector<8x128xf32>
    %125 = arith.mulf %110, %122 : vector<8x8xf32>
    %cst_60 = arith.constant dense<0.000000e+00> : vector<8x128xf32>
    %126 = tpu.matmul %125, %124, %cst_60 {dimension_numbers = #tpu.dot_dimension_numbers<[1], [0], [0], [1], [0, 0, 1, 1], [], []>} : vector<8x8xf32>, vector<8x128xf32>, vector<8x128xf32> -> vector<8x128xf32>
    %cst_61 = arith.constant 0.000000e+00 : f32
    %127 = vector.broadcast %cst_61 : f32 to vector<8x8xf32>
    %128 = arith.subf %127, %110 : vector<8x8xf32>
    %129 = arith.mulf %128, %123 : vector<8x8xf32>
    %cst_62 = arith.constant dense<0.000000e+00> : vector<8x128xf32>
    %130 = tpu.matmul %129, %124, %cst_62 {dimension_numbers = #tpu.dot_dimension_numbers<[1], [0], [0], [1], [0, 0, 1, 1], [], []>} : vector<8x8xf32>, vector<8x128xf32>, vector<8x128xf32> -> vector<8x128xf32>
    %cst_63 = arith.constant dense<0.000000e+00> : vector<8x128xf32>
    %131 = tpu.matmul %117, %124, %cst_63 {dimension_numbers = #tpu.dot_dimension_numbers<[1], [0], [0], [1], [0, 0, 1, 1], [], []>} : vector<8x8xf32>, vector<8x128xf32>, vector<8x128xf32> -> vector<8x128xf32>
    %132 = arith.mulf %110, %123 : vector<8x8xf32>
    %cst_64 = arith.constant dense<0.000000e+00> : vector<8x128xf32>
    %133 = tpu.matmul %132, %124, %cst_64 {dimension_numbers = #tpu.dot_dimension_numbers<[1], [0], [0], [1], [0, 0, 1, 1], [], []>} : vector<8x8xf32>, vector<8x128xf32>, vector<8x128xf32> -> vector<8x128xf32>
    %134 = arith.mulf %110, %122 : vector<8x8xf32>
    %cst_65 = arith.constant dense<0.000000e+00> : vector<8x128xf32>
    %135 = tpu.matmul %134, %124, %cst_65 {dimension_numbers = #tpu.dot_dimension_numbers<[1], [0], [0], [1], [0, 0, 1, 1], [], []>} : vector<8x8xf32>, vector<8x128xf32>, vector<8x128xf32> -> vector<8x128xf32>
    %cst_66 = arith.constant dense<0.000000e+00> : vector<8x128xf32>
    %136 = tpu.matmul %121, %124, %cst_66 {dimension_numbers = #tpu.dot_dimension_numbers<[1], [0], [0], [1], [0, 0, 1, 1], [], []>} : vector<8x8xf32>, vector<8x128xf32>, vector<8x128xf32> -> vector<8x128xf32>
    %137 = arith.mulf %126, %84 : vector<8x128xf32>
    %138 = arith.mulf %130, %88 : vector<8x128xf32>
    %139 = arith.addf %137, %138 : vector<8x128xf32>
    %140 = arith.mulf %126, %87 : vector<8x128xf32>
    %141 = arith.mulf %130, %89 : vector<8x128xf32>
    %142 = arith.addf %140, %141 : vector<8x128xf32>
    %143 = arith.mulf %126, %77 : vector<8x128xf32>
    %144 = arith.mulf %130, %81 : vector<8x128xf32>
    %145 = arith.addf %143, %144 : vector<8x128xf32>
    %146 = arith.addf %145, %131 : vector<8x128xf32>
    %147 = arith.mulf %133, %84 : vector<8x128xf32>
    %148 = arith.mulf %135, %88 : vector<8x128xf32>
    %149 = arith.addf %147, %148 : vector<8x128xf32>
    %150 = arith.mulf %133, %87 : vector<8x128xf32>
    %151 = arith.mulf %135, %89 : vector<8x128xf32>
    %152 = arith.addf %150, %151 : vector<8x128xf32>
    %153 = arith.mulf %133, %77 : vector<8x128xf32>
    %154 = arith.mulf %135, %81 : vector<8x128xf32>
    %155 = arith.addf %153, %154 : vector<8x128xf32>
    %156 = arith.addf %155, %136 : vector<8x128xf32>
    %157 = vector.extract_strided_slice %45 {offsets = [0, 768], sizes = [8, 128], strides = [1, 1]} : vector<8x1024xf32> to vector<8x128xf32>
    %c0_67 = arith.constant 0 : index
    %c0_68 = arith.constant 0 : index
    %158 = vector.load %arg13[%c0_67, %c0_68] : memref<1x128xf32, #tpu.memory_space<vmem>>, vector<1x128xf32>
    %159 = vector.broadcast %158 : vector<1x128xf32> to vector<8x128xf32>
    %160 = arith.addf %157, %159 : vector<8x128xf32>
    %161 = vector.extract_strided_slice %45 {offsets = [0, 944], sizes = [8, 8], strides = [1, 1]} : vector<8x1024xf32> to vector<8x8xf32>
    %c0_69 = arith.constant 0 : index
    %c0_70 = arith.constant 0 : index
    %162 = vector.load %arg12[%c0_69, %c0_70] : memref<1x8xf32, #tpu.memory_space<vmem>>, vector<1x8xf32>
    %163 = vector.broadcast %162 : vector<1x8xf32> to vector<8x8xf32>
    %164 = arith.addf %161, %163 : vector<8x8xf32>
    %cst_71 = arith.constant 0.000000e+00 : f32
    %165 = vector.broadcast %cst_71 : f32 to vector<8x8xf32>
    %166 = arith.subf %165, %164 : vector<8x8xf32>
    %cst_72 = arith.constant 0.000000e+00 : f32
    %167 = vector.broadcast %cst_72 : f32 to vector<8x8xf32>
    %168 = arith.maximumf %166, %167 : vector<8x8xf32>
    %169 = math.absf %164 : vector<8x8xf32>
    %cst_73 = arith.constant 0.000000e+00 : f32
    %170 = vector.broadcast %cst_73 : f32 to vector<8x8xf32>
    %171 = arith.subf %170, %169 : vector<8x8xf32>
    %172 = math.exp %171 : vector<8x8xf32>
    %173 = math.log1p %172 : vector<8x8xf32>
    %174 = arith.addf %168, %173 : vector<8x8xf32>
    %cst_74 = arith.constant 0.000000e+00 : f32
    %175 = vector.broadcast %cst_74 : f32 to vector<8x8xf32>
    %176 = arith.subf %175, %174 : vector<8x8xf32>
    %cst_75 = arith.constant dense<0.000000e+00> : vector<8x128xf32>
    %177 = tpu.matmul %176, %124, %cst_75 {dimension_numbers = #tpu.dot_dimension_numbers<[1], [0], [0], [1], [0, 0, 1, 1], [], []>} : vector<8x8xf32>, vector<8x128xf32>, vector<8x128xf32> -> vector<8x128xf32>
    %cst_76 = arith.constant 0.000000e+00 : f32
    %178 = vector.broadcast %cst_76 : f32 to vector<8x128xf32>
    %179 = arith.subf %178, %160 : vector<8x128xf32>
    %cst_77 = arith.constant 0.000000e+00 : f32
    %180 = vector.broadcast %cst_77 : f32 to vector<8x128xf32>
    %181 = arith.maximumf %179, %180 : vector<8x128xf32>
    %182 = math.absf %160 : vector<8x128xf32>
    %cst_78 = arith.constant 0.000000e+00 : f32
    %183 = vector.broadcast %cst_78 : f32 to vector<8x128xf32>
    %184 = arith.subf %183, %182 : vector<8x128xf32>
    %185 = math.exp %184 : vector<8x128xf32>
    %186 = math.log1p %185 : vector<8x128xf32>
    %187 = arith.addf %181, %186 : vector<8x128xf32>
    %cst_79 = arith.constant 0.000000e+00 : f32
    %188 = vector.broadcast %cst_79 : f32 to vector<8x128xf32>
    %189 = arith.subf %188, %187 : vector<8x128xf32>
    %190 = arith.addf %177, %189 : vector<8x128xf32>
    %c0_80 = arith.constant 0 : index
    %c0_81 = arith.constant 0 : index
    %191 = vector.load %arg16[%c0_80, %c0_81] : memref<8x1024xf32, #tpu.memory_space<vmem>>, vector<8x128xf32>
    tpu.vector_store %arg16[%c0_80, %c0_81], %139 {strides = array<i32>} : memref<8x1024xf32, #tpu.memory_space<vmem>>, vector<8x128xf32>,
    %c0_82 = arith.constant 0 : index
    %c128 = arith.constant 128 : index
    %192 = vector.load %arg16[%c0_82, %c128] : memref<8x1024xf32, #tpu.memory_space<vmem>>, vector<8x128xf32>
    tpu.vector_store %arg16[%c0_82, %c128], %142 {strides = array<i32>} : memref<8x1024xf32, #tpu.memory_space<vmem>>, vector<8x128xf32>,
    %c0_83 = arith.constant 0 : index
    %c256 = arith.constant 256 : index
    %193 = vector.load %arg16[%c0_83, %c256] : memref<8x1024xf32, #tpu.memory_space<vmem>>, vector<8x128xf32>
    tpu.vector_store %arg16[%c0_83, %c256], %146 {strides = array<i32>} : memref<8x1024xf32, #tpu.memory_space<vmem>>, vector<8x128xf32>,
    %c0_84 = arith.constant 0 : index
    %c384 = arith.constant 384 : index
    %194 = vector.load %arg16[%c0_84, %c384] : memref<8x1024xf32, #tpu.memory_space<vmem>>, vector<8x128xf32>
    tpu.vector_store %arg16[%c0_84, %c384], %149 {strides = array<i32>} : memref<8x1024xf32, #tpu.memory_space<vmem>>, vector<8x128xf32>,
    %c0_85 = arith.constant 0 : index
    %c512 = arith.constant 512 : index
    %195 = vector.load %arg16[%c0_85, %c512] : memref<8x1024xf32, #tpu.memory_space<vmem>>, vector<8x128xf32>
    tpu.vector_store %arg16[%c0_85, %c512], %152 {strides = array<i32>} : memref<8x1024xf32, #tpu.memory_space<vmem>>, vector<8x128xf32>,
    %c0_86 = arith.constant 0 : index
    %c640 = arith.constant 640 : index
    %196 = vector.load %arg16[%c0_86, %c640] : memref<8x1024xf32, #tpu.memory_space<vmem>>, vector<8x128xf32>
    tpu.vector_store %arg16[%c0_86, %c640], %156 {strides = array<i32>} : memref<8x1024xf32, #tpu.memory_space<vmem>>, vector<8x128xf32>,
    %c0_87 = arith.constant 0 : index
    %c768 = arith.constant 768 : index
    %197 = vector.load %arg16[%c0_87, %c768] : memref<8x1024xf32, #tpu.memory_space<vmem>>, vector<8x128xf32>
    tpu.vector_store %arg16[%c0_87, %c768], %190 {strides = array<i32>} : memref<8x1024xf32, #tpu.memory_space<vmem>>, vector<8x128xf32>,
    %c0_88 = arith.constant 0 : index
    %c896 = arith.constant 896 : index
    %198 = vector.load %arg16[%c0_88, %c896] : memref<8x1024xf32, #tpu.memory_space<vmem>>, vector<8x128xf32>
    tpu.vector_store %arg16[%c0_88, %c896], %160 {strides = array<i32>} : memref<8x1024xf32, #tpu.memory_space<vmem>>, vector<8x128xf32>,
    %c0_89 = arith.constant 0 : index
    %c0_90 = arith.constant 0 : index
    %199 = vector.load %arg17[%c0_89, %c0_90] : memref<8x8xf32, #tpu.memory_space<vmem>>, vector<8x8xf32>
    tpu.vector_store %arg17[%c0_89, %c0_90], %164 {strides = array<i32>} : memref<8x8xf32, #tpu.memory_space<vmem>>, vector<8x8xf32>,
    return
  }
  func.func @transform_0(%arg0: i32) -> (i32, i32) {
    %c0_i32 = arith.constant 0 : i32
    %c0_i32_0 = arith.constant 0 : i32
    return %arg0, %c0_i32 : i32, i32
  }
  func.func @transform_1(%arg0: i32) -> (i32, i32) {
    %c0_i32 = arith.constant 0 : i32
    %c0_i32_0 = arith.constant 0 : i32
    %c0_i32_1 = arith.constant 0 : i32
    return %c0_i32, %c0_i32_0 : i32, i32
  }
  func.func @transform_2(%arg0: i32) -> (i32, i32) {
    %c0_i32 = arith.constant 0 : i32
    %c0_i32_0 = arith.constant 0 : i32
    %c0_i32_1 = arith.constant 0 : i32
    return %c0_i32, %c0_i32_0 : i32, i32
  }
  func.func @transform_3(%arg0: i32) -> (i32, i32) {
    %c0_i32 = arith.constant 0 : i32
    %c0_i32_0 = arith.constant 0 : i32
    %c0_i32_1 = arith.constant 0 : i32
    return %c0_i32, %c0_i32_0 : i32, i32
  }
  func.func @transform_4(%arg0: i32) -> (i32, i32) {
    %c0_i32 = arith.constant 0 : i32
    %c0_i32_0 = arith.constant 0 : i32
    %c0_i32_1 = arith.constant 0 : i32
    return %c0_i32, %c0_i32_0 : i32, i32
  }
  func.func @transform_5(%arg0: i32) -> (i32, i32) {
    %c0_i32 = arith.constant 0 : i32
    %c0_i32_0 = arith.constant 0 : i32
    %c0_i32_1 = arith.constant 0 : i32
    return %c0_i32, %c0_i32_0 : i32, i32
  }
  func.func @transform_6(%arg0: i32) -> (i32, i32) {
    %c0_i32 = arith.constant 0 : i32
    %c0_i32_0 = arith.constant 0 : i32
    %c0_i32_1 = arith.constant 0 : i32
    return %c0_i32, %c0_i32_0 : i32, i32
  }
  func.func @transform_7(%arg0: i32) -> (i32, i32) {
    %c0_i32 = arith.constant 0 : i32
    %c0_i32_0 = arith.constant 0 : i32
    %c0_i32_1 = arith.constant 0 : i32
    return %c0_i32, %c0_i32_0 : i32, i32
  }
  func.func @transform_8(%arg0: i32) -> (i32, i32) {
    %c0_i32 = arith.constant 0 : i32
    %c0_i32_0 = arith.constant 0 : i32
    %c0_i32_1 = arith.constant 0 : i32
    return %c0_i32, %c0_i32_0 : i32, i32
  }
  func.func @transform_9(%arg0: i32) -> (i32, i32) {
    %c0_i32 = arith.constant 0 : i32
    %c0_i32_0 = arith.constant 0 : i32
    %c0_i32_1 = arith.constant 0 : i32
    return %c0_i32, %c0_i32_0 : i32, i32
  }
  func.func @transform_10(%arg0: i32) -> (i32, i32) {
    %c0_i32 = arith.constant 0 : i32
    %c0_i32_0 = arith.constant 0 : i32
    %c0_i32_1 = arith.constant 0 : i32
    return %c0_i32, %c0_i32_0 : i32, i32
  }
  func.func @transform_11(%arg0: i32) -> (i32, i32) {
    %c0_i32 = arith.constant 0 : i32
    %c0_i32_0 = arith.constant 0 : i32
    %c0_i32_1 = arith.constant 0 : i32
    return %c0_i32, %c0_i32_0 : i32, i32
  }
  func.func @transform_12(%arg0: i32) -> (i32, i32) {
    %c0_i32 = arith.constant 0 : i32
    %c0_i32_0 = arith.constant 0 : i32
    %c0_i32_1 = arith.constant 0 : i32
    return %c0_i32, %c0_i32_0 : i32, i32
  }
  func.func @transform_13(%arg0: i32) -> (i32, i32) {
    %c0_i32 = arith.constant 0 : i32
    %c0_i32_0 = arith.constant 0 : i32
    %c0_i32_1 = arith.constant 0 : i32
    return %c0_i32, %c0_i32_0 : i32, i32
  }
  func.func @transform_14(%arg0: i32) -> (i32, i32) {
    %c0_i32 = arith.constant 0 : i32
    %c0_i32_0 = arith.constant 0 : i32
    return %arg0, %c0_i32 : i32, i32
  }
  func.func @transform_15(%arg0: i32) -> (i32, i32) {
    %c0_i32 = arith.constant 0 : i32
    %c0_i32_0 = arith.constant 0 : i32
    return %arg0, %c0_i32 : i32, i32
  }
  func.func @transform_16(%arg0: i32) -> (i32, i32) {
    %c0_i32 = arith.constant 0 : i32
    %c0_i32_0 = arith.constant 0 : i32
    return %arg0, %c0_i32 : i32, i32
  }
  func.func @transform_17(%arg0: i32) -> (i32, i32) {
    %c0_i32 = arith.constant 0 : i32
    %c0_i32_0 = arith.constant 0 : i32
    return %arg0, %c0_i32 : i32, i32
  }
}

</mosaic_0001>

<llo_original>
// kernel: capsule_layer_forward.1
$region0: #{capsule_layer_forward.1}
  #allocation0 [shape = 'u32[]', space=smem, size = 0x4, offset = 0x4, fixed_abs, tag = 'smem constant byte address 0x4 - core index']
  #allocation1 [shape = 'u32[72,128]{1,0:T(1,128)}', space=vmem, size = 0x9000, scoped, tag = 'internal scratch']
  %s0 = inlined_call_operand.vmem [shape: f32[8,64], index: 0, kind: input, shape index: {}]
  %s1 = inlined_call_operand.hbm [shape: f32[64,128], index: 1, kind: input, shape index: {}]
  %s2 = inlined_call_operand.hbm [shape: f32[1,128], index: 2, kind: input, shape index: {}]
  %s3 = inlined_call_operand.hbm [shape: f32[128,256], index: 3, kind: input, shape index: {}]
  %s4 = inlined_call_operand.hbm [shape: f32[1,256], index: 4, kind: input, shape index: {}]
  %s5 = inlined_call_operand.hbm [shape: f32[256,1024], index: 5, kind: input, shape index: {}]
  %s6 = inlined_call_operand.hbm [shape: f32[1,1024], index: 6, kind: input, shape index: {}]
  %s7 = inlined_call_operand.hbm [shape: f32[1024,1024], index: 7, kind: input, shape index: {}]
  %s8 = inlined_call_operand.hbm [shape: f32[1,1024], index: 8, kind: input, shape index: {}]
  %s9 = inlined_call_operand.hbm [shape: f32[1,768], index: 9, kind: input, shape index: {}]
  %s10 = inlined_call_operand.hbm [shape: f32[1,48], index: 10, kind: input, shape index: {}]
  %s11 = inlined_call_operand.hbm [shape: f32[1,8], index: 11, kind: input, shape index: {}]
  %s12 = inlined_call_operand.hbm [shape: f32[1,128], index: 12, kind: input, shape index: {}]
  %s13 = inlined_call_operand.hbm [shape: f32[8,128], index: 13, kind: input, shape index: {}]
  %s14 = inlined_call_operand.vmem [shape: f32[8,256], index: 14, kind: output, shape index: {0}]
  %s15 = inlined_call_operand.vmem [shape: f32[8,1024], index: 15, kind: output, shape index: {1}]
  %s16 = inlined_call_operand.vmem [shape: f32[8,8], index: 16, kind: output, shape index: {2}]
  %s17 = inlined_call_operand.vmem [shape: f32[8,1], index: 17, kind: output, shape index: {3}]
  %18 = xla_tuple %s14, %s15, %s16, %s17
  %s19 = sld [smem:[#allocation0]]
  $region142: #{capsule_layer_forward.1} parent=0
    _
  %s21 = ssub.s32 1, %s19
  %s22 = scalar_select 0, %s21, %s19
  $region1: #{capsule_layer_forward.1} parent=0
    #allocation2 [shape = 'u8[32768]{0}', space=vmem, size = 0x8000, scoped, tag = 'input window, operand 1, single buffered']
    #allocation3 [shape = 's32[1]{0}', space=sflag, size = 0x4, scoped, tag = 'scoped memory for capsule_layer_forward.1']
    #allocation4 [shape = 'u8[512]{0}', space=vmem, size = 0x400, scoped, tag = 'input window, operand 2, single buffered']
    #allocation5 [shape = 's32[1]{0}', space=sflag, size = 0x4, scoped, tag = 'scoped memory for capsule_layer_forward.1']
    #allocation6 [shape = 'u8[131072]{0}', space=vmem, size = 0x20000, scoped, tag = 'input window, operand 3, single buffered']
    #allocation7 [shape = 'u8[1024]{0}', space=vmem, size = 0x400, scoped, tag = 'input window, operand 4, single buffered']
    #allocation8 [shape = 's32[1]{0}', space=sflag, size = 0x4, scoped, tag = 'scoped memory for capsule_layer_forward.1']
    #allocation9 [shape = 'u8[1048576]{0}', space=vmem, size = 0x100000, scoped, tag = 'input window, operand 5, single buffered']
    #allocation10 [shape = 'u8[4096]{0}', space=vmem, size = 0x1000, scoped, tag = 'input window, operand 6, single buffered']
    #allocation11 [shape = 's32[1]{0}', space=sflag, size = 0x4, scoped, tag = 'scoped memory for capsule_layer_forward.1']
    #allocation12 [shape = 'u8[4194304]{0}', space=vmem, size = 0x400000, scoped, tag = 'input window, operand 7, single buffered']
    #allocation13 [shape = 'u8[4096]{0}', space=vmem, size = 0x1000, scoped, tag = 'input window, operand 8, single buffered']
    #allocation14 [shape = 's32[1]{0}', space=sflag, size = 0x4, scoped, tag = 'scoped memory for capsule_layer_forward.1']
    #allocation15 [shape = 'u8[3072]{0}', space=vmem, size = 0xc00, scoped, tag = 'input window, operand 9, single buffered']
    #allocation16 [shape = 'u8[512]{0}', space=vmem, size = 0x400, scoped, tag = 'input window, operand 10, single buffered']
    #allocation17 [shape = 's32[1]{0}', space=sflag, size = 0x4, scoped, tag = 'scoped memory for capsule_layer_forward.1']
    #allocation18 [shape = 'u8[512]{0}', space=vmem, size = 0x400, scoped, tag = 'input window, operand 11, single buffered']
    #allocation19 [shape = 'u8[512]{0}', space=vmem, size = 0x400, scoped, tag = 'input window, operand 12, single buffered']
    #allocation20 [shape = 's32[1]{0}', space=sflag, size = 0x4, scoped, tag = 'scoped memory for capsule_layer_forward.1']
    #allocation21 [shape = 'u8[4096]{0}', space=vmem, size = 0x1000, scoped, tag = 'input window, operand 13, single buffered']
    %23 = vsyncpa [#allocation3], 0
    %24 = vsyncpa [#allocation5], 0
    %25 = vsyncpa [#allocation8], 0
    %26 = vsyncpa [#allocation11], 0
    %27 = vsyncpa [#allocation14], 0
    %28 = vsyncpa [#allocation17], 0
    %29 = vsyncpa [#allocation20], 0
    // Predicated region
    $region2: #{capsule_layer_forward.1} parent=1 // pred_check
      _
    $region3: #{capsule_layer_forward.1} parent=1 // pred_check_branch
      %31 = sbr.rel (0) target = $region5
    $region4: #{capsule_layer_forward.1} parent=1 // pred_region
      _
    $region5: #{capsule_layer_forward.1} parent=1 // pred_fallthru
      _
    // Predicated region
    $region6: #{capsule_layer_forward.1} parent=1 // pred_check
      _
    $region7: #{capsule_layer_forward.1} parent=1 // pred_check_branch
      %33 = sbr.rel (0) target = $region9
    $region8: #{capsule_layer_forward.1} parent=1 // pred_region
      %35 = vsyncadd [#allocation3], 0
      %s36 = sshll.u32 %s1, 4
      %s37 = int_to_ptr.hbm [resolvable:$true] %s36
      %s38 = sshll.u32 [#allocation2], 4
      %s39 = int_to_ptr.vmem [resolvable:$true] %s38
      %44 = dma.hbm_to_vmem [thread:$0]  %s37, 1024, %s39, [#allocation3], 128, 128, 8
    $region9: #{capsule_layer_forward.1} parent=1 // pred_fallthru
      _
    // Predicated region
    $region10: #{capsule_layer_forward.1} parent=1 // pred_check
      _
    $region11: #{capsule_layer_forward.1} parent=1 // pred_check_branch
      %46 = sbr.rel (0) target = $region13
    $region12: #{capsule_layer_forward.1} parent=1 // pred_region
      %48 = vsyncadd [#allocation5], 0
      %s50 = sshll.u32 %s2, 4
      %s51 = int_to_ptr.hbm [resolvable:$true] %s50
      %s52 = sshll.u32 [#allocation4], 4
      %s53 = int_to_ptr.vmem [resolvable:$true] %s52
      %55 = dma.hbm_to_vmem [thread:$0]  %s51, 16, %s53, [#allocation5]
    $region13: #{capsule_layer_forward.1} parent=1 // pred_fallthru
      _
    // Predicated region
    $region14: #{capsule_layer_forward.1} parent=1 // pred_check
      _
    $region15: #{capsule_layer_forward.1} parent=1 // pred_check_branch
      %57 = sbr.rel (0) target = $region17
    $region16: #{capsule_layer_forward.1} parent=1 // pred_region
      %59 = vsyncadd [#allocation5], 0
      %s60 = sshll.u32 %s3, 4
      %s61 = int_to_ptr.hbm [resolvable:$true] %s60
      %s62 = sshll.u32 [#allocation6], 4
      %s63 = int_to_ptr.vmem [resolvable:$true] %s62
      %68 = dma.hbm_to_vmem [thread:$0]  %s61, 4096, %s63, [#allocation5], 256, 256, 16
    $region17: #{capsule_layer_forward.1} parent=1 // pred_fallthru
      _
    // Predicated region
    $region18: #{capsule_layer_forward.1} parent=1 // pred_check
      _
    $region19: #{capsule_layer_forward.1} parent=1 // pred_check_branch
      %70 = sbr.rel (0) target = $region21
    $region20: #{capsule_layer_forward.1} parent=1 // pred_region
      %72 = vsyncadd [#allocation8], 0
      %s74 = sshll.u32 %s4, 4
      %s75 = int_to_ptr.hbm [resolvable:$true] %s74
      %s76 = sshll.u32 [#allocation7], 4
      %s77 = int_to_ptr.vmem [resolvable:$true] %s76
      %79 = dma.hbm_to_vmem [thread:$0]  %s75, 32, %s77, [#allocation8]
    $region21: #{capsule_layer_forward.1} parent=1 // pred_fallthru
      _
    // Predicated region
    $region22: #{capsule_layer_forward.1} parent=1 // pred_check
      _
    $region23: #{capsule_layer_forward.1} parent=1 // pred_check_branch
      %81 = sbr.rel (0) target = $region25
    $region24: #{capsule_layer_forward.1} parent=1 // pred_region
      %83 = vsyncadd [#allocation8], 0
      %s84 = sshll.u32 %s5, 4
      %s85 = int_to_ptr.hbm [resolvable:$true] %s84
      %s86 = sshll.u32 [#allocation9], 4
      %s87 = int_to_ptr.vmem [resolvable:$true] %s86
      %92 = dma.hbm_to_vmem [thread:$0]  %s85, 32768, %s87, [#allocation8], 1024, 1024, 64
    $region25: #{capsule_layer_forward.1} parent=1 // pred_fallthru
      _
    // Predicated region
    $region26: #{capsule_layer_forward.1} parent=1 // pred_check
      _
    $region27: #{capsule_layer_forward.1} parent=1 // pred_check_branch
      %94 = sbr.rel (0) target = $region29
    $region28: #{capsule_layer_forward.1} parent=1 // pred_region
      %96 = vsyncadd [#allocation11], 0
      %s98 = sshll.u32 %s6, 4
      %s99 = int_to_ptr.hbm [resolvable:$true] %s98
      %s100 = sshll.u32 [#allocation10], 4
      %s101 = int_to_ptr.vmem [resolvable:$true] %s100
      %103 = dma.hbm_to_vmem [thread:$0]  %s99, 128, %s101, [#allocation11]
    $region29: #{capsule_layer_forward.1} parent=1 // pred_fallthru
      _
    // Predicated region
    $region30: #{capsule_layer_forward.1} parent=1 // pred_check
      _
    $region31: #{capsule_layer_forward.1} parent=1 // pred_check_branch
      %105 = sbr.rel (0) target = $region33
    $region32: #{capsule_layer_forward.1} parent=1 // pred_region
      %107 = vsyncadd [#allocation11], 0
      %s108 = sshll.u32 %s7, 4
      %s109 = int_to_ptr.hbm [resolvable:$true] %s108
      %s110 = sshll.u32 [#allocation12], 4
      %s111 = int_to_ptr.vmem [resolvable:$true] %s110
      %116 = dma.hbm_to_vmem [thread:$0]  %s109, 131072, %s111, [#allocation11], 1024, 1024, 64
    $region33: #{capsule_layer_forward.1} parent=1 // pred_fallthru
      _
    // Predicated region
    $region34: #{capsule_layer_forward.1} parent=1 // pred_check
      _
    $region35: #{capsule_layer_forward.1} parent=1 // pred_check_branch
      %118 = sbr.rel (0) target = $region37
    $region36: #{capsule_layer_forward.1} parent=1 // pred_region
      %120 = vsyncadd [#allocation14], 0
      %s122 = sshll.u32 %s8, 4
      %s123 = int_to_ptr.hbm [resolvable:$true] %s122
      %s124 = sshll.u32 [#allocation13], 4
      %s125 = int_to_ptr.vmem [resolvable:$true] %s124
      %127 = dma.hbm_to_vmem [thread:$0]  %s123, 128, %s125, [#allocation14]
    $region37: #{capsule_layer_forward.1} parent=1 // pred_fallthru
      _
    // Predicated region
    $region38: #{capsule_layer_forward.1} parent=1 // pred_check
      _
    $region39: #{capsule_layer_forward.1} parent=1 // pred_check_branch
      %129 = sbr.rel (0) target = $region41
    $region40: #{capsule_layer_forward.1} parent=1 // pred_region
      %131 = vsyncadd [#allocation14], 0
      %s133 = sshll.u32 %s9, 4
      %s134 = int_to_ptr.hbm [resolvable:$true] %s133
      %s135 = sshll.u32 [#allocation15], 4
      %s136 = int_to_ptr.vmem [resolvable:$true] %s135
      %138 = dma.hbm_to_vmem [thread:$0]  %s134, 96, %s136, [#allocation14]
    $region41: #{capsule_layer_forward.1} parent=1 // pred_fallthru
      _
    // Predicated region
    $region42: #{capsule_layer_forward.1} parent=1 // pred_check
      _
    $region43: #{capsule_layer_forward.1} parent=1 // pred_check_branch
      %140 = sbr.rel (0) target = $region45
    $region44: #{capsule_layer_forward.1} parent=1 // pred_region
      %142 = vsyncadd [#allocation17], 0
      %s144 = sshll.u32 %s10, 4
      %s145 = int_to_ptr.hbm [resolvable:$true] %s144
      %s146 = sshll.u32 [#allocation16], 4
      %s147 = int_to_ptr.vmem [resolvable:$true] %s146
      %149 = dma.hbm_to_vmem [thread:$0]  %s145, 16, %s147, [#allocation17]
    $region45: #{capsule_layer_forward.1} parent=1 // pred_fallthru
      _
    // Predicated region
    $region46: #{capsule_layer_forward.1} parent=1 // pred_check
      _
    $region47: #{capsule_layer_forward.1} parent=1 // pred_check_branch
      %151 = sbr.rel (0) target = $region49
    $region48: #{capsule_layer_forward.1} parent=1 // pred_region
      %153 = vsyncadd [#allocation17], 0
      %s155 = sshll.u32 %s11, 4
      %s156 = int_to_ptr.hbm [resolvable:$true] %s155
      %s157 = sshll.u32 [#allocation18], 4
      %s158 = int_to_ptr.vmem [resolvable:$true] %s157
      %160 = dma.hbm_to_vmem [thread:$0]  %s156, 16, %s158, [#allocation17]
    $region49: #{capsule_layer_forward.1} parent=1 // pred_fallthru
      _
    // Predicated region
    $region50: #{capsule_layer_forward.1} parent=1 // pred_check
      _
    $region51: #{capsule_layer_forward.1} parent=1 // pred_check_branch
      %162 = sbr.rel (0) target = $region53
    $region52: #{capsule_layer_forward.1} parent=1 // pred_region
      %164 = vsyncadd [#allocation20], 0
      %s166 = sshll.u32 %s12, 4
      %s167 = int_to_ptr.hbm [resolvable:$true] %s166
      %s168 = sshll.u32 [#allocation19], 4
      %s169 = int_to_ptr.vmem [resolvable:$true] %s168
      %171 = dma.hbm_to_vmem [thread:$0]  %s167, 16, %s169, [#allocation20]
    $region53: #{capsule_layer_forward.1} parent=1 // pred_fallthru
      _
    // Predicated region
    $region54: #{capsule_layer_forward.1} parent=1 // pred_check
      _
    $region55: #{capsule_layer_forward.1} parent=1 // pred_check_branch
      %173 = sbr.rel (0) target = $region57
    $region56: #{capsule_layer_forward.1} parent=1 // pred_region
      %175 = vsyncadd [#allocation20], 0
      %s177 = sshll.u32 %s13, 4
      %s178 = int_to_ptr.hbm [resolvable:$true] %s177
      %s179 = sshll.u32 [#allocation21], 4
      %s180 = int_to_ptr.vmem [resolvable:$true] %s179
      %182 = dma.hbm_to_vmem [thread:$0]  %s178, 128, %s180, [#allocation20]
    $region57: #{capsule_layer_forward.1} parent=1 // pred_fallthru
      _
    // Predicated region
    $region58: #{capsule_layer_forward.1} parent=1 // pred_check
      _
    $region59: #{capsule_layer_forward.1} parent=1 // pred_check_branch
      %184 = sbr.rel (0) target = $region61
    $region60: #{capsule_layer_forward.1} parent=1 // pred_region
      %186 = dma.done [#allocation3], 1024
    $region61: #{capsule_layer_forward.1} parent=1 // pred_fallthru
      _
    // Predicated region
    $region62: #{capsule_layer_forward.1} parent=1 // pred_check
      _
    $region63: #{capsule_layer_forward.1} parent=1 // pred_check_branch
      %188 = sbr.rel (0) target = $region65
    $region64: #{capsule_layer_forward.1} parent=1 // pred_region
      %190 = dma.done [#allocation5], 16
    $region65: #{capsule_layer_forward.1} parent=1 // pred_fallthru
      _
    // Predicated region
    $region66: #{capsule_layer_forward.1} parent=1 // pred_check
      _
    $region67: #{capsule_layer_forward.1} parent=1 // pred_check_branch
      %192 = sbr.rel (0) target = $region69
    $region68: #{capsule_layer_forward.1} parent=1 // pred_region
      %194 = dma.done [#allocation5], 4096
    $region69: #{capsule_layer_forward.1} parent=1 // pred_fallthru
      _
    // Predicated region
    $region70: #{capsule_layer_forward.1} parent=1 // pred_check
      _
    $region71: #{capsule_layer_forward.1} parent=1 // pred_check_branch
      %196 = sbr.rel (0) target = $region73
    $region72: #{capsule_layer_forward.1} parent=1 // pred_region
      %198 = dma.done [#allocation8], 32
    $region73: #{capsule_layer_forward.1} parent=1 // pred_fallthru
      _
    // Predicated region
    $region74: #{capsule_layer_forward.1} parent=1 // pred_check
      _
    $region75: #{capsule_layer_forward.1} parent=1 // pred_check_branch
      %200 = sbr.rel (0) target = $region77
    $region76: #{capsule_layer_forward.1} parent=1 // pred_region
      %202 = dma.done [#allocation8], 32768
    $region77: #{capsule_layer_forward.1} parent=1 // pred_fallthru
      _
    // Predicated region
    $region78: #{capsule_layer_forward.1} parent=1 // pred_check
      _
    $region79: #{capsule_layer_forward.1} parent=1 // pred_check_branch
      %204 = sbr.rel (0) target = $region81
    $region80: #{capsule_layer_forward.1} parent=1 // pred_region
      %206 = dma.done [#allocation11], 128
    $region81: #{capsule_layer_forward.1} parent=1 // pred_fallthru
      _
    // Predicated region
    $region82: #{capsule_layer_forward.1} parent=1 // pred_check
      _
    $region83: #{capsule_layer_forward.1} parent=1 // pred_check_branch
      %208 = sbr.rel (0) target = $region85
    $region84: #{capsule_layer_forward.1} parent=1 // pred_region
      %210 = dma.done [#allocation11], 131072
    $region85: #{capsule_layer_forward.1} parent=1 // pred_fallthru
      _
    // Predicated region
    $region86: #{capsule_layer_forward.1} parent=1 // pred_check
      _
    $region87: #{capsule_layer_forward.1} parent=1 // pred_check_branch
      %212 = sbr.rel (0) target = $region89
    $region88: #{capsule_layer_forward.1} parent=1 // pred_region
      %214 = dma.done [#allocation14], 128
    $region89: #{capsule_layer_forward.1} parent=1 // pred_fallthru
      _
    // Predicated region
    $region90: #{capsule_layer_forward.1} parent=1 // pred_check
      _
    $region91: #{capsule_layer_forward.1} parent=1 // pred_check_branch
      %216 = sbr.rel (0) target = $region93
    $region92: #{capsule_layer_forward.1} parent=1 // pred_region
      %218 = dma.done [#allocation14], 96
    $region93: #{capsule_layer_forward.1} parent=1 // pred_fallthru
      _
    // Predicated region
    $region94: #{capsule_layer_forward.1} parent=1 // pred_check
      _
    $region95: #{capsule_layer_forward.1} parent=1 // pred_check_branch
      %220 = sbr.rel (0) target = $region97
    $region96: #{capsule_layer_forward.1} parent=1 // pred_region
      %222 = dma.done [#allocation17], 16
    $region97: #{capsule_layer_forward.1} parent=1 // pred_fallthru
      _
    // Predicated region
    $region98: #{capsule_layer_forward.1} parent=1 // pred_check
      _
    $region99: #{capsule_layer_forward.1} parent=1 // pred_check_branch
      %224 = sbr.rel (0) target = $region101
    $region100: #{capsule_layer_forward.1} parent=1 // pred_region
      %226 = dma.done [#allocation17], 16
    $region101: #{capsule_layer_forward.1} parent=1 // pred_fallthru
      _
    // Predicated region
    $region102: #{capsule_layer_forward.1} parent=1 // pred_check
      _
    $region103: #{capsule_layer_forward.1} parent=1 // pred_check_branch
      %228 = sbr.rel (0) target = $region105
    $region104: #{capsule_layer_forward.1} parent=1 // pred_region
      %230 = dma.done [#allocation20], 16
    $region105: #{capsule_layer_forward.1} parent=1 // pred_fallthru
      _
    // Predicated region
    $region106: #{capsule_layer_forward.1} parent=1 // pred_check
      _
    $region107: #{capsule_layer_forward.1} parent=1 // pred_check_branch
      %232 = sbr.rel (0) target = $region109
    $region108: #{capsule_layer_forward.1} parent=1 // pred_region
      %234 = dma.done [#allocation20], 128
    $region109: #{capsule_layer_forward.1} parent=1 // pred_fallthru
      _
    %v235 = vld [vmem:[%s0] sm:$0xff]
    %v236 = vld [vmem:[#allocation2] sm:$0xff]
    %v237 = vld [vmem:[#allocation2 + $0x8] sm:$0xff]
    %v238 = vld [vmem:[#allocation2 + $0x10] sm:$0xff]
    %v239 = vld [vmem:[#allocation2 + $0x18] sm:$0xff]
    %v240 = vld [vmem:[#allocation2 + $0x20] sm:$0xff]
    %v241 = vld [vmem:[#allocation2 + $0x28] sm:$0xff]
    %v242 = vld [vmem:[#allocation2 + $0x30] sm:$0xff]
    %v243 = vld [vmem:[#allocation2 + $0x38] sm:$0xff]
    %v244 = vld [vmem:[#allocation4] sm:$0x1]
    %v246 = vperm.slane %v244, 0
    %vm248 = vcmask 523264
    %v250 = vsel %vm248, %v235, 0
    %252 = vmatpush.msra.mxu0 0.0
    %253 = vmatpush.msra.mxu0 0.0
    %254 = vmatpush.msra.mxu0 0.0
    %255 = vmatpush.msra.mxu0 0.0
    %256 = vmatpush.msra.mxu0 0.0
    %257 = vmatpush.msra.mxu0 0.0
    %258 = vmatpush.msra.mxu0 0.0
    %259 = vmatpush.msra.mxu0 0.0
    %260 = vmatpush.msra.mxu0 %v243
    %261 = vmatpush.msra.mxu0 %v242
    %262 = vmatpush.msra.mxu0 %v241
    %263 = vmatpush.msra.mxu0 %v240
    %264 = vmatpush.msra.mxu0 %v239
    %265 = vmatpush.msra.mxu0 %v238
    %266 = vmatpush.msra.mxu0 %v237
    %267 = vmatpush.msra.mxu0 %v236
    %268 = vmatmul.f32.gmra.mxu0 %v250
    %v269 = vpop.f32.mrf.mxu0
    %v270 = vadd.f32 %v246, %v269
    %271 = vdwg.mxu0
    %vm272 = vcmp.gt.f32.partialorder %v270, 0.0
    %v273 = vmin.f32 %v270, 0.0
    %v274 = vmul.f32 %v273, 1.442695
    %v275 = vpow.pop %v274
    %v276 = vsub.f32 %v275, 1.0
    %v277 = vmul.f32 %v276, 1.6732632
    %v278 = vsel %vm272, %v270, %v277
    %v279 = vmul.f32 %v278, 1.050701
    %v280 = vld [vmem:[#allocation6] sm:$0xff]
    %v281 = vld [vmem:[#allocation6 + $0x8] sm:$0xff]
    %v282 = vld [vmem:[#allocation6 + $0x10] sm:$0xff]
    %v283 = vld [vmem:[#allocation6 + $0x18] sm:$0xff]
    %v284 = vld [vmem:[#allocation6 + $0x20] sm:$0xff]
    %v285 = vld [vmem:[#allocation6 + $0x28] sm:$0xff]
    %v286 = vld [vmem:[#allocation6 + $0x30] sm:$0xff]
    %v287 = vld [vmem:[#allocation6 + $0x38] sm:$0xff]
    %v288 = vld [vmem:[#allocation6 + $0x40] sm:$0xff]
    %v289 = vld [vmem:[#allocation6 + $0x48] sm:$0xff]
    %v290 = vld [vmem:[#allocation6 + $0x50] sm:$0xff]
    %v291 = vld [vmem:[#allocation6 + $0x58] sm:$0xff]
    %v292 = vld [vmem:[#allocation6 + $0x60] sm:$0xff]
    %v293 = vld [vmem:[#allocation6 + $0x68] sm:$0xff]
    %v294 = vld [vmem:[#allocation6 + $0x70] sm:$0xff]
    %v295 = vld [vmem:[#allocation6 + $0x78] sm:$0xff]
    %v296 = vld [vmem:[#allocation6 + $0x80] sm:$0xff]
    %v297 = vld [vmem:[#allocation6 + $0x88] sm:$0xff]
    %v298 = vld [vmem:[#allocation6 + $0x90] sm:$0xff]
    %v299 = vld [vmem:[#allocation6 + $0x98] sm:$0xff]
    %v300 = vld [vmem:[#allocation6 + $0xa0] sm:$0xff]
    %v301 = vld [vmem:[#allocation6 + $0xa8] sm:$0xff]
    %v302 = vld [vmem:[#allocation6 + $0xb0] sm:$0xff]
    %v303 = vld [vmem:[#allocation6 + $0xb8] sm:$0xff]
    %v304 = vld [vmem:[#allocation6 + $0xc0] sm:$0xff]
    %v305 = vld [vmem:[#allocation6 + $0xc8] sm:$0xff]
    %v306 = vld [vmem:[#allocation6 + $0xd0] sm:$0xff]
    %v307 = vld [vmem:[#allocation6 + $0xd8] sm:$0xff]
    %v308 = vld [vmem:[#allocation6 + $0xe0] sm:$0xff]
    %v309 = vld [vmem:[#allocation6 + $0xe8] sm:$0xff]
    %v310 = vld [vmem:[#allocation6 + $0xf0] sm:$0xff]
    %v311 = vld [vmem:[#allocation6 + $0xf8] sm:$0xff]
    %v312 = vld [vmem:[#allocation7] sm:$0x3]
    %v314 = vperm.slane %v312, 0
    %v315 = vperm.slane %v312, 1
    %318 = vmatpush.msra.mxu0 %v310
    %319 = vmatpush.msra.mxu0 %v308
    %320 = vmatpush.msra.mxu0 %v306
    %321 = vmatpush.msra.mxu0 %v304
    %322 = vmatpush.msra.mxu0 %v302
    %323 = vmatpush.msra.mxu0 %v300
    %324 = vmatpush.msra.mxu0 %v298
    %325 = vmatpush.msra.mxu0 %v296
    %326 = vmatpush.msra.mxu0 %v294
    %327 = vmatpush.msra.mxu0 %v292
    %328 = vmatpush.msra.mxu0 %v290
    %329 = vmatpush.msra.mxu0 %v288
    %330 = vmatpush.msra.mxu0 %v286
    %331 = vmatpush.msra.mxu0 %v284
    %332 = vmatpush.msra.mxu0 %v282
    %333 = vmatpush.msra.mxu0 %v280
    %334 = vmatmul.f32.gmra.mxu0 %v279
    %v335 = vpop.f32.mrf.mxu0
    %v336 = vadd.f32 %v314, %v335
    %337 = vdwg.mxu0
    %338 = vmatpush.msra.mxu0 %v311
    %339 = vmatpush.msra.mxu0 %v309
    %340 = vmatpush.msra.mxu0 %v307
    %341 = vmatpush.msra.mxu0 %v305
    %342 = vmatpush.msra.mxu0 %v303
    %343 = vmatpush.msra.mxu0 %v301
    %344 = vmatpush.msra.mxu0 %v299
    %345 = vmatpush.msra.mxu0 %v297
    %346 = vmatpush.msra.mxu0 %v295
    %347 = vmatpush.msra.mxu0 %v293
    %348 = vmatpush.msra.mxu0 %v291
    %349 = vmatpush.msra.mxu0 %v289
    %350 = vmatpush.msra.mxu0 %v287
    %351 = vmatpush.msra.mxu0 %v285
    %352 = vmatpush.msra.mxu0 %v283
    %353 = vmatpush.msra.mxu0 %v281
    %354 = vmatmul.f32.gmra.mxu0 %v279
    %v355 = vpop.f32.mrf.mxu0
    %v356 = vadd.f32 %v315, %v355
    %357 = vdwg.mxu0
    %358 = vst [vmem:[%s14] sm:$0xff] %v336
    %359 = vst [vmem:[%s14 + $0x8] sm:$0xff] %v356
    %v360 = vld [vmem:[#allocation9] sm:$0xff]
    %v361 = vld [vmem:[#allocation9 + $0x8] sm:$0xff]
    %v362 = vld [vmem:[#allocation9 + $0x10] sm:$0xff]
    %v363 = vld [vmem:[#allocation9 + $0x18] sm:$0xff]
    %v364 = vld [vmem:[#allocation9 + $0x20] sm:$0xff]
    %v365 = vld [vmem:[#allocation9 + $0x28] sm:$0xff]
    %v366 = vld [vmem:[#allocation9 + $0x30] sm:$0xff]
    %v367 = vld [vmem:[#allocation9 + $0x38] sm:$0xff]
    %v368 = vld [vmem:[#allocation9 + $0x40] sm:$0xff]
    %v369 = vld [vmem:[#allocation9 + $0x48] sm:$0xff]
    %v370 = vld [vmem:[#allocation9 + $0x50] sm:$0xff]
    %v371 = vld [vmem:[#allocation9 + $0x58] sm:$0xff]
    %v372 = vld [vmem:[#allocation9 + $0x60] sm:$0xff]
    %v373 = vld [vmem:[#allocation9 + $0x68] sm:$0xff]
    %v374 = vld [vmem:[#allocation9 + $0x70] sm:$0xff]
    %v375 = vld [vmem:[#allocation9 + $0x78] sm:$0xff]
    %v376 = vld [vmem:[#allocation9 + $0x80] sm:$0xff]
    %v377 = vld [vmem:[#allocation9 + $0x88] sm:$0xff]
    %v378 = vld [vmem:[#allocation9 + $0x90] sm:$0xff]
    %v379 = vld [vmem:[#allocation9 + $0x98] sm:$0xff]
    %v380 = vld [vmem:[#allocation9 + $0xa0] sm:$0xff]
    %v381 = vld [vmem:[#allocation9 + $0xa8] sm:$0xff]
    %v382 = vld [vmem:[#allocation9 + $0xb0] sm:$0xff]
    %v383 = vld [vmem:[#allocation9 + $0xb8] sm:$0xff]
    %v384 = vld [vmem:[#allocation9 + $0xc0] sm:$0xff]
    %v385 = vld [vmem:[#allocation9 + $0xc8] sm:$0xff]
    %v386 = vld [vmem:[#allocation9 + $0xd0] sm:$0xff]
    %v387 = vld [vmem:[#allocation9 + $0xd8] sm:$0xff]
    %v388 = vld [vmem:[#allocation9 + $0xe0] sm:$0xff]
    %v389 = vld [vmem:[#allocation9 + $0xe8] sm:$0xff]
    %v390 = vld [vmem:[#allocation9 + $0xf0] sm:$0xff]
    %v391 = vld [vmem:[#allocation9 + $0xf8] sm:$0xff]
    %v392 = vld [vmem:[#allocation9 + $0x100] sm:$0xff]
    %v393 = vld [vmem:[#allocation9 + $0x108] sm:$0xff]
    %v394 = vld [vmem:[#allocation9 + $0x110] sm:$0xff]
    %v395 = vld [vmem:[#allocation9 + $0x118] sm:$0xff]
    %v396 = vld [vmem:[#allocation9 + $0x120] sm:$0xff]
    %v397 = vld [vmem:[#allocation9 + $0x128] sm:$0xff]
    %v398 = vld [vmem:[#allocation9 + $0x130] sm:$0xff]
    %v399 = vld [vmem:[#allocation9 + $0x138] sm:$0xff]
    %v400 = vld [vmem:[#allocation9 + $0x140] sm:$0xff]
    %v401 = vld [vmem:[#allocation9 + $0x148] sm:$0xff]
    %v402 = vld [vmem:[#allocation9 + $0x150] sm:$0xff]
    %v403 = vld [vmem:[#allocation9 + $0x158] sm:$0xff]
    %v404 = vld [vmem:[#allocation9 + $0x160] sm:$0xff]
    %v405 = vld [vmem:[#allocation9 + $0x168] sm:$0xff]
    %v406 = vld [vmem:[#allocation9 + $0x170] sm:$0xff]
    %v407 = vld [vmem:[#allocation9 + $0x178] sm:$0xff]
    %v408 = vld [vmem:[#allocation9 + $0x180] sm:$0xff]
    %v409 = vld [vmem:[#allocation9 + $0x188] sm:$0xff]
    %v410 = vld [vmem:[#allocation9 + $0x190] sm:$0xff]
    %v411 = vld [vmem:[#allocation9 + $0x198] sm:$0xff]
    %v412 = vld [vmem:[#allocation9 + $0x1a0] sm:$0xff]
    %v413 = vld [vmem:[#allocation9 + $0x1a8] sm:$0xff]
    %v414 = vld [vmem:[#allocation9 + $0x1b0] sm:$0xff]
    %v415 = vld [vmem:[#allocation9 + $0x1b8] sm:$0xff]
    %v416 = vld [vmem:[#allocation9 + $0x1c0] sm:$0xff]
    %v417 = vld [vmem:[#allocation9 + $0x1c8] sm:$0xff]
    %v418 = vld [vmem:[#allocation9 + $0x1d0] sm:$0xff]
    %v419 = vld [vmem:[#allocation9 + $0x1d8] sm:$0xff]
    %v420 = vld [vmem:[#allocation9 + $0x1e0] sm:$0xff]
    %v421 = vld [vmem:[#allocation9 + $0x1e8] sm:$0xff]
    %v422 = vld [vmem:[#allocation9 + $0x1f0] sm:$0xff]
    %v423 = vld [vmem:[#allocation9 + $0x1f8] sm:$0xff]
    %v424 = vld [vmem:[#allocation9 + $0x200] sm:$0xff]
    %v425 = vld [vmem:[#allocation9 + $0x208] sm:$0xff]
    %v426 = vld [vmem:[#allocation9 + $0x210] sm:$0xff]
    %v427 = vld [vmem:[#allocation9 + $0x218] sm:$0xff]
    %v428 = vld [vmem:[#allocation9 + $0x220] sm:$0xff]
    %v429 = vld [vmem:[#allocation9 + $0x228] sm:$0xff]
    %v430 = vld [vmem:[#allocation9 + $0x230] sm:$0xff]
    %v431 = vld [vmem:[#allocation9 + $0x238] sm:$0xff]
    %v432 = vld [vmem:[#allocation9 + $0x240] sm:$0xff]
    %v433 = vld [vmem:[#allocation9 + $0x248] sm:$0xff]
    %v434 = vld [vmem:[#allocation9 + $0x250] sm:$0xff]
    %v435 = vld [vmem:[#allocation9 + $0x258] sm:$0xff]
    %v436 = vld [vmem:[#allocation9 + $0x260] sm:$0xff]
    %v437 = vld [vmem:[#allocation9 + $0x268] sm:$0xff]
    %v438 = vld [vmem:[#allocation9 + $0x270] sm:$0xff]
    %v439 = vld [vmem:[#allocation9 + $0x278] sm:$0xff]
    %v440 = vld [vmem:[#allocation9 + $0x280] sm:$0xff]
    %v441 = vld [vmem:[#allocation9 + $0x288] sm:$0xff]
    %v442 = vld [vmem:[#allocation9 + $0x290] sm:$0xff]
    %v443 = vld [vmem:[#allocation9 + $0x298] sm:$0xff]
    %v444 = vld [vmem:[#allocation9 + $0x2a0] sm:$0xff]
    %v445 = vld [vmem:[#allocation9 + $0x2a8] sm:$0xff]
    %v446 = vld [vmem:[#allocation9 + $0x2b0] sm:$0xff]
    %v447 = vld [vmem:[#allocation9 + $0x2b8] sm:$0xff]
    %v448 = vld [vmem:[#allocation9 + $0x2c0] sm:$0xff]
    %v449 = vld [vmem:[#allocation9 + $0x2c8] sm:$0xff]
    %v450 = vld [vmem:[#allocation9 + $0x2d0] sm:$0xff]
    %v451 = vld [vmem:[#allocation9 + $0x2d8] sm:$0xff]
    %v452 = vld [vmem:[#allocation9 + $0x2e0] sm:$0xff]
    %v453 = vld [vmem:[#allocation9 + $0x2e8] sm:$0xff]
    %v454 = vld [vmem:[#allocation9 + $0x2f0] sm:$0xff]
    %v455 = vld [vmem:[#allocation9 + $0x2f8] sm:$0xff]
    %v456 = vld [vmem:[#allocation9 + $0x300] sm:$0xff]
    %v457 = vld [vmem:[#allocation9 + $0x308] sm:$0xff]
    %v458 = vld [vmem:[#allocation9 + $0x310] sm:$0xff]
    %v459 = vld [vmem:[#allocation9 + $0x318] sm:$0xff]
    %v460 = vld [vmem:[#allocation9 + $0x320] sm:$0xff]
    %v461 = vld [vmem:[#allocation9 + $0x328] sm:$0xff]
    %v462 = vld [vmem:[#allocation9 + $0x330] sm:$0xff]
    %v463 = vld [vmem:[#allocation9 + $0x338] sm:$0xff]
    %v464 = vld [vmem:[#allocation9 + $0x340] sm:$0xff]
    %v465 = vld [vmem:[#allocation9 + $0x348] sm:$0xff]
    %v466 = vld [vmem:[#allocation9 + $0x350] sm:$0xff]
    %v467 = vld [vmem:[#allocation9 + $0x358] sm:$0xff]
    %v468 = vld [vmem:[#allocation9 + $0x360] sm:$0xff]
    %v469 = vld [vmem:[#allocation9 + $0x368] sm:$0xff]
    %v470 = vld [vmem:[#allocation9 + $0x370] sm:$0xff]
    %v471 = vld [vmem:[#allocation9 + $0x378] sm:$0xff]
    %v472 = vld [vmem:[#allocation9 + $0x380] sm:$0xff]
    %v473 = vld [vmem:[#allocation9 + $0x388] sm:$0xff]
    %v474 = vld [vmem:[#allocation9 + $0x390] sm:$0xff]
    %v475 = vld [vmem:[#allocation9 + $0x398] sm:$0xff]
    %v476 = vld [vmem:[#allocation9 + $0x3a0] sm:$0xff]
    %v477 = vld [vmem:[#allocation9 + $0x3a8] sm:$0xff]
    %v478 = vld [vmem:[#allocation9 + $0x3b0] sm:$0xff]
    %v479 = vld [vmem:[#allocation9 + $0x3b8] sm:$0xff]
    %v480 = vld [vmem:[#allocation9 + $0x3c0] sm:$0xff]
    %v481 = vld [vmem:[#allocation9 + $0x3c8] sm:$0xff]
    %v482 = vld [vmem:[#allocation9 + $0x3d0] sm:$0xff]
    %v483 = vld [vmem:[#allocation9 + $0x3d8] sm:$0xff]
    %v484 = vld [vmem:[#allocation9 + $0x3e0] sm:$0xff]
    %v485 = vld [vmem:[#allocation9 + $0x3e8] sm:$0xff]
    %v486 = vld [vmem:[#allocation9 + $0x3f0] sm:$0xff]
    %v487 = vld [vmem:[#allocation9 + $0x3f8] sm:$0xff]
    %v488 = vld [vmem:[#allocation9 + $0x400] sm:$0xff]
    %v489 = vld [vmem:[#allocation9 + $0x408] sm:$0xff]
    %v490 = vld [vmem:[#allocation9 + $0x410] sm:$0xff]
    %v491 = vld [vmem:[#allocation9 + $0x418] sm:$0xff]
    %v492 = vld [vmem:[#allocation9 + $0x420] sm:$0xff]
    %v493 = vld [vmem:[#allocation9 + $0x428] sm:$0xff]
    %v494 = vld [vmem:[#allocation9 + $0x430] sm:$0xff]
    %v495 = vld [vmem:[#allocation9 + $0x438] sm:$0xff]
    %v496 = vld [vmem:[#allocation9 + $0x440] sm:$0xff]
    %v497 = vld [vmem:[#allocation9 + $0x448] sm:$0xff]
    %v498 = vld [vmem:[#allocation9 + $0x450] sm:$0xff]
    %v499 = vld [vmem:[#allocation9 + $0x458] sm:$0xff]
    %v500 = vld [vmem:[#allocation9 + $0x460] sm:$0xff]
    %v501 = vld [vmem:[#allocation9 + $0x468] sm:$0xff]
    %v502 = vld [vmem:[#allocation9 + $0x470] sm:$0xff]
    %v503 = vld [vmem:[#allocation9 + $0x478] sm:$0xff]
    %v504 = vld [vmem:[#allocation9 + $0x480] sm:$0xff]
    %v505 = vld [vmem:[#allocation9 + $0x488] sm:$0xff]
    %v506 = vld [vmem:[#allocation9 + $0x490] sm:$0xff]
    %v507 = vld [vmem:[#allocation9 + $0x498] sm:$0xff]
    %v508 = vld [vmem:[#allocation9 + $0x4a0] sm:$0xff]
    %v509 = vld [vmem:[#allocation9 + $0x4a8] sm:$0xff]
    %v510 = vld [vmem:[#allocation9 + $0x4b0] sm:$0xff]
    %v511 = vld [vmem:[#allocation9 + $0x4b8] sm:$0xff]
    %v512 = vld [vmem:[#allocation9 + $0x4c0] sm:$0xff]
    %v513 = vld [vmem:[#allocation9 + $0x4c8] sm:$0xff]
    %v514 = vld [vmem:[#allocation9 + $0x4d0] sm:$0xff]
    %v515 = vld [vmem:[#allocation9 + $0x4d8] sm:$0xff]
    %v516 = vld [vmem:[#allocation9 + $0x4e0] sm:$0xff]
    %v517 = vld [vmem:[#allocation9 + $0x4e8] sm:$0xff]
    %v518 = vld [vmem:[#allocation9 + $0x4f0] sm:$0xff]
    %v519 = vld [vmem:[#allocation9 + $0x4f8] sm:$0xff]
    %v520 = vld [vmem:[#allocation9 + $0x500] sm:$0xff]
    %v521 = vld [vmem:[#allocation9 + $0x508] sm:$0xff]
    %v522 = vld [vmem:[#allocation9 + $0x510] sm:$0xff]
    %v523 = vld [vmem:[#allocation9 + $0x518] sm:$0xff]
    %v524 = vld [vmem:[#allocation9 + $0x520] sm:$0xff]
    %v525 = vld [vmem:[#allocation9 + $0x528] sm:$0xff]
    %v526 = vld [vmem:[#allocation9 + $0x530] sm:$0xff]
    %v527 = vld [vmem:[#allocation9 + $0x538] sm:$0xff]
    %v528 = vld [vmem:[#allocation9 + $0x540] sm:$0xff]
    %v529 = vld [vmem:[#allocation9 + $0x548] sm:$0xff]
    %v530 = vld [vmem:[#allocation9 + $0x550] sm:$0xff]
    %v531 = vld [vmem:[#allocation9 + $0x558] sm:$0xff]
    %v532 = vld [vmem:[#allocation9 + $0x560] sm:$0xff]
    %v533 = vld [vmem:[#allocation9 + $0x568] sm:$0xff]
    %v534 = vld [vmem:[#allocation9 + $0x570] sm:$0xff]
    %v535 = vld [vmem:[#allocation9 + $0x578] sm:$0xff]
    %v536 = vld [vmem:[#allocation9 + $0x580] sm:$0xff]
    %v537 = vld [vmem:[#allocation9 + $0x588] sm:$0xff]
    %v538 = vld [vmem:[#allocation9 + $0x590] sm:$0xff]
    %v539 = vld [vmem:[#allocation9 + $0x598] sm:$0xff]
    %v540 = vld [vmem:[#allocation9 + $0x5a0] sm:$0xff]
    %v541 = vld [vmem:[#allocation9 + $0x5a8] sm:$0xff]
    %v542 = vld [vmem:[#allocation9 + $0x5b0] sm:$0xff]
    %v543 = vld [vmem:[#allocation9 + $0x5b8] sm:$0xff]
    %v544 = vld [vmem:[#allocation9 + $0x5c0] sm:$0xff]
    %v545 = vld [vmem:[#allocation9 + $0x5c8] sm:$0xff]
    %v546 = vld [vmem:[#allocation9 + $0x5d0] sm:$0xff]
    %v547 = vld [vmem:[#allocation9 + $0x5d8] sm:$0xff]
    %v548 = vld [vmem:[#allocation9 + $0x5e0] sm:$0xff]
    %v549 = vld [vmem:[#allocation9 + $0x5e8] sm:$0xff]
    %v550 = vld [vmem:[#allocation9 + $0x5f0] sm:$0xff]
    %v551 = vld [vmem:[#allocation9 + $0x5f8] sm:$0xff]
    %v552 = vld [vmem:[#allocation9 + $0x600] sm:$0xff]
    %v553 = vld [vmem:[#allocation9 + $0x608] sm:$0xff]
    %v554 = vld [vmem:[#allocation9 + $0x610] sm:$0xff]
    %v555 = vld [vmem:[#allocation9 + $0x618] sm:$0xff]
    %v556 = vld [vmem:[#allocation9 + $0x620] sm:$0xff]
    %v557 = vld [vmem:[#allocation9 + $0x628] sm:$0xff]
    %v558 = vld [vmem:[#allocation9 + $0x630] sm:$0xff]
    %v559 = vld [vmem:[#allocation9 + $0x638] sm:$0xff]
    %v560 = vld [vmem:[#allocation9 + $0x640] sm:$0xff]
    %v561 = vld [vmem:[#allocation9 + $0x648] sm:$0xff]
    %v562 = vld [vmem:[#allocation9 + $0x650] sm:$0xff]
    %v563 = vld [vmem:[#allocation9 + $0x658] sm:$0xff]
    %v564 = vld [vmem:[#allocation9 + $0x660] sm:$0xff]
    %v565 = vld [vmem:[#allocation9 + $0x668] sm:$0xff]
    %v566 = vld [vmem:[#allocation9 + $0x670] sm:$0xff]
    %v567 = vld [vmem:[#allocation9 + $0x678] sm:$0xff]
    %v568 = vld [vmem:[#allocation9 + $0x680] sm:$0xff]
    %v569 = vld [vmem:[#allocation9 + $0x688] sm:$0xff]
    %v570 = vld [vmem:[#allocation9 + $0x690] sm:$0xff]
    %v571 = vld [vmem:[#allocation9 + $0x698] sm:$0xff]
    %v572 = vld [vmem:[#allocation9 + $0x6a0] sm:$0xff]
    %v573 = vld [vmem:[#allocation9 + $0x6a8] sm:$0xff]
    %v574 = vld [vmem:[#allocation9 + $0x6b0] sm:$0xff]
    %v575 = vld [vmem:[#allocation9 + $0x6b8] sm:$0xff]
    %v576 = vld [vmem:[#allocation9 + $0x6c0] sm:$0xff]
    %v577 = vld [vmem:[#allocation9 + $0x6c8] sm:$0xff]
    %v578 = vld [vmem:[#allocation9 + $0x6d0] sm:$0xff]
    %v579 = vld [vmem:[#allocation9 + $0x6d8] sm:$0xff]
    %v580 = vld [vmem:[#allocation9 + $0x6e0] sm:$0xff]
    %v581 = vld [vmem:[#allocation9 + $0x6e8] sm:$0xff]
    %v582 = vld [vmem:[#allocation9 + $0x6f0] sm:$0xff]
    %v583 = vld [vmem:[#allocation9 + $0x6f8] sm:$0xff]
    %v584 = vld [vmem:[#allocation9 + $0x700] sm:$0xff]
    %v585 = vld [vmem:[#allocation9 + $0x708] sm:$0xff]
    %v586 = vld [vmem:[#allocation9 + $0x710] sm:$0xff]
    %v587 = vld [vmem:[#allocation9 + $0x718] sm:$0xff]
    %v588 = vld [vmem:[#allocation9 + $0x720] sm:$0xff]
    %v589 = vld [vmem:[#allocation9 + $0x728] sm:$0xff]
    %v590 = vld [vmem:[#allocation9 + $0x730] sm:$0xff]
    %v591 = vld [vmem:[#allocation9 + $0x738] sm:$0xff]
    %v592 = vld [vmem:[#allocation9 + $0x740] sm:$0xff]
    %v593 = vld [vmem:[#allocation9 + $0x748] sm:$0xff]
    %v594 = vld [vmem:[#allocation9 + $0x750] sm:$0xff]
    %v595 = vld [vmem:[#allocation9 + $0x758] sm:$0xff]
    %v596 = vld [vmem:[#allocation9 + $0x760] sm:$0xff]
    %v597 = vld [vmem:[#allocation9 + $0x768] sm:$0xff]
    %v598 = vld [vmem:[#allocation9 + $0x770] sm:$0xff]
    %v599 = vld [vmem:[#allocation9 + $0x778] sm:$0xff]
    %v600 = vld [vmem:[#allocation9 + $0x780] sm:$0xff]
    %v601 = vld [vmem:[#allocation9 + $0x788] sm:$0xff]
    %v602 = vld [vmem:[#allocation9 + $0x790] sm:$0xff]
    %v603 = vld [vmem:[#allocation9 + $0x798] sm:$0xff]
    %v604 = vld [vmem:[#allocation9 + $0x7a0] sm:$0xff]
    %v605 = vld [vmem:[#allocation9 + $0x7a8] sm:$0xff]
    %v606 = vld [vmem:[#allocation9 + $0x7b0] sm:$0xff]
    %v607 = vld [vmem:[#allocation9 + $0x7b8] sm:$0xff]
    %v608 = vld [vmem:[#allocation9 + $0x7c0] sm:$0xff]
    %v609 = vld [vmem:[#allocation9 + $0x7c8] sm:$0xff]
    %v610 = vld [vmem:[#allocation9 + $0x7d0] sm:$0xff]
    %v611 = vld [vmem:[#allocation9 + $0x7d8] sm:$0xff]
    %v612 = vld [vmem:[#allocation9 + $0x7e0] sm:$0xff]
    %v613 = vld [vmem:[#allocation9 + $0x7e8] sm:$0xff]
    %v614 = vld [vmem:[#allocation9 + $0x7f0] sm:$0xff]
    %v615 = vld [vmem:[#allocation9 + $0x7f8] sm:$0xff]
    %v616 = vld [vmem:[#allocation10] sm:$0xff]
    %v618 = vperm.slane %v616, 0
    %v619 = vperm.slane %v616, 1
    %v620 = vperm.slane %v616, 2
    %v621 = vperm.slane %v616, 3
    %v622 = vperm.slane %v616, 4
    %v623 = vperm.slane %v616, 5
    %v624 = vperm.slane %v616, 6
    %v625 = vperm.slane %v616, 7
    %634 = vmatpush.msra.mxu0 %v480
    %635 = vmatpush.msra.mxu0 %v472
    %636 = vmatpush.msra.mxu0 %v464
    %637 = vmatpush.msra.mxu0 %v456
    %638 = vmatpush.msra.mxu0 %v448
    %639 = vmatpush.msra.mxu0 %v440
    %640 = vmatpush.msra.mxu0 %v432
    %641 = vmatpush.msra.mxu0 %v424
    %642 = vmatpush.msra.mxu0 %v416
    %643 = vmatpush.msra.mxu0 %v408
    %644 = vmatpush.msra.mxu0 %v400
    %645 = vmatpush.msra.mxu0 %v392
    %646 = vmatpush.msra.mxu0 %v384
    %647 = vmatpush.msra.mxu0 %v376
    %648 = vmatpush.msra.mxu0 %v368
    %649 = vmatpush.msra.mxu0 %v360
    %650 = vmatmul.f32.gmra.mxu0 %v336
    %v651 = vpop.f32.mrf.mxu0
    %v652 = vadd.f32 %v618, %v651
    %653 = vdwg.mxu0
    %654 = vmatpush.msra.mxu0 %v608
    %655 = vmatpush.msra.mxu0 %v600
    %656 = vmatpush.msra.mxu0 %v592
    %657 = vmatpush.msra.mxu0 %v584
    %658 = vmatpush.msra.mxu0 %v576
    %659 = vmatpush.msra.mxu0 %v568
    %660 = vmatpush.msra.mxu0 %v560
    %661 = vmatpush.msra.mxu0 %v552
    %662 = vmatpush.msra.mxu0 %v544
    %663 = vmatpush.msra.mxu0 %v536
    %664 = vmatpush.msra.mxu0 %v528
    %665 = vmatpush.msra.mxu0 %v520
    %666 = vmatpush.msra.mxu0 %v512
    %667 = vmatpush.msra.mxu0 %v504
    %668 = vmatpush.msra.mxu0 %v496
    %669 = vmatpush.msra.mxu0 %v488
    %670 = vmatmul.f32.gmra.mxu0 %v356
    %v671 = vpop.f32.mrf.mxu0
    %v672 = vadd.f32 %v652, %v671
    %673 = vdwg.mxu0
    %674 = vmatpush.msra.mxu0 %v481
    %675 = vmatpush.msra.mxu0 %v473
    %676 = vmatpush.msra.mxu0 %v465
    %677 = vmatpush.msra.mxu0 %v457
    %678 = vmatpush.msra.mxu0 %v449
    %679 = vmatpush.msra.mxu0 %v441
    %680 = vmatpush.msra.mxu0 %v433
    %681 = vmatpush.msra.mxu0 %v425
    %682 = vmatpush.msra.mxu0 %v417
    %683 = vmatpush.msra.mxu0 %v409
    %684 = vmatpush.msra.mxu0 %v401
    %685 = vmatpush.msra.mxu0 %v393
    %686 = vmatpush.msra.mxu0 %v385
    %687 = vmatpush.msra.mxu0 %v377
    %688 = vmatpush.msra.mxu0 %v369
    %689 = vmatpush.msra.mxu0 %v361
    %690 = vmatmul.f32.gmra.mxu0 %v336
    %v691 = vpop.f32.mrf.mxu0
    %v692 = vadd.f32 %v619, %v691
    %693 = vdwg.mxu0
    %694 = vmatpush.msra.mxu0 %v609
    %695 = vmatpush.msra.mxu0 %v601
    %696 = vmatpush.msra.mxu0 %v593
    %697 = vmatpush.msra.mxu0 %v585
    %698 = vmatpush.msra.mxu0 %v577
    %699 = vmatpush.msra.mxu0 %v569
    %700 = vmatpush.msra.mxu0 %v561
    %701 = vmatpush.msra.mxu0 %v553
    %702 = vmatpush.msra.mxu0 %v545
    %703 = vmatpush.msra.mxu0 %v537
    %704 = vmatpush.msra.mxu0 %v529
    %705 = vmatpush.msra.mxu0 %v521
    %706 = vmatpush.msra.mxu0 %v513
    %707 = vmatpush.msra.mxu0 %v505
    %708 = vmatpush.msra.mxu0 %v497
    %709 = vmatpush.msra.mxu0 %v489
    %710 = vmatmul.f32.gmra.mxu0 %v356
    %v711 = vpop.f32.mrf.mxu0
    %v712 = vadd.f32 %v692, %v711
    %713 = vdwg.mxu0
    %714 = vmatpush.msra.mxu0 %v482
    %715 = vmatpush.msra.mxu0 %v474
    %716 = vmatpush.msra.mxu0 %v466
    %717 = vmatpush.msra.mxu0 %v458
    %718 = vmatpush.msra.mxu0 %v450
    %719 = vmatpush.msra.mxu0 %v442
    %720 = vmatpush.msra.mxu0 %v434
    %721 = vmatpush.msra.mxu0 %v426
    %722 = vmatpush.msra.mxu0 %v418
    %723 = vmatpush.msra.mxu0 %v410
    %724 = vmatpush.msra.mxu0 %v402
    %725 = vmatpush.msra.mxu0 %v394
    %726 = vmatpush.msra.mxu0 %v386
    %727 = vmatpush.msra.mxu0 %v378
    %728 = vmatpush.msra.mxu0 %v370
    %729 = vmatpush.msra.mxu0 %v362
    %730 = vmatmul.f32.gmra.mxu0 %v336
    %v731 = vpop.f32.mrf.mxu0
    %v732 = vadd.f32 %v620, %v731
    %733 = vdwg.mxu0
    %734 = vmatpush.msra.mxu0 %v610
    %735 = vmatpush.msra.mxu0 %v602
    %736 = vmatpush.msra.mxu0 %v594
    %737 = vmatpush.msra.mxu0 %v586
    %738 = vmatpush.msra.mxu0 %v578
    %739 = vmatpush.msra.mxu0 %v570
    %740 = vmatpush.msra.mxu0 %v562
    %741 = vmatpush.msra.mxu0 %v554
    %742 = vmatpush.msra.mxu0 %v546
    %743 = vmatpush.msra.mxu0 %v538
    %744 = vmatpush.msra.mxu0 %v530
    %745 = vmatpush.msra.mxu0 %v522
    %746 = vmatpush.msra.mxu0 %v514
    %747 = vmatpush.msra.mxu0 %v506
    %748 = vmatpush.msra.mxu0 %v498
    %749 = vmatpush.msra.mxu0 %v490
    %750 = vmatmul.f32.gmra.mxu0 %v356
    %v751 = vpop.f32.mrf.mxu0
    %v752 = vadd.f32 %v732, %v751
    %753 = vdwg.mxu0
    %754 = vmatpush.msra.mxu0 %v483
    %755 = vmatpush.msra.mxu0 %v475
    %756 = vmatpush.msra.mxu0 %v467
    %757 = vmatpush.msra.mxu0 %v459
    %758 = vmatpush.msra.mxu0 %v451
    %759 = vmatpush.msra.mxu0 %v443
    %760 = vmatpush.msra.mxu0 %v435
    %761 = vmatpush.msra.mxu0 %v427
    %762 = vmatpush.msra.mxu0 %v419
    %763 = vmatpush.msra.mxu0 %v411
    %764 = vmatpush.msra.mxu0 %v403
    %765 = vmatpush.msra.mxu0 %v395
    %766 = vmatpush.msra.mxu0 %v387
    %767 = vmatpush.msra.mxu0 %v379
    %768 = vmatpush.msra.mxu0 %v371
    %769 = vmatpush.msra.mxu0 %v363
    %770 = vmatmul.f32.gmra.mxu0 %v336
    %v771 = vpop.f32.mrf.mxu0
    %v772 = vadd.f32 %v621, %v771
    %773 = vdwg.mxu0
    %774 = vmatpush.msra.mxu0 %v611
    %775 = vmatpush.msra.mxu0 %v603
    %776 = vmatpush.msra.mxu0 %v595
    %777 = vmatpush.msra.mxu0 %v587
    %778 = vmatpush.msra.mxu0 %v579
    %779 = vmatpush.msra.mxu0 %v571
    %780 = vmatpush.msra.mxu0 %v563
    %781 = vmatpush.msra.mxu0 %v555
    %782 = vmatpush.msra.mxu0 %v547
    %783 = vmatpush.msra.mxu0 %v539
    %784 = vmatpush.msra.mxu0 %v531
    %785 = vmatpush.msra.mxu0 %v523
    %786 = vmatpush.msra.mxu0 %v515
    %787 = vmatpush.msra.mxu0 %v507
    %788 = vmatpush.msra.mxu0 %v499
    %789 = vmatpush.msra.mxu0 %v491
    %790 = vmatmul.f32.gmra.mxu0 %v356
    %v791 = vpop.f32.mrf.mxu0
    %v792 = vadd.f32 %v772, %v791
    %793 = vdwg.mxu0
    %794 = vmatpush.msra.mxu0 %v484
    %795 = vmatpush.msra.mxu0 %v476
    %796 = vmatpush.msra.mxu0 %v468
    %797 = vmatpush.msra.mxu0 %v460
    %798 = vmatpush.msra.mxu0 %v452
    %799 = vmatpush.msra.mxu0 %v444
    %800 = vmatpush.msra.mxu0 %v436
    %801 = vmatpush.msra.mxu0 %v428
    %802 = vmatpush.msra.mxu0 %v420
    %803 = vmatpush.msra.mxu0 %v412
    %804 = vmatpush.msra.mxu0 %v404
    %805 = vmatpush.msra.mxu0 %v396
    %806 = vmatpush.msra.mxu0 %v388
    %807 = vmatpush.msra.mxu0 %v380
    %808 = vmatpush.msra.mxu0 %v372
    %809 = vmatpush.msra.mxu0 %v364
    %810 = vmatmul.f32.gmra.mxu0 %v336
    %v811 = vpop.f32.mrf.mxu0
    %v812 = vadd.f32 %v622, %v811
    %813 = vdwg.mxu0
    %814 = vmatpush.msra.mxu0 %v612
    %815 = vmatpush.msra.mxu0 %v604
    %816 = vmatpush.msra.mxu0 %v596
    %817 = vmatpush.msra.mxu0 %v588
    %818 = vmatpush.msra.mxu0 %v580
    %819 = vmatpush.msra.mxu0 %v572
    %820 = vmatpush.msra.mxu0 %v564
    %821 = vmatpush.msra.mxu0 %v556
    %822 = vmatpush.msra.mxu0 %v548
    %823 = vmatpush.msra.mxu0 %v540
    %824 = vmatpush.msra.mxu0 %v532
    %825 = vmatpush.msra.mxu0 %v524
    %826 = vmatpush.msra.mxu0 %v516
    %827 = vmatpush.msra.mxu0 %v508
    %828 = vmatpush.msra.mxu0 %v500
    %829 = vmatpush.msra.mxu0 %v492
    %830 = vmatmul.f32.gmra.mxu0 %v356
    %v831 = vpop.f32.mrf.mxu0
    %v832 = vadd.f32 %v812, %v831
    %833 = vdwg.mxu0
    %834 = vmatpush.msra.mxu0 %v485
    %835 = vmatpush.msra.mxu0 %v477
    %836 = vmatpush.msra.mxu0 %v469
    %837 = vmatpush.msra.mxu0 %v461
    %838 = vmatpush.msra.mxu0 %v453
    %839 = vmatpush.msra.mxu0 %v445
    %840 = vmatpush.msra.mxu0 %v437
    %841 = vmatpush.msra.mxu0 %v429
    %842 = vmatpush.msra.mxu0 %v421
    %843 = vmatpush.msra.mxu0 %v413
    %844 = vmatpush.msra.mxu0 %v405
    %845 = vmatpush.msra.mxu0 %v397
    %846 = vmatpush.msra.mxu0 %v389
    %847 = vmatpush.msra.mxu0 %v381
    %848 = vmatpush.msra.mxu0 %v373
    %849 = vmatpush.msra.mxu0 %v365
    %850 = vmatmul.f32.gmra.mxu0 %v336
    %v851 = vpop.f32.mrf.mxu0
    %v852 = vadd.f32 %v623, %v851
    %853 = vdwg.mxu0
    %854 = vmatpush.msra.mxu0 %v613
    %855 = vmatpush.msra.mxu0 %v605
    %856 = vmatpush.msra.mxu0 %v597
    %857 = vmatpush.msra.mxu0 %v589
    %858 = vmatpush.msra.mxu0 %v581
    %859 = vmatpush.msra.mxu0 %v573
    %860 = vmatpush.msra.mxu0 %v565
    %861 = vmatpush.msra.mxu0 %v557
    %862 = vmatpush.msra.mxu0 %v549
    %863 = vmatpush.msra.mxu0 %v541
    %864 = vmatpush.msra.mxu0 %v533
    %865 = vmatpush.msra.mxu0 %v525
    %866 = vmatpush.msra.mxu0 %v517
    %867 = vmatpush.msra.mxu0 %v509
    %868 = vmatpush.msra.mxu0 %v501
    %869 = vmatpush.msra.mxu0 %v493
    %870 = vmatmul.f32.gmra.mxu0 %v356
    %v871 = vpop.f32.mrf.mxu0
    %v872 = vadd.f32 %v852, %v871
    %873 = vdwg.mxu0
    %874 = vmatpush.msra.mxu0 %v486
    %875 = vmatpush.msra.mxu0 %v478
    %876 = vmatpush.msra.mxu0 %v470
    %877 = vmatpush.msra.mxu0 %v462
    %878 = vmatpush.msra.mxu0 %v454
    %879 = vmatpush.msra.mxu0 %v446
    %880 = vmatpush.msra.mxu0 %v438
    %881 = vmatpush.msra.mxu0 %v430
    %882 = vmatpush.msra.mxu0 %v422
    %883 = vmatpush.msra.mxu0 %v414
    %884 = vmatpush.msra.mxu0 %v406
    %885 = vmatpush.msra.mxu0 %v398
    %886 = vmatpush.msra.mxu0 %v390
    %887 = vmatpush.msra.mxu0 %v382
    %888 = vmatpush.msra.mxu0 %v374
    %889 = vmatpush.msra.mxu0 %v366
    %890 = vmatmul.f32.gmra.mxu0 %v336
    %v891 = vpop.f32.mrf.mxu0
    %v892 = vadd.f32 %v624, %v891
    %893 = vdwg.mxu0
    %894 = vmatpush.msra.mxu0 %v614
    %895 = vmatpush.msra.mxu0 %v606
    %896 = vmatpush.msra.mxu0 %v598
    %897 = vmatpush.msra.mxu0 %v590
    %898 = vmatpush.msra.mxu0 %v582
    %899 = vmatpush.msra.mxu0 %v574
    %900 = vmatpush.msra.mxu0 %v566
    %901 = vmatpush.msra.mxu0 %v558
    %902 = vmatpush.msra.mxu0 %v550
    %903 = vmatpush.msra.mxu0 %v542
    %904 = vmatpush.msra.mxu0 %v534
    %905 = vmatpush.msra.mxu0 %v526
    %906 = vmatpush.msra.mxu0 %v518
    %907 = vmatpush.msra.mxu0 %v510
    %908 = vmatpush.msra.mxu0 %v502
    %909 = vmatpush.msra.mxu0 %v494
    %910 = vmatmul.f32.gmra.mxu0 %v356
    %v911 = vpop.f32.mrf.mxu0
    %v912 = vadd.f32 %v892, %v911
    %913 = vdwg.mxu0
    %914 = vmatpush.msra.mxu0 %v487
    %915 = vmatpush.msra.mxu0 %v479
    %916 = vmatpush.msra.mxu0 %v471
    %917 = vmatpush.msra.mxu0 %v463
    %918 = vmatpush.msra.mxu0 %v455
    %919 = vmatpush.msra.mxu0 %v447
    %920 = vmatpush.msra.mxu0 %v439
    %921 = vmatpush.msra.mxu0 %v431
    %922 = vmatpush.msra.mxu0 %v423
    %923 = vmatpush.msra.mxu0 %v415
    %924 = vmatpush.msra.mxu0 %v407
    %925 = vmatpush.msra.mxu0 %v399
    %926 = vmatpush.msra.mxu0 %v391
    %927 = vmatpush.msra.mxu0 %v383
    %928 = vmatpush.msra.mxu0 %v375
    %929 = vmatpush.msra.mxu0 %v367
    %930 = vmatmul.f32.gmra.mxu0 %v336
    %v931 = vpop.f32.mrf.mxu0
    %v932 = vadd.f32 %v625, %v931
    %933 = vdwg.mxu0
    %934 = vmatpush.msra.mxu0 %v615
    %935 = vmatpush.msra.mxu0 %v607
    %936 = vmatpush.msra.mxu0 %v599
    %937 = vmatpush.msra.mxu0 %v591
    %938 = vmatpush.msra.mxu0 %v583
    %939 = vmatpush.msra.mxu0 %v575
    %940 = vmatpush.msra.mxu0 %v567
    %941 = vmatpush.msra.mxu0 %v559
    %942 = vmatpush.msra.mxu0 %v551
    %943 = vmatpush.msra.mxu0 %v543
    %944 = vmatpush.msra.mxu0 %v535
    %945 = vmatpush.msra.mxu0 %v527
    %946 = vmatpush.msra.mxu0 %v519
    %947 = vmatpush.msra.mxu0 %v511
    %948 = vmatpush.msra.mxu0 %v503
    %949 = vmatpush.msra.mxu0 %v495
    %950 = vmatmul.f32.gmra.mxu0 %v356
    %v951 = vpop.f32.mrf.mxu0
    %v952 = vadd.f32 %v932, %v951
    %953 = vdwg.mxu0
    %vm954 = vcmp.gt.f32.partialorder %v672, 0.0
    %vm955 = vcmp.gt.f32.partialorder %v712, 0.0
    %vm956 = vcmp.gt.f32.partialorder %v752, 0.0
    %vm957 = vcmp.gt.f32.partialorder %v792, 0.0
    %vm958 = vcmp.gt.f32.partialorder %v832, 0.0
    %vm959 = vcmp.gt.f32.partialorder %v872, 0.0
    %vm960 = vcmp.gt.f32.partialorder %v912, 0.0
    %vm961 = vcmp.gt.f32.partialorder %v952, 0.0
    %v962 = vmin.f32 %v672, 0.0
    %v963 = vmin.f32 %v712, 0.0
    %v964 = vmin.f32 %v752, 0.0
    %v965 = vmin.f32 %v792, 0.0
    %v966 = vmin.f32 %v832, 0.0
    %v967 = vmin.f32 %v872, 0.0
    %v968 = vmin.f32 %v912, 0.0
    %v969 = vmin.f32 %v952, 0.0
    %v970 = vmul.f32 %v962, 1.442695
    %v971 = vpow.pop %v970
    %v972 = vmul.f32 %v963, 1.442695
    %v973 = vpow.pop %v972
    %v974 = vmul.f32 %v964, 1.442695
    %v975 = vpow.pop %v974
    %v976 = vmul.f32 %v965, 1.442695
    %v977 = vpow.pop %v976
    %v978 = vmul.f32 %v966, 1.442695
    %v979 = vpow.pop %v978
    %v980 = vmul.f32 %v967, 1.442695
    %v981 = vpow.pop %v980
    %v982 = vmul.f32 %v968, 1.442695
    %v983 = vpow.pop %v982
    %v984 = vmul.f32 %v969, 1.442695
    %v985 = vpow.pop %v984
    %v986 = vsub.f32 %v971, 1.0
    %v987 = vsub.f32 %v973, 1.0
    %v988 = vsub.f32 %v975, 1.0
    %v989 = vsub.f32 %v977, 1.0
    %v990 = vsub.f32 %v979, 1.0
    %v991 = vsub.f32 %v981, 1.0
    %v992 = vsub.f32 %v983, 1.0
    %v993 = vsub.f32 %v985, 1.0
    %v994 = vmul.f32 %v986, 1.6732632
    %v995 = vmul.f32 %v987, 1.6732632
    %v996 = vmul.f32 %v988, 1.6732632
    %v997 = vmul.f32 %v989, 1.6732632
    %v998 = vmul.f32 %v990, 1.6732632
    %v999 = vmul.f32 %v991, 1.6732632
    %v1000 = vmul.f32 %v992, 1.6732632
    %v1001 = vmul.f32 %v993, 1.6732632
    %v1002 = vsel %vm954, %v672, %v994
    %v1003 = vsel %vm955, %v712, %v995
    %v1004 = vsel %vm956, %v752, %v996
    %v1005 = vsel %vm957, %v792, %v997
    %v1006 = vsel %vm958, %v832, %v998
    %v1007 = vsel %vm959, %v872, %v999
    %v1008 = vsel %vm960, %v912, %v1000
    %v1009 = vsel %vm961, %v952, %v1001
    %v1010 = vmul.f32 %v1002, 1.050701
    %v1011 = vmul.f32 %v1003, 1.050701
    %v1012 = vmul.f32 %v1004, 1.050701
    %v1013 = vmul.f32 %v1005, 1.050701
    %v1014 = vmul.f32 %v1006, 1.050701
    %v1015 = vmul.f32 %v1007, 1.050701
    %v1016 = vmul.f32 %v1008, 1.050701
    %v1017 = vmul.f32 %v1009, 1.050701
    %v1018 = vld [vmem:[#allocation12] sm:$0xff]
    %v1019 = vld [vmem:[#allocation12 + $0x8] sm:$0xff]
    %v1020 = vld [vmem:[#allocation12 + $0x10] sm:$0xff]
    %v1021 = vld [vmem:[#allocation12 + $0x18] sm:$0xff]
    %v1022 = vld [vmem:[#allocation12 + $0x20] sm:$0xff]
    %v1023 = vld [vmem:[#allocation12 + $0x28] sm:$0xff]
    %v1024 = vld [vmem:[#allocation12 + $0x30] sm:$0xff]
    %v1025 = vld [vmem:[#allocation12 + $0x38] sm:$0xff]
    %v1026 = vld [vmem:[#allocation12 + $0x40] sm:$0xff]
    %v1027 = vld [vmem:[#allocation12 + $0x48] sm:$0xff]
    %v1028 = vld [vmem:[#allocation12 + $0x50] sm:$0xff]
    %v1029 = vld [vmem:[#allocation12 + $0x58] sm:$0xff]
    %v1030 = vld [vmem:[#allocation12 + $0x60] sm:$0xff]
    %v1031 = vld [vmem:[#allocation12 + $0x68] sm:$0xff]
    %v1032 = vld [vmem:[#allocation12 + $0x70] sm:$0xff]
    %v1033 = vld [vmem:[#allocation12 + $0x78] sm:$0xff]
    %v1034 = vld [vmem:[#allocation12 + $0x80] sm:$0xff]
    %v1035 = vld [vmem:[#allocation12 + $0x88] sm:$0xff]
    %v1036 = vld [vmem:[#allocation12 + $0x90] sm:$0xff]
    %v1037 = vld [vmem:[#allocation12 + $0x98] sm:$0xff]
    %v1038 = vld [vmem:[#allocation12 + $0xa0] sm:$0xff]
    %v1039 = vld [vmem:[#allocation12 + $0xa8] sm:$0xff]
    %v1040 = vld [vmem:[#allocation12 + $0xb0] sm:$0xff]
    %v1041 = vld [vmem:[#allocation12 + $0xb8] sm:$0xff]
    %v1042 = vld [vmem:[#allocation12 + $0xc0] sm:$0xff]
    %v1043 = vld [vmem:[#allocation12 + $0xc8] sm:$0xff]
    %v1044 = vld [vmem:[#allocation12 + $0xd0] sm:$0xff]
    %v1045 = vld [vmem:[#allocation12 + $0xd8] sm:$0xff]
    %v1046 = vld [vmem:[#allocation12 + $0xe0] sm:$0xff]
    %v1047 = vld [vmem:[#allocation12 + $0xe8] sm:$0xff]
    %v1048 = vld [vmem:[#allocation12 + $0xf0] sm:$0xff]
    %v1049 = vld [vmem:[#allocation12 + $0xf8] sm:$0xff]
    %v1050 = vld [vmem:[#allocation12 + $0x100] sm:$0xff]
    %v1051 = vld [vmem:[#allocation12 + $0x108] sm:$0xff]
    %v1052 = vld [vmem:[#allocation12 + $0x110] sm:$0xff]
    %v1053 = vld [vmem:[#allocation12 + $0x118] sm:$0xff]
    %v1054 = vld [vmem:[#allocation12 + $0x120] sm:$0xff]
    %v1055 = vld [vmem:[#allocation12 + $0x128] sm:$0xff]
    %v1056 = vld [vmem:[#allocation12 + $0x130] sm:$0xff]
    %v1057 = vld [vmem:[#allocation12 + $0x138] sm:$0xff]
    %v1058 = vld [vmem:[#allocation12 + $0x140] sm:$0xff]
    %v1059 = vld [vmem:[#allocation12 + $0x148] sm:$0xff]
    %v1060 = vld [vmem:[#allocation12 + $0x150] sm:$0xff]
    %v1061 = vld [vmem:[#allocation12 + $0x158] sm:$0xff]
    %v1062 = vld [vmem:[#allocation12 + $0x160] sm:$0xff]
    %v1063 = vld [vmem:[#allocation12 + $0x168] sm:$0xff]
    %v1064 = vld [vmem:[#allocation12 + $0x170] sm:$0xff]
    %v1065 = vld [vmem:[#allocation12 + $0x178] sm:$0xff]
    %v1066 = vld [vmem:[#allocation12 + $0x180] sm:$0xff]
    %v1067 = vld [vmem:[#allocation12 + $0x188] sm:$0xff]
    %v1068 = vld [vmem:[#allocation12 + $0x190] sm:$0xff]
    %v1069 = vld [vmem:[#allocation12 + $0x198] sm:$0xff]
    %v1070 = vld [vmem:[#allocation12 + $0x1a0] sm:$0xff]
    %v1071 = vld [vmem:[#allocation12 + $0x1a8] sm:$0xff]
    %v1072 = vld [vmem:[#allocation12 + $0x1b0] sm:$0xff]
    %v1073 = vld [vmem:[#allocation12 + $0x1b8] sm:$0xff]
    %v1074 = vld [vmem:[#allocation12 + $0x1c0] sm:$0xff]
    %v1075 = vld [vmem:[#allocation12 + $0x1c8] sm:$0xff]
    %v1076 = vld [vmem:[#allocation12 + $0x1d0] sm:$0xff]
    %v1077 = vld [vmem:[#allocation12 + $0x1d8] sm:$0xff]
    %v1078 = vld [vmem:[#allocation12 + $0x1e0] sm:$0xff]
    %v1079 = vld [vmem:[#allocation12 + $0x1e8] sm:$0xff]
    %v1080 = vld [vmem:[#allocation12 + $0x1f0] sm:$0xff]
    %v1081 = vld [vmem:[#allocation12 + $0x1f8] sm:$0xff]
    %v1082 = vld [vmem:[#allocation12 + $0x200] sm:$0xff]
    %v1083 = vld [vmem:[#allocation12 + $0x208] sm:$0xff]
    %v1084 = vld [vmem:[#allocation12 + $0x210] sm:$0xff]
    %v1085 = vld [vmem:[#allocation12 + $0x218] sm:$0xff]
    %v1086 = vld [vmem:[#allocation12 + $0x220] sm:$0xff]
    %v1087 = vld [vmem:[#allocation12 + $0x228] sm:$0xff]
    %v1088 = vld [vmem:[#allocation12 + $0x230] sm:$0xff]
    %v1089 = vld [vmem:[#allocation12 + $0x238] sm:$0xff]
    %v1090 = vld [vmem:[#allocation12 + $0x240] sm:$0xff]
    %v1091 = vld [vmem:[#allocation12 + $0x248] sm:$0xff]
    %v1092 = vld [vmem:[#allocation12 + $0x250] sm:$0xff]
    %v1093 = vld [vmem:[#allocation12 + $0x258] sm:$0xff]
    %v1094 = vld [vmem:[#allocation12 + $0x260] sm:$0xff]
    %v1095 = vld [vmem:[#allocation12 + $0x268] sm:$0xff]
    %v1096 = vld [vmem:[#allocation12 + $0x270] sm:$0xff]
    %v1097 = vld [vmem:[#allocation12 + $0x278] sm:$0xff]
    %v1098 = vld [vmem:[#allocation12 + $0x280] sm:$0xff]
    %v1099 = vld [vmem:[#allocation12 + $0x288] sm:$0xff]
    %v1100 = vld [vmem:[#allocation12 + $0x290] sm:$0xff]
    %v1101 = vld [vmem:[#allocation12 + $0x298] sm:$0xff]
    %v1102 = vld [vmem:[#allocation12 + $0x2a0] sm:$0xff]
    %v1103 = vld [vmem:[#allocation12 + $0x2a8] sm:$0xff]
    %v1104 = vld [vmem:[#allocation12 + $0x2b0] sm:$0xff]
    %v1105 = vld [vmem:[#allocation12 + $0x2b8] sm:$0xff]
    %v1106 = vld [vmem:[#allocation12 + $0x2c0] sm:$0xff]
    %v1107 = vld [vmem:[#allocation12 + $0x2c8] sm:$0xff]
    %v1108 = vld [vmem:[#allocation12 + $0x2d0] sm:$0xff]
    %v1109 = vld [vmem:[#allocation12 + $0x2d8] sm:$0xff]
    %v1110 = vld [vmem:[#allocation12 + $0x2e0] sm:$0xff]
    %v1111 = vld [vmem:[#allocation12 + $0x2e8] sm:$0xff]
    %v1112 = vld [vmem:[#allocation12 + $0x2f0] sm:$0xff]
    %v1113 = vld [vmem:[#allocation12 + $0x2f8] sm:$0xff]
    %v1114 = vld [vmem:[#allocation12 + $0x300] sm:$0xff]
    %v1115 = vld [vmem:[#allocation12 + $0x308] sm:$0xff]
    %v1116 = vld [vmem:[#allocation12 + $0x310] sm:$0xff]
    %v1117 = vld [vmem:[#allocation12 + $0x318] sm:$0xff]
    %v1118 = vld [vmem:[#allocation12 + $0x320] sm:$0xff]
    %v1119 = vld [vmem:[#allocation12 + $0x328] sm:$0xff]
    %v1120 = vld [vmem:[#allocation12 + $0x330] sm:$0xff]
    %v1121 = vld [vmem:[#allocation12 + $0x338] sm:$0xff]
    %v1122 = vld [vmem:[#allocation12 + $0x340] sm:$0xff]
    %v1123 = vld [vmem:[#allocation12 + $0x348] sm:$0xff]
    %v1124 = vld [vmem:[#allocation12 + $0x350] sm:$0xff]
    %v1125 = vld [vmem:[#allocation12 + $0x358] sm:$0xff]
    %v1126 = vld [vmem:[#allocation12 + $0x360] sm:$0xff]
    %v1127 = vld [vmem:[#allocation12 + $0x368] sm:$0xff]
    %v1128 = vld [vmem:[#allocation12 + $0x370] sm:$0xff]
    %v1129 = vld [vmem:[#allocation12 + $0x378] sm:$0xff]
    %v1130 = vld [vmem:[#allocation12 + $0x380] sm:$0xff]
    %v1131 = vld [vmem:[#allocation12 + $0x388] sm:$0xff]
    %v1132 = vld [vmem:[#allocation12 + $0x390] sm:$0xff]
    %v1133 = vld [vmem:[#allocation12 + $0x398] sm:$0xff]
    %v1134 = vld [vmem:[#allocation12 + $0x3a0] sm:$0xff]
    %v1135 = vld [vmem:[#allocation12 + $0x3a8] sm:$0xff]
    %v1136 = vld [vmem:[#allocation12 + $0x3b0] sm:$0xff]
    %v1137 = vld [vmem:[#allocation12 + $0x3b8] sm:$0xff]
    %v1138 = vld [vmem:[#allocation12 + $0x3c0] sm:$0xff]
    %v1139 = vld [vmem:[#allocation12 + $0x3c8] sm:$0xff]
    %v1140 = vld [vmem:[#allocation12 + $0x3d0] sm:$0xff]
    %v1141 = vld [vmem:[#allocation12 + $0x3d8] sm:$0xff]
    %v1142 = vld [vmem:[#allocation12 + $0x3e0] sm:$0xff]
    %v1143 = vld [vmem:[#allocation12 + $0x3e8] sm:$0xff]
    %v1144 = vld [vmem:[#allocation12 + $0x3f0] sm:$0xff]
    %v1145 = vld [vmem:[#allocation12 + $0x3f8] sm:$0xff]
    %v1146 = vld [vmem:[#allocation12 + $0x400] sm:$0xff]
    %v1147 = vld [vmem:[#allocation12 + $0x408] sm:$0xff]
    %v1148 = vld [vmem:[#allocation12 + $0x410] sm:$0xff]
    %v1149 = vld [vmem:[#allocation12 + $0x418] sm:$0xff]
    %v1150 = vld [vmem:[#allocation12 + $0x420] sm:$0xff]
    %v1151 = vld [vmem:[#allocation12 + $0x428] sm:$0xff]
    %v1152 = vld [vmem:[#allocation12 + $0x430] sm:$0xff]
    %v1153 = vld [vmem:[#allocation12 + $0x438] sm:$0xff]
    %v1154 = vld [vmem:[#allocation12 + $0x440] sm:$0xff]
    %v1155 = vld [vmem:[#allocation12 + $0x448] sm:$0xff]
    %v1156 = vld [vmem:[#allocation12 + $0x450] sm:$0xff]
    %v1157 = vld [vmem:[#allocation12 + $0x458] sm:$0xff]
    %v1158 = vld [vmem:[#allocation12 + $0x460] sm:$0xff]
    %v1159 = vld [vmem:[#allocation12 + $0x468] sm:$0xff]
    %v1160 = vld [vmem:[#allocation12 + $0x470] sm:$0xff]
    %v1161 = vld [vmem:[#allocation12 + $0x478] sm:$0xff]
    %v1162 = vld [vmem:[#allocation12 + $0x480] sm:$0xff]
    %v1163 = vld [vmem:[#allocation12 + $0x488] sm:$0xff]
    %v1164 = vld [vmem:[#allocation12 + $0x490] sm:$0xff]
    %v1165 = vld [vmem:[#allocation12 + $0x498] sm:$0xff]
    %v1166 = vld [vmem:[#allocation12 + $0x4a0] sm:$0xff]
    %v1167 = vld [vmem:[#allocation12 + $0x4a8] sm:$0xff]
    %v1168 = vld [vmem:[#allocation12 + $0x4b0] sm:$0xff]
    %v1169 = vld [vmem:[#allocation12 + $0x4b8] sm:$0xff]
    %v1170 = vld [vmem:[#allocation12 + $0x4c0] sm:$0xff]
    %v1171 = vld [vmem:[#allocation12 + $0x4c8] sm:$0xff]
    %v1172 = vld [vmem:[#allocation12 + $0x4d0] sm:$0xff]
    %v1173 = vld [vmem:[#allocation12 + $0x4d8] sm:$0xff]
    %v1174 = vld [vmem:[#allocation12 + $0x4e0] sm:$0xff]
    %v1175 = vld [vmem:[#allocation12 + $0x4e8] sm:$0xff]
    %v1176 = vld [vmem:[#allocation12 + $0x4f0] sm:$0xff]
    %v1177 = vld [vmem:[#allocation12 + $0x4f8] sm:$0xff]
    %v1178 = vld [vmem:[#allocation12 + $0x500] sm:$0xff]
    %v1179 = vld [vmem:[#allocation12 + $0x508] sm:$0xff]
    %v1180 = vld [vmem:[#allocation12 + $0x510] sm:$0xff]
    %v1181 = vld [vmem:[#allocation12 + $0x518] sm:$0xff]
    %v1182 = vld [vmem:[#allocation12 + $0x520] sm:$0xff]
    %v1183 = vld [vmem:[#allocation12 + $0x528] sm:$0xff]
    %v1184 = vld [vmem:[#allocation12 + $0x530] sm:$0xff]
    %v1185 = vld [vmem:[#allocation12 + $0x538] sm:$0xff]
    %v1186 = vld [vmem:[#allocation12 + $0x540] sm:$0xff]
    %v1187 = vld [vmem:[#allocation12 + $0x548] sm:$0xff]
    %v1188 = vld [vmem:[#allocation12 + $0x550] sm:$0xff]
    %v1189 = vld [vmem:[#allocation12 + $0x558] sm:$0xff]
    %v1190 = vld [vmem:[#allocation12 + $0x560] sm:$0xff]
    %v1191 = vld [vmem:[#allocation12 + $0x568] sm:$0xff]
    %v1192 = vld [vmem:[#allocation12 + $0x570] sm:$0xff]
    %v1193 = vld [vmem:[#allocation12 + $0x578] sm:$0xff]
    %v1194 = vld [vmem:[#allocation12 + $0x580] sm:$0xff]
    %v1195 = vld [vmem:[#allocation12 + $0x588] sm:$0xff]
    %v1196 = vld [vmem:[#allocation12 + $0x590] sm:$0xff]
    %v1197 = vld [vmem:[#allocation12 + $0x598] sm:$0xff]
    %v1198 = vld [vmem:[#allocation12 + $0x5a0] sm:$0xff]
    %v1199 = vld [vmem:[#allocation12 + $0x5a8] sm:$0xff]
    %v1200 = vld [vmem:[#allocation12 + $0x5b0] sm:$0xff]
    %v1201 = vld [vmem:[#allocation12 + $0x5b8] sm:$0xff]
    %v1202 = vld [vmem:[#allocation12 + $0x5c0] sm:$0xff]
    %v1203 = vld [vmem:[#allocation12 + $0x5c8] sm:$0xff]
    %v1204 = vld [vmem:[#allocation12 + $0x5d0] sm:$0xff]
    %v1205 = vld [vmem:[#allocation12 + $0x5d8] sm:$0xff]
    %v1206 = vld [vmem:[#allocation12 + $0x5e0] sm:$0xff]
    %v1207 = vld [vmem:[#allocation12 + $0x5e8] sm:$0xff]
    %v1208 = vld [vmem:[#allocation12 + $0x5f0] sm:$0xff]
    %v1209 = vld [vmem:[#allocation12 + $0x5f8] sm:$0xff]
    %v1210 = vld [vmem:[#allocation12 + $0x600] sm:$0xff]
    %v1211 = vld [vmem:[#allocation12 + $0x608] sm:$0xff]
    %v1212 = vld [vmem:[#allocation12 + $0x610] sm:$0xff]
    %v1213 = vld [vmem:[#allocation12 + $0x618] sm:$0xff]
    %v1214 = vld [vmem:[#allocation12 + $0x620] sm:$0xff]
    %v1215 = vld [vmem:[#allocation12 + $0x628] sm:$0xff]
    %v1216 = vld [vmem:[#allocation12 + $0x630] sm:$0xff]
    %v1217 = vld [vmem:[#allocation12 + $0x638] sm:$0xff]
    %v1218 = vld [vmem:[#allocation12 + $0x640] sm:$0xff]
    %v1219 = vld [vmem:[#allocation12 + $0x648] sm:$0xff]
    %v1220 = vld [vmem:[#allocation12 + $0x650] sm:$0xff]
    %v1221 = vld [vmem:[#allocation12 + $0x658] sm:$0xff]
    %v1222 = vld [vmem:[#allocation12 + $0x660] sm:$0xff]
    %v1223 = vld [vmem:[#allocation12 + $0x668] sm:$0xff]
    %v1224 = vld [vmem:[#allocation12 + $0x670] sm:$0xff]
    %v1225 = vld [vmem:[#allocation12 + $0x678] sm:$0xff]
    %v1226 = vld [vmem:[#allocation12 + $0x680] sm:$0xff]
    %v1227 = vld [vmem:[#allocation12 + $0x688] sm:$0xff]
    %v1228 = vld [vmem:[#allocation12 + $0x690] sm:$0xff]
    %v1229 = vld [vmem:[#allocation12 + $0x698] sm:$0xff]
    %v1230 = vld [vmem:[#allocation12 + $0x6a0] sm:$0xff]
    %v1231 = vld [vmem:[#allocation12 + $0x6a8] sm:$0xff]
    %v1232 = vld [vmem:[#allocation12 + $0x6b0] sm:$0xff]
    %v1233 = vld [vmem:[#allocation12 + $0x6b8] sm:$0xff]
    %v1234 = vld [vmem:[#allocation12 + $0x6c0] sm:$0xff]
    %v1235 = vld [vmem:[#allocation12 + $0x6c8] sm:$0xff]
    %v1236 = vld [vmem:[#allocation12 + $0x6d0] sm:$0xff]
    %v1237 = vld [vmem:[#allocation12 + $0x6d8] sm:$0xff]
    %v1238 = vld [vmem:[#allocation12 + $0x6e0] sm:$0xff]
    %v1239 = vld [vmem:[#allocation12 + $0x6e8] sm:$0xff]
    %v1240 = vld [vmem:[#allocation12 + $0x6f0] sm:$0xff]
    %v1241 = vld [vmem:[#allocation12 + $0x6f8] sm:$0xff]
    %v1242 = vld [vmem:[#allocation12 + $0x700] sm:$0xff]
    %v1243 = vld [vmem:[#allocation12 + $0x708] sm:$0xff]
    %v1244 = vld [vmem:[#allocation12 + $0x710] sm:$0xff]
    %v1245 = vld [vmem:[#allocation12 + $0x718] sm:$0xff]
    %v1246 = vld [vmem:[#allocation12 + $0x720] sm:$0xff]
    %v1247 = vld [vmem:[#allocation12 + $0x728] sm:$0xff]
    %v1248 = vld [vmem:[#allocation12 + $0x730] sm:$0xff]
    %v1249 = vld [vmem:[#allocation12 + $0x738] sm:$0xff]
    %v1250 = vld [vmem:[#allocation12 + $0x740] sm:$0xff]
    %v1251 = vld [vmem:[#allocation12 + $0x748] sm:$0xff]
    %v1252 = vld [vmem:[#allocation12 + $0x750] sm:$0xff]
    %v1253 = vld [vmem:[#allocation12 + $0x758] sm:$0xff]
    %v1254 = vld [vmem:[#allocation12 + $0x760] sm:$0xff]
    %v1255 = vld [vmem:[#allocation12 + $0x768] sm:$0xff]
    %v1256 = vld [vmem:[#allocation12 + $0x770] sm:$0xff]
    %v1257 = vld [vmem:[#allocation12 + $0x778] sm:$0xff]
    %v1258 = vld [vmem:[#allocation12 + $0x780] sm:$0xff]
    %v1259 = vld [vmem:[#allocation12 + $0x788] sm:$0xff]
    %v1260 = vld [vmem:[#allocation12 + $0x790] sm:$0xff]
    %v1261 = vld [vmem:[#allocation12 + $0x798] sm:$0xff]
    %v1262 = vld [vmem:[#allocation12 + $0x7a0] sm:$0xff]
    %v1263 = vld [vmem:[#allocation12 + $0x7a8] sm:$0xff]
    %v1264 = vld [vmem:[#allocation12 + $0x7b0] sm:$0xff]
    %v1265 = vld [vmem:[#allocation12 + $0x7b8] sm:$0xff]
    %v1266 = vld [vmem:[#allocation12 + $0x7c0] sm:$0xff]
    %v1267 = vld [vmem:[#allocation12 + $0x7c8] sm:$0xff]
    %v1268 = vld [vmem:[#allocation12 + $0x7d0] sm:$0xff]
    %v1269 = vld [vmem:[#allocation12 + $0x7d8] sm:$0xff]
    %v1270 = vld [vmem:[#allocation12 + $0x7e0] sm:$0xff]
    %v1271 = vld [vmem:[#allocation12 + $0x7e8] sm:$0xff]
    %v1272 = vld [vmem:[#allocation12 + $0x7f0] sm:$0xff]
    %v1273 = vld [vmem:[#allocation12 + $0x7f8] sm:$0xff]
    %v1274 = vld [vmem:[#allocation12 + $0x800] sm:$0xff]
    %v1275 = vld [vmem:[#allocation12 + $0x808] sm:$0xff]
    %v1276 = vld [vmem:[#allocation12 + $0x810] sm:$0xff]
    %v1277 = vld [vmem:[#allocation12 + $0x818] sm:$0xff]
    %v1278 = vld [vmem:[#allocation12 + $0x820] sm:$0xff]
    %v1279 = vld [vmem:[#allocation12 + $0x828] sm:$0xff]
    %v1280 = vld [vmem:[#allocation12 + $0x830] sm:$0xff]
    %v1281 = vld [vmem:[#allocation12 + $0x838] sm:$0xff]
    %v1282 = vld [vmem:[#allocation12 + $0x840] sm:$0xff]
    %v1283 = vld [vmem:[#allocation12 + $0x848] sm:$0xff]
    %v1284 = vld [vmem:[#allocation12 + $0x850] sm:$0xff]
    %v1285 = vld [vmem:[#allocation12 + $0x858] sm:$0xff]
    %v1286 = vld [vmem:[#allocation12 + $0x860] sm:$0xff]
    %v1287 = vld [vmem:[#allocation12 + $0x868] sm:$0xff]
    %v1288 = vld [vmem:[#allocation12 + $0x870] sm:$0xff]
    %v1289 = vld [vmem:[#allocation12 + $0x878] sm:$0xff]
    %v1290 = vld [vmem:[#allocation12 + $0x880] sm:$0xff]
    %v1291 = vld [vmem:[#allocation12 + $0x888] sm:$0xff]
    %v1292 = vld [vmem:[#allocation12 + $0x890] sm:$0xff]
    %v1293 = vld [vmem:[#allocation12 + $0x898] sm:$0xff]
    %v1294 = vld [vmem:[#allocation12 + $0x8a0] sm:$0xff]
    %v1295 = vld [vmem:[#allocation12 + $0x8a8] sm:$0xff]
    %v1296 = vld [vmem:[#allocation12 + $0x8b0] sm:$0xff]
    %v1297 = vld [vmem:[#allocation12 + $0x8b8] sm:$0xff]
    %v1298 = vld [vmem:[#allocation12 + $0x8c0] sm:$0xff]
    %v1299 = vld [vmem:[#allocation12 + $0x8c8] sm:$0xff]
    %v1300 = vld [vmem:[#allocation12 + $0x8d0] sm:$0xff]
    %v1301 = vld [vmem:[#allocation12 + $0x8d8] sm:$0xff]
    %v1302 = vld [vmem:[#allocation12 + $0x8e0] sm:$0xff]
    %v1303 = vld [vmem:[#allocation12 + $0x8e8] sm:$0xff]
    %v1304 = vld [vmem:[#allocation12 + $0x8f0] sm:$0xff]
    %v1305 = vld [vmem:[#allocation12 + $0x8f8] sm:$0xff]
    %v1306 = vld [vmem:[#allocation12 + $0x900] sm:$0xff]
    %v1307 = vld [vmem:[#allocation12 + $0x908] sm:$0xff]
    %v1308 = vld [vmem:[#allocation12 + $0x910] sm:$0xff]
    %v1309 = vld [vmem:[#allocation12 + $0x918] sm:$0xff]
    %v1310 = vld [vmem:[#allocation12 + $0x920] sm:$0xff]
    %v1311 = vld [vmem:[#allocation12 + $0x928] sm:$0xff]
    %v1312 = vld [vmem:[#allocation12 + $0x930] sm:$0xff]
    %v1313 = vld [vmem:[#allocation12 + $0x938] sm:$0xff]
    %v1314 = vld [vmem:[#allocation12 + $0x940] sm:$0xff]
    %v1315 = vld [vmem:[#allocation12 + $0x948] sm:$0xff]
    %v1316 = vld [vmem:[#allocation12 + $0x950] sm:$0xff]
    %v1317 = vld [vmem:[#allocation12 + $0x958] sm:$0xff]
    %v1318 = vld [vmem:[#allocation12 + $0x960] sm:$0xff]
    %v1319 = vld [vmem:[#allocation12 + $0x968] sm:$0xff]
    %v1320 = vld [vmem:[#allocation12 + $0x970] sm:$0xff]
    %v1321 = vld [vmem:[#allocation12 + $0x978] sm:$0xff]
    %v1322 = vld [vmem:[#allocation12 + $0x980] sm:$0xff]
    %v1323 = vld [vmem:[#allocation12 + $0x988] sm:$0xff]
    %v1324 = vld [vmem:[#allocation12 + $0x990] sm:$0xff]
    %v1325 = vld [vmem:[#allocation12 + $0x998] sm:$0xff]
    %v1326 = vld [vmem:[#allocation12 + $0x9a0] sm:$0xff]
    %v1327 = vld [vmem:[#allocation12 + $0x9a8] sm:$0xff]
    %v1328 = vld [vmem:[#allocation12 + $0x9b0] sm:$0xff]
    %v1329 = vld [vmem:[#allocation12 + $0x9b8] sm:$0xff]
    %v1330 = vld [vmem:[#allocation12 + $0x9c0] sm:$0xff]
    %v1331 = vld [vmem:[#allocation12 + $0x9c8] sm:$0xff]
    %v1332 = vld [vmem:[#allocation12 + $0x9d0] sm:$0xff]
    %v1333 = vld [vmem:[#allocation12 + $0x9d8] sm:$0xff]
    %v1334 = vld [vmem:[#allocation12 + $0x9e0] sm:$0xff]
    %v1335 = vld [vmem:[#allocation12 + $0x9e8] sm:$0xff]
    %v1336 = vld [vmem:[#allocation12 + $0x9f0] sm:$0xff]
    %v1337 = vld [vmem:[#allocation12 + $0x9f8] sm:$0xff]
    %v1338 = vld [vmem:[#allocation12 + $0xa00] sm:$0xff]
    %v1339 = vld [vmem:[#allocation12 + $0xa08] sm:$0xff]
    %v1340 = vld [vmem:[#allocation12 + $0xa10] sm:$0xff]
    %v1341 = vld [vmem:[#allocation12 + $0xa18] sm:$0xff]
    %v1342 = vld [vmem:[#allocation12 + $0xa20] sm:$0xff]
    %v1343 = vld [vmem:[#allocation12 + $0xa28] sm:$0xff]
    %v1344 = vld [vmem:[#allocation12 + $0xa30] sm:$0xff]
    %v1345 = vld [vmem:[#allocation12 + $0xa38] sm:$0xff]
    %v1346 = vld [vmem:[#allocation12 + $0xa40] sm:$0xff]
    %v1347 = vld [vmem:[#allocation12 + $0xa48] sm:$0xff]
    %v1348 = vld [vmem:[#allocation12 + $0xa50] sm:$0xff]
    %v1349 = vld [vmem:[#allocation12 + $0xa58] sm:$0xff]
    %v1350 = vld [vmem:[#allocation12 + $0xa60] sm:$0xff]
    %v1351 = vld [vmem:[#allocation12 + $0xa68] sm:$0xff]
    %v1352 = vld [vmem:[#allocation12 + $0xa70] sm:$0xff]
    %v1353 = vld [vmem:[#allocation12 + $0xa78] sm:$0xff]
    %v1354 = vld [vmem:[#allocation12 + $0xa80] sm:$0xff]
    %v1355 = vld [vmem:[#allocation12 + $0xa88] sm:$0xff]
    %v1356 = vld [vmem:[#allocation12 + $0xa90] sm:$0xff]
    %v1357 = vld [vmem:[#allocation12 + $0xa98] sm:$0xff]
    %v1358 = vld [vmem:[#allocation12 + $0xaa0] sm:$0xff]
    %v1359 = vld [vmem:[#allocation12 + $0xaa8] sm:$0xff]
    %v1360 = vld [vmem:[#allocation12 + $0xab0] sm:$0xff]
    %v1361 = vld [vmem:[#allocation12 + $0xab8] sm:$0xff]
    %v1362 = vld [vmem:[#allocation12 + $0xac0] sm:$0xff]
    %v1363 = vld [vmem:[#allocation12 + $0xac8] sm:$0xff]
    %v1364 = vld [vmem:[#allocation12 + $0xad0] sm:$0xff]
    %v1365 = vld [vmem:[#allocation12 + $0xad8] sm:$0xff]
    %v1366 = vld [vmem:[#allocation12 + $0xae0] sm:$0xff]
    %v1367 = vld [vmem:[#allocation12 + $0xae8] sm:$0xff]
    %v1368 = vld [vmem:[#allocation12 + $0xaf0] sm:$0xff]
    %v1369 = vld [vmem:[#allocation12 + $0xaf8] sm:$0xff]
    %v1370 = vld [vmem:[#allocation12 + $0xb00] sm:$0xff]
    %v1371 = vld [vmem:[#allocation12 + $0xb08] sm:$0xff]
    %v1372 = vld [vmem:[#allocation12 + $0xb10] sm:$0xff]
    %v1373 = vld [vmem:[#allocation12 + $0xb18] sm:$0xff]
    %v1374 = vld [vmem:[#allocation12 + $0xb20] sm:$0xff]
    %v1375 = vld [vmem:[#allocation12 + $0xb28] sm:$0xff]
    %v1376 = vld [vmem:[#allocation12 + $0xb30] sm:$0xff]
    %v1377 = vld [vmem:[#allocation12 + $0xb38] sm:$0xff]
    %v1378 = vld [vmem:[#allocation12 + $0xb40] sm:$0xff]
    %v1379 = vld [vmem:[#allocation12 + $0xb48] sm:$0xff]
    %v1380 = vld [vmem:[#allocation12 + $0xb50] sm:$0xff]
    %v1381 = vld [vmem:[#allocation12 + $0xb58] sm:$0xff]
    %v1382 = vld [vmem:[#allocation12 + $0xb60] sm:$0xff]
    %v1383 = vld [vmem:[#allocation12 + $0xb68] sm:$0xff]
    %v1384 = vld [vmem:[#allocation12 + $0xb70] sm:$0xff]
    %v1385 = vld [vmem:[#allocation12 + $0xb78] sm:$0xff]
    %v1386 = vld [vmem:[#allocation12 + $0xb80] sm:$0xff]
    %v1387 = vld [vmem:[#allocation12 + $0xb88] sm:$0xff]
    %v1388 = vld [vmem:[#allocation12 + $0xb90] sm:$0xff]
    %v1389 = vld [vmem:[#allocation12 + $0xb98] sm:$0xff]
    %v1390 = vld [vmem:[#allocation12 + $0xba0] sm:$0xff]
    %v1391 = vld [vmem:[#allocation12 + $0xba8] sm:$0xff]
    %v1392 = vld [vmem:[#allocation12 + $0xbb0] sm:$0xff]
    %v1393 = vld [vmem:[#allocation12 + $0xbb8] sm:$0xff]
    %v1394 = vld [vmem:[#allocation12 + $0xbc0] sm:$0xff]
    %v1395 = vld [vmem:[#allocation12 + $0xbc8] sm:$0xff]
    %v1396 = vld [vmem:[#allocation12 + $0xbd0] sm:$0xff]
    %v1397 = vld [vmem:[#allocation12 + $0xbd8] sm:$0xff]
    %v1398 = vld [vmem:[#allocation12 + $0xbe0] sm:$0xff]
    %v1399 = vld [vmem:[#allocation12 + $0xbe8] sm:$0xff]
    %v1400 = vld [vmem:[#allocation12 + $0xbf0] sm:$0xff]
    %v1401 = vld [vmem:[#allocation12 + $0xbf8] sm:$0xff]
    %v1402 = vld [vmem:[#allocation12 + $0xc00] sm:$0xff]
    %v1403 = vld [vmem:[#allocation12 + $0xc08] sm:$0xff]
    %v1404 = vld [vmem:[#allocation12 + $0xc10] sm:$0xff]
    %v1405 = vld [vmem:[#allocation12 + $0xc18] sm:$0xff]
    %v1406 = vld [vmem:[#allocation12 + $0xc20] sm:$0xff]
    %v1407 = vld [vmem:[#allocation12 + $0xc28] sm:$0xff]
    %v1408 = vld [vmem:[#allocation12 + $0xc30] sm:$0xff]
    %v1409 = vld [vmem:[#allocation12 + $0xc38] sm:$0xff]
    %v1410 = vld [vmem:[#allocation12 + $0xc40] sm:$0xff]
    %v1411 = vld [vmem:[#allocation12 + $0xc48] sm:$0xff]
    %v1412 = vld [vmem:[#allocation12 + $0xc50] sm:$0xff]
    %v1413 = vld [vmem:[#allocation12 + $0xc58] sm:$0xff]
    %v1414 = vld [vmem:[#allocation12 + $0xc60] sm:$0xff]
    %v1415 = vld [vmem:[#allocation12 + $0xc68] sm:$0xff]
    %v1416 = vld [vmem:[#allocation12 + $0xc70] sm:$0xff]
    %v1417 = vld [vmem:[#allocation12 + $0xc78] sm:$0xff]
    %v1418 = vld [vmem:[#allocation12 + $0xc80] sm:$0xff]
    %v1419 = vld [vmem:[#allocation12 + $0xc88] sm:$0xff]
    %v1420 = vld [vmem:[#allocation12 + $0xc90] sm:$0xff]
    %v1421 = vld [vmem:[#allocation12 + $0xc98] sm:$0xff]
    %v1422 = vld [vmem:[#allocation12 + $0xca0] sm:$0xff]
    %v1423 = vld [vmem:[#allocation12 + $0xca8] sm:$0xff]
    %v1424 = vld [vmem:[#allocation12 + $0xcb0] sm:$0xff]
    %v1425 = vld [vmem:[#allocation12 + $0xcb8] sm:$0xff]
    %v1426 = vld [vmem:[#allocation12 + $0xcc0] sm:$0xff]
    %v1427 = vld [vmem:[#allocation12 + $0xcc8] sm:$0xff]
    %v1428 = vld [vmem:[#allocation12 + $0xcd0] sm:$0xff]
    %v1429 = vld [vmem:[#allocation12 + $0xcd8] sm:$0xff]
    %v1430 = vld [vmem:[#allocation12 + $0xce0] sm:$0xff]
    %v1431 = vld [vmem:[#allocation12 + $0xce8] sm:$0xff]
    %v1432 = vld [vmem:[#allocation12 + $0xcf0] sm:$0xff]
    %v1433 = vld [vmem:[#allocation12 + $0xcf8] sm:$0xff]
    %v1434 = vld [vmem:[#allocation12 + $0xd00] sm:$0xff]
    %v1435 = vld [vmem:[#allocation12 + $0xd08] sm:$0xff]
    %v1436 = vld [vmem:[#allocation12 + $0xd10] sm:$0xff]
    %v1437 = vld [vmem:[#allocation12 + $0xd18] sm:$0xff]
    %v1438 = vld [vmem:[#allocation12 + $0xd20] sm:$0xff]
    %v1439 = vld [vmem:[#allocation12 + $0xd28] sm:$0xff]
    %v1440 = vld [vmem:[#allocation12 + $0xd30] sm:$0xff]
    %v1441 = vld [vmem:[#allocation12 + $0xd38] sm:$0xff]
    %v1442 = vld [vmem:[#allocation12 + $0xd40] sm:$0xff]
    %v1443 = vld [vmem:[#allocation12 + $0xd48] sm:$0xff]
    %v1444 = vld [vmem:[#allocation12 + $0xd50] sm:$0xff]
    %v1445 = vld [vmem:[#allocation12 + $0xd58] sm:$0xff]
    %v1446 = vld [vmem:[#allocation12 + $0xd60] sm:$0xff]
    %v1447 = vld [vmem:[#allocation12 + $0xd68] sm:$0xff]
    %v1448 = vld [vmem:[#allocation12 + $0xd70] sm:$0xff]
    %v1449 = vld [vmem:[#allocation12 + $0xd78] sm:$0xff]
    %v1450 = vld [vmem:[#allocation12 + $0xd80] sm:$0xff]
    %v1451 = vld [vmem:[#allocation12 + $0xd88] sm:$0xff]
    %v1452 = vld [vmem:[#allocation12 + $0xd90] sm:$0xff]
    %v1453 = vld [vmem:[#allocation12 + $0xd98] sm:$0xff]
    %v1454 = vld [vmem:[#allocation12 + $0xda0] sm:$0xff]
    %v1455 = vld [vmem:[#allocation12 + $0xda8] sm:$0xff]
    %v1456 = vld [vmem:[#allocation12 + $0xdb0] sm:$0xff]
    %v1457 = vld [vmem:[#allocation12 + $0xdb8] sm:$0xff]
    %v1458 = vld [vmem:[#allocation12 + $0xdc0] sm:$0xff]
    %v1459 = vld [vmem:[#allocation12 + $0xdc8] sm:$0xff]
    %v1460 = vld [vmem:[#allocation12 + $0xdd0] sm:$0xff]
    %v1461 = vld [vmem:[#allocation12 + $0xdd8] sm:$0xff]
    %v1462 = vld [vmem:[#allocation12 + $0xde0] sm:$0xff]
    %v1463 = vld [vmem:[#allocation12 + $0xde8] sm:$0xff]
    %v1464 = vld [vmem:[#allocation12 + $0xdf0] sm:$0xff]
    %v1465 = vld [vmem:[#allocation12 + $0xdf8] sm:$0xff]
    %v1466 = vld [vmem:[#allocation12 + $0xe00] sm:$0xff]
    %v1467 = vld [vmem:[#allocation12 + $0xe08] sm:$0xff]
    %v1468 = vld [vmem:[#allocation12 + $0xe10] sm:$0xff]
    %v1469 = vld [vmem:[#allocation12 + $0xe18] sm:$0xff]
    %v1470 = vld [vmem:[#allocation12 + $0xe20] sm:$0xff]
    %v1471 = vld [vmem:[#allocation12 + $0xe28] sm:$0xff]
    %v1472 = vld [vmem:[#allocation12 + $0xe30] sm:$0xff]
    %v1473 = vld [vmem:[#allocation12 + $0xe38] sm:$0xff]
    %v1474 = vld [vmem:[#allocation12 + $0xe40] sm:$0xff]
    %v1475 = vld [vmem:[#allocation12 + $0xe48] sm:$0xff]
    %v1476 = vld [vmem:[#allocation12 + $0xe50] sm:$0xff]
    %v1477 = vld [vmem:[#allocation12 + $0xe58] sm:$0xff]
    %v1478 = vld [vmem:[#allocation12 + $0xe60] sm:$0xff]
    %v1479 = vld [vmem:[#allocation12 + $0xe68] sm:$0xff]
    %v1480 = vld [vmem:[#allocation12 + $0xe70] sm:$0xff]
    %v1481 = vld [vmem:[#allocation12 + $0xe78] sm:$0xff]
    %v1482 = vld [vmem:[#allocation12 + $0xe80] sm:$0xff]
    %v1483 = vld [vmem:[#allocation12 + $0xe88] sm:$0xff]
    %v1484 = vld [vmem:[#allocation12 + $0xe90] sm:$0xff]
    %v1485 = vld [vmem:[#allocation12 + $0xe98] sm:$0xff]
    %v1486 = vld [vmem:[#allocation12 + $0xea0] sm:$0xff]
    %v1487 = vld [vmem:[#allocation12 + $0xea8] sm:$0xff]
    %v1488 = vld [vmem:[#allocation12 + $0xeb0] sm:$0xff]
    %v1489 = vld [vmem:[#allocation12 + $0xeb8] sm:$0xff]
    %v1490 = vld [vmem:[#allocation12 + $0xec0] sm:$0xff]
    %v1491 = vld [vmem:[#allocation12 + $0xec8] sm:$0xff]
    %v1492 = vld [vmem:[#allocation12 + $0xed0] sm:$0xff]
    %v1493 = vld [vmem:[#allocation12 + $0xed8] sm:$0xff]
    %v1494 = vld [vmem:[#allocation12 + $0xee0] sm:$0xff]
    %v1495 = vld [vmem:[#allocation12 + $0xee8] sm:$0xff]
    %v1496 = vld [vmem:[#allocation12 + $0xef0] sm:$0xff]
    %v1497 = vld [vmem:[#allocation12 + $0xef8] sm:$0xff]
    %v1498 = vld [vmem:[#allocation12 + $0xf00] sm:$0xff]
    %v1499 = vld [vmem:[#allocation12 + $0xf08] sm:$0xff]
    %v1500 = vld [vmem:[#allocation12 + $0xf10] sm:$0xff]
    %v1501 = vld [vmem:[#allocation12 + $0xf18] sm:$0xff]
    %v1502 = vld [vmem:[#allocation12 + $0xf20] sm:$0xff]
    %v1503 = vld [vmem:[#allocation12 + $0xf28] sm:$0xff]
    %v1504 = vld [vmem:[#allocation12 + $0xf30] sm:$0xff]
    %v1505 = vld [vmem:[#allocation12 + $0xf38] sm:$0xff]
    %v1506 = vld [vmem:[#allocation12 + $0xf40] sm:$0xff]
    %v1507 = vld [vmem:[#allocation12 + $0xf48] sm:$0xff]
    %v1508 = vld [vmem:[#allocation12 + $0xf50] sm:$0xff]
    %v1509 = vld [vmem:[#allocation12 + $0xf58] sm:$0xff]
    %v1510 = vld [vmem:[#allocation12 + $0xf60] sm:$0xff]
    %v1511 = vld [vmem:[#allocation12 + $0xf68] sm:$0xff]
    %v1512 = vld [vmem:[#allocation12 + $0xf70] sm:$0xff]
    %v1513 = vld [vmem:[#allocation12 + $0xf78] sm:$0xff]
    %v1514 = vld [vmem:[#allocation12 + $0xf80] sm:$0xff]
    %v1515 = vld [vmem:[#allocation12 + $0xf88] sm:$0xff]
    %v1516 = vld [vmem:[#allocation12 + $0xf90] sm:$0xff]
    %v1517 = vld [vmem:[#allocation12 + $0xf98] sm:$0xff]
    %v1518 = vld [vmem:[#allocation12 + $0xfa0] sm:$0xff]
    %v1519 = vld [vmem:[#allocation12 + $0xfa8] sm:$0xff]
    %v1520 = vld [vmem:[#allocation12 + $0xfb0] sm:$0xff]
    %v1521 = vld [vmem:[#allocation12 + $0xfb8] sm:$0xff]
    %v1522 = vld [vmem:[#allocation12 + $0xfc0] sm:$0xff]
    %v1523 = vld [vmem:[#allocation12 + $0xfc8] sm:$0xff]
    %v1524 = vld [vmem:[#allocation12 + $0xfd0] sm:$0xff]
    %v1525 = vld [vmem:[#allocation12 + $0xfd8] sm:$0xff]
    %v1526 = vld [vmem:[#allocation12 + $0xfe0] sm:$0xff]
    %v1527 = vld [vmem:[#allocation12 + $0xfe8] sm:$0xff]
    %v1528 = vld [vmem:[#allocation12 + $0xff0] sm:$0xff]
    %v1529 = vld [vmem:[#allocation12 + $0xff8] sm:$0xff]
    %v1530 = vld [vmem:[#allocation12 + $0x1000] sm:$0xff]
    %v1531 = vld [vmem:[#allocation12 + $0x1008] sm:$0xff]
    %v1532 = vld [vmem:[#allocation12 + $0x1010] sm:$0xff]
    %v1533 = vld [vmem:[#allocation12 + $0x1018] sm:$0xff]
    %v1534 = vld [vmem:[#allocation12 + $0x1020] sm:$0xff]
    %v1535 = vld [vmem:[#allocation12 + $0x1028] sm:$0xff]
    %v1536 = vld [vmem:[#allocation12 + $0x1030] sm:$0xff]
    %v1537 = vld [vmem:[#allocation12 + $0x1038] sm:$0xff]
    %v1538 = vld [vmem:[#allocation12 + $0x1040] sm:$0xff]
    %v1539 = vld [vmem:[#allocation12 + $0x1048] sm:$0xff]
    %v1540 = vld [vmem:[#allocation12 + $0x1050] sm:$0xff]
    %v1541 = vld [vmem:[#allocation12 + $0x1058] sm:$0xff]
    %v1542 = vld [vmem:[#allocation12 + $0x1060] sm:$0xff]
    %v1543 = vld [vmem:[#allocation12 + $0x1068] sm:$0xff]
    %v1544 = vld [vmem:[#allocation12 + $0x1070] sm:$0xff]
    %v1545 = vld [vmem:[#allocation12 + $0x1078] sm:$0xff]
    %v1546 = vld [vmem:[#allocation12 + $0x1080] sm:$0xff]
    %v1547 = vld [vmem:[#allocation12 + $0x1088] sm:$0xff]
    %v1548 = vld [vmem:[#allocation12 + $0x1090] sm:$0xff]
    %v1549 = vld [vmem:[#allocation12 + $0x1098] sm:$0xff]
    %v1550 = vld [vmem:[#allocation12 + $0x10a0] sm:$0xff]
    %v1551 = vld [vmem:[#allocation12 + $0x10a8] sm:$0xff]
    %v1552 = vld [vmem:[#allocation12 + $0x10b0] sm:$0xff]
    %v1553 = vld [vmem:[#allocation12 + $0x10b8] sm:$0xff]
    %v1554 = vld [vmem:[#allocation12 + $0x10c0] sm:$0xff]
    %v1555 = vld [vmem:[#allocation12 + $0x10c8] sm:$0xff]
    %v1556 = vld [vmem:[#allocation12 + $0x10d0] sm:$0xff]
    %v1557 = vld [vmem:[#allocation12 + $0x10d8] sm:$0xff]
    %v1558 = vld [vmem:[#allocation12 + $0x10e0] sm:$0xff]
    %v1559 = vld [vmem:[#allocation12 + $0x10e8] sm:$0xff]
    %v1560 = vld [vmem:[#allocation12 + $0x10f0] sm:$0xff]
    %v1561 = vld [vmem:[#allocation12 + $0x10f8] sm:$0xff]
    %v1562 = vld [vmem:[#allocation12 + $0x1100] sm:$0xff]
    %v1563 = vld [vmem:[#allocation12 + $0x1108] sm:$0xff]
    %v1564 = vld [vmem:[#allocation12 + $0x1110] sm:$0xff]
    %v1565 = vld [vmem:[#allocation12 + $0x1118] sm:$0xff]
    %v1566 = vld [vmem:[#allocation12 + $0x1120] sm:$0xff]
    %v1567 = vld [vmem:[#allocation12 + $0x1128] sm:$0xff]
    %v1568 = vld [vmem:[#allocation12 + $0x1130] sm:$0xff]
    %v1569 = vld [vmem:[#allocation12 + $0x1138] sm:$0xff]
    %v1570 = vld [vmem:[#allocation12 + $0x1140] sm:$0xff]
    %v1571 = vld [vmem:[#allocation12 + $0x1148] sm:$0xff]
    %v1572 = vld [vmem:[#allocation12 + $0x1150] sm:$0xff]
    %v1573 = vld [vmem:[#allocation12 + $0x1158] sm:$0xff]
    %v1574 = vld [vmem:[#allocation12 + $0x1160] sm:$0xff]
    %v1575 = vld [vmem:[#allocation12 + $0x1168] sm:$0xff]
    %v1576 = vld [vmem:[#allocation12 + $0x1170] sm:$0xff]
    %v1577 = vld [vmem:[#allocation12 + $0x1178] sm:$0xff]
    %v1578 = vld [vmem:[#allocation12 + $0x1180] sm:$0xff]
    %v1579 = vld [vmem:[#allocation12 + $0x1188] sm:$0xff]
    %v1580 = vld [vmem:[#allocation12 + $0x1190] sm:$0xff]
    %v1581 = vld [vmem:[#allocation12 + $0x1198] sm:$0xff]
    %v1582 = vld [vmem:[#allocation12 + $0x11a0] sm:$0xff]
    %v1583 = vld [vmem:[#allocation12 + $0x11a8] sm:$0xff]
    %v1584 = vld [vmem:[#allocation12 + $0x11b0] sm:$0xff]
    %v1585 = vld [vmem:[#allocation12 + $0x11b8] sm:$0xff]
    %v1586 = vld [vmem:[#allocation12 + $0x11c0] sm:$0xff]
    %v1587 = vld [vmem:[#allocation12 + $0x11c8] sm:$0xff]
    %v1588 = vld [vmem:[#allocation12 + $0x11d0] sm:$0xff]
    %v1589 = vld [vmem:[#allocation12 + $0x11d8] sm:$0xff]
    %v1590 = vld [vmem:[#allocation12 + $0x11e0] sm:$0xff]
    %v1591 = vld [vmem:[#allocation12 + $0x11e8] sm:$0xff]
    %v1592 = vld [vmem:[#allocation12 + $0x11f0] sm:$0xff]
    %v1593 = vld [vmem:[#allocation12 + $0x11f8] sm:$0xff]
    %v1594 = vld [vmem:[#allocation12 + $0x1200] sm:$0xff]
    %v1595 = vld [vmem:[#allocation12 + $0x1208] sm:$0xff]
    %v1596 = vld [vmem:[#allocation12 + $0x1210] sm:$0xff]
    %v1597 = vld [vmem:[#allocation12 + $0x1218] sm:$0xff]
    %v1598 = vld [vmem:[#allocation12 + $0x1220] sm:$0xff]
    %v1599 = vld [vmem:[#allocation12 + $0x1228] sm:$0xff]
    %v1600 = vld [vmem:[#allocation12 + $0x1230] sm:$0xff]
    %v1601 = vld [vmem:[#allocation12 + $0x1238] sm:$0xff]
    %v1602 = vld [vmem:[#allocation12 + $0x1240] sm:$0xff]
    %v1603 = vld [vmem:[#allocation12 + $0x1248] sm:$0xff]
    %v1604 = vld [vmem:[#allocation12 + $0x1250] sm:$0xff]
    %v1605 = vld [vmem:[#allocation12 + $0x1258] sm:$0xff]
    %v1606 = vld [vmem:[#allocation12 + $0x1260] sm:$0xff]
    %v1607 = vld [vmem:[#allocation12 + $0x1268] sm:$0xff]
    %v1608 = vld [vmem:[#allocation12 + $0x1270] sm:$0xff]
    %v1609 = vld [vmem:[#allocation12 + $0x1278] sm:$0xff]
    %v1610 = vld [vmem:[#allocation12 + $0x1280] sm:$0xff]
    %v1611 = vld [vmem:[#allocation12 + $0x1288] sm:$0xff]
    %v1612 = vld [vmem:[#allocation12 + $0x1290] sm:$0xff]
    %v1613 = vld [vmem:[#allocation12 + $0x1298] sm:$0xff]
    %v1614 = vld [vmem:[#allocation12 + $0x12a0] sm:$0xff]
    %v1615 = vld [vmem:[#allocation12 + $0x12a8] sm:$0xff]
    %v1616 = vld [vmem:[#allocation12 + $0x12b0] sm:$0xff]
    %v1617 = vld [vmem:[#allocation12 + $0x12b8] sm:$0xff]
    %v1618 = vld [vmem:[#allocation12 + $0x12c0] sm:$0xff]
    %v1619 = vld [vmem:[#allocation12 + $0x12c8] sm:$0xff]
    %v1620 = vld [vmem:[#allocation12 + $0x12d0] sm:$0xff]
    %v1621 = vld [vmem:[#allocation12 + $0x12d8] sm:$0xff]
    %v1622 = vld [vmem:[#allocation12 + $0x12e0] sm:$0xff]
    %v1623 = vld [vmem:[#allocation12 + $0x12e8] sm:$0xff]
    %v1624 = vld [vmem:[#allocation12 + $0x12f0] sm:$0xff]
    %v1625 = vld [vmem:[#allocation12 + $0x12f8] sm:$0xff]
    %v1626 = vld [vmem:[#allocation12 + $0x1300] sm:$0xff]
    %v1627 = vld [vmem:[#allocation12 + $0x1308] sm:$0xff]
    %v1628 = vld [vmem:[#allocation12 + $0x1310] sm:$0xff]
    %v1629 = vld [vmem:[#allocation12 + $0x1318] sm:$0xff]
    %v1630 = vld [vmem:[#allocation12 + $0x1320] sm:$0xff]
    %v1631 = vld [vmem:[#allocation12 + $0x1328] sm:$0xff]
    %v1632 = vld [vmem:[#allocation12 + $0x1330] sm:$0xff]
    %v1633 = vld [vmem:[#allocation12 + $0x1338] sm:$0xff]
    %v1634 = vld [vmem:[#allocation12 + $0x1340] sm:$0xff]
    %v1635 = vld [vmem:[#allocation12 + $0x1348] sm:$0xff]
    %v1636 = vld [vmem:[#allocation12 + $0x1350] sm:$0xff]
    %v1637 = vld [vmem:[#allocation12 + $0x1358] sm:$0xff]
    %v1638 = vld [vmem:[#allocation12 + $0x1360] sm:$0xff]
    %v1639 = vld [vmem:[#allocation12 + $0x1368] sm:$0xff]
    %v1640 = vld [vmem:[#allocation12 + $0x1370] sm:$0xff]
    %v1641 = vld [vmem:[#allocation12 + $0x1378] sm:$0xff]
    %v1642 = vld [vmem:[#allocation12 + $0x1380] sm:$0xff]
    %v1643 = vld [vmem:[#allocation12 + $0x1388] sm:$0xff]
    %v1644 = vld [vmem:[#allocation12 + $0x1390] sm:$0xff]
    %v1645 = vld [vmem:[#allocation12 + $0x1398] sm:$0xff]
    %v1646 = vld [vmem:[#allocation12 + $0x13a0] sm:$0xff]
    %v1647 = vld [vmem:[#allocation12 + $0x13a8] sm:$0xff]
    %v1648 = vld [vmem:[#allocation12 + $0x13b0] sm:$0xff]
    %v1649 = vld [vmem:[#allocation12 + $0x13b8] sm:$0xff]
    %v1650 = vld [vmem:[#allocation12 + $0x13c0] sm:$0xff]
    %v1651 = vld [vmem:[#allocation12 + $0x13c8] sm:$0xff]
    %v1652 = vld [vmem:[#allocation12 + $0x13d0] sm:$0xff]
    %v1653 = vld [vmem:[#allocation12 + $0x13d8] sm:$0xff]
    %v1654 = vld [vmem:[#allocation12 + $0x13e0] sm:$0xff]
    %v1655 = vld [vmem:[#allocation12 + $0x13e8] sm:$0xff]
    %v1656 = vld [vmem:[#allocation12 + $0x13f0] sm:$0xff]
    %v1657 = vld [vmem:[#allocation12 + $0x13f8] sm:$0xff]
    %v1658 = vld [vmem:[#allocation12 + $0x1400] sm:$0xff]
    %v1659 = vld [vmem:[#allocation12 + $0x1408] sm:$0xff]
    %v1660 = vld [vmem:[#allocation12 + $0x1410] sm:$0xff]
    %v1661 = vld [vmem:[#allocation12 + $0x1418] sm:$0xff]
    %v1662 = vld [vmem:[#allocation12 + $0x1420] sm:$0xff]
    %v1663 = vld [vmem:[#allocation12 + $0x1428] sm:$0xff]
    %v1664 = vld [vmem:[#allocation12 + $0x1430] sm:$0xff]
    %v1665 = vld [vmem:[#allocation12 + $0x1438] sm:$0xff]
    %v1666 = vld [vmem:[#allocation12 + $0x1440] sm:$0xff]
    %v1667 = vld [vmem:[#allocation12 + $0x1448] sm:$0xff]
    %v1668 = vld [vmem:[#allocation12 + $0x1450] sm:$0xff]
    %v1669 = vld [vmem:[#allocation12 + $0x1458] sm:$0xff]
    %v1670 = vld [vmem:[#allocation12 + $0x1460] sm:$0xff]
    %v1671 = vld [vmem:[#allocation12 + $0x1468] sm:$0xff]
    %v1672 = vld [vmem:[#allocation12 + $0x1470] sm:$0xff]
    %v1673 = vld [vmem:[#allocation12 + $0x1478] sm:$0xff]
    %v1674 = vld [vmem:[#allocation12 + $0x1480] sm:$0xff]
    %v1675 = vld [vmem:[#allocation12 + $0x1488] sm:$0xff]
    %v1676 = vld [vmem:[#allocation12 + $0x1490] sm:$0xff]
    %v1677 = vld [vmem:[#allocation12 + $0x1498] sm:$0xff]
    %v1678 = vld [vmem:[#allocation12 + $0x14a0] sm:$0xff]
    %v1679 = vld [vmem:[#allocation12 + $0x14a8] sm:$0xff]
    %v1680 = vld [vmem:[#allocation12 + $0x14b0] sm:$0xff]
    %v1681 = vld [vmem:[#allocation12 + $0x14b8] sm:$0xff]
    %v1682 = vld [vmem:[#allocation12 + $0x14c0] sm:$0xff]
    %v1683 = vld [vmem:[#allocation12 + $0x14c8] sm:$0xff]
    %v1684 = vld [vmem:[#allocation12 + $0x14d0] sm:$0xff]
    %v1685 = vld [vmem:[#allocation12 + $0x14d8] sm:$0xff]
    %v1686 = vld [vmem:[#allocation12 + $0x14e0] sm:$0xff]
    %v1687 = vld [vmem:[#allocation12 + $0x14e8] sm:$0xff]
    %v1688 = vld [vmem:[#allocation12 + $0x14f0] sm:$0xff]
    %v1689 = vld [vmem:[#allocation12 + $0x14f8] sm:$0xff]
    %v1690 = vld [vmem:[#allocation12 + $0x1500] sm:$0xff]
    %v1691 = vld [vmem:[#allocation12 + $0x1508] sm:$0xff]
    %v1692 = vld [vmem:[#allocation12 + $0x1510] sm:$0xff]
    %v1693 = vld [vmem:[#allocation12 + $0x1518] sm:$0xff]
    %v1694 = vld [vmem:[#allocation12 + $0x1520] sm:$0xff]
    %v1695 = vld [vmem:[#allocation12 + $0x1528] sm:$0xff]
    %v1696 = vld [vmem:[#allocation12 + $0x1530] sm:$0xff]
    %v1697 = vld [vmem:[#allocation12 + $0x1538] sm:$0xff]
    %v1698 = vld [vmem:[#allocation12 + $0x1540] sm:$0xff]
    %v1699 = vld [vmem:[#allocation12 + $0x1548] sm:$0xff]
    %v1700 = vld [vmem:[#allocation12 + $0x1550] sm:$0xff]
    %v1701 = vld [vmem:[#allocation12 + $0x1558] sm:$0xff]
    %v1702 = vld [vmem:[#allocation12 + $0x1560] sm:$0xff]
    %v1703 = vld [vmem:[#allocation12 + $0x1568] sm:$0xff]
    %v1704 = vld [vmem:[#allocation12 + $0x1570] sm:$0xff]
    %v1705 = vld [vmem:[#allocation12 + $0x1578] sm:$0xff]
    %v1706 = vld [vmem:[#allocation12 + $0x1580] sm:$0xff]
    %v1707 = vld [vmem:[#allocation12 + $0x1588] sm:$0xff]
    %v1708 = vld [vmem:[#allocation12 + $0x1590] sm:$0xff]
    %v1709 = vld [vmem:[#allocation12 + $0x1598] sm:$0xff]
    %v1710 = vld [vmem:[#allocation12 + $0x15a0] sm:$0xff]
    %v1711 = vld [vmem:[#allocation12 + $0x15a8] sm:$0xff]
    %v1712 = vld [vmem:[#allocation12 + $0x15b0] sm:$0xff]
    %v1713 = vld [vmem:[#allocation12 + $0x15b8] sm:$0xff]
    %v1714 = vld [vmem:[#allocation12 + $0x15c0] sm:$0xff]
    %v1715 = vld [vmem:[#allocation12 + $0x15c8] sm:$0xff]
    %v1716 = vld [vmem:[#allocation12 + $0x15d0] sm:$0xff]
    %v1717 = vld [vmem:[#allocation12 + $0x15d8] sm:$0xff]
    %v1718 = vld [vmem:[#allocation12 + $0x15e0] sm:$0xff]
    %v1719 = vld [vmem:[#allocation12 + $0x15e8] sm:$0xff]
    %v1720 = vld [vmem:[#allocation12 + $0x15f0] sm:$0xff]
    %v1721 = vld [vmem:[#allocation12 + $0x15f8] sm:$0xff]
    %v1722 = vld [vmem:[#allocation12 + $0x1600] sm:$0xff]
    %v1723 = vld [vmem:[#allocation12 + $0x1608] sm:$0xff]
    %v1724 = vld [vmem:[#allocation12 + $0x1610] sm:$0xff]
    %v1725 = vld [vmem:[#allocation12 + $0x1618] sm:$0xff]
    %v1726 = vld [vmem:[#allocation12 + $0x1620] sm:$0xff]
    %v1727 = vld [vmem:[#allocation12 + $0x1628] sm:$0xff]
    %v1728 = vld [vmem:[#allocation12 + $0x1630] sm:$0xff]
    %v1729 = vld [vmem:[#allocation12 + $0x1638] sm:$0xff]
    %v1730 = vld [vmem:[#allocation12 + $0x1640] sm:$0xff]
    %v1731 = vld [vmem:[#allocation12 + $0x1648] sm:$0xff]
    %v1732 = vld [vmem:[#allocation12 + $0x1650] sm:$0xff]
    %v1733 = vld [vmem:[#allocation12 + $0x1658] sm:$0xff]
    %v1734 = vld [vmem:[#allocation12 + $0x1660] sm:$0xff]
    %v1735 = vld [vmem:[#allocation12 + $0x1668] sm:$0xff]
    %v1736 = vld [vmem:[#allocation12 + $0x1670] sm:$0xff]
    %v1737 = vld [vmem:[#allocation12 + $0x1678] sm:$0xff]
    %v1738 = vld [vmem:[#allocation12 + $0x1680] sm:$0xff]
    %v1739 = vld [vmem:[#allocation12 + $0x1688] sm:$0xff]
    %v1740 = vld [vmem:[#allocation12 + $0x1690] sm:$0xff]
    %v1741 = vld [vmem:[#allocation12 + $0x1698] sm:$0xff]
    %v1742 = vld [vmem:[#allocation12 + $0x16a0] sm:$0xff]
    %v1743 = vld [vmem:[#allocation12 + $0x16a8] sm:$0xff]
    %v1744 = vld [vmem:[#allocation12 + $0x16b0] sm:$0xff]
    %v1745 = vld [vmem:[#allocation12 + $0x16b8] sm:$0xff]
    %v1746 = vld [vmem:[#allocation12 + $0x16c0] sm:$0xff]
    %v1747 = vld [vmem:[#allocation12 + $0x16c8] sm:$0xff]
    %v1748 = vld [vmem:[#allocation12 + $0x16d0] sm:$0xff]
    %v1749 = vld [vmem:[#allocation12 + $0x16d8] sm:$0xff]
    %v1750 = vld [vmem:[#allocation12 + $0x16e0] sm:$0xff]
    %v1751 = vld [vmem:[#allocation12 + $0x16e8] sm:$0xff]
    %v1752 = vld [vmem:[#allocation12 + $0x16f0] sm:$0xff]
    %v1753 = vld [vmem:[#allocation12 + $0x16f8] sm:$0xff]
    %v1754 = vld [vmem:[#allocation12 + $0x1700] sm:$0xff]
    %v1755 = vld [vmem:[#allocation12 + $0x1708] sm:$0xff]
    %v1756 = vld [vmem:[#allocation12 + $0x1710] sm:$0xff]
    %v1757 = vld [vmem:[#allocation12 + $0x1718] sm:$0xff]
    %v1758 = vld [vmem:[#allocation12 + $0x1720] sm:$0xff]
    %v1759 = vld [vmem:[#allocation12 + $0x1728] sm:$0xff]
    %v1760 = vld [vmem:[#allocation12 + $0x1730] sm:$0xff]
    %v1761 = vld [vmem:[#allocation12 + $0x1738] sm:$0xff]
    %v1762 = vld [vmem:[#allocation12 + $0x1740] sm:$0xff]
    %v1763 = vld [vmem:[#allocation12 + $0x1748] sm:$0xff]
    %v1764 = vld [vmem:[#allocation12 + $0x1750] sm:$0xff]
    %v1765 = vld [vmem:[#allocation12 + $0x1758] sm:$0xff]
    %v1766 = vld [vmem:[#allocation12 + $0x1760] sm:$0xff]
    %v1767 = vld [vmem:[#allocation12 + $0x1768] sm:$0xff]
    %v1768 = vld [vmem:[#allocation12 + $0x1770] sm:$0xff]
    %v1769 = vld [vmem:[#allocation12 + $0x1778] sm:$0xff]
    %v1770 = vld [vmem:[#allocation12 + $0x1780] sm:$0xff]
    %v1771 = vld [vmem:[#allocation12 + $0x1788] sm:$0xff]
    %v1772 = vld [vmem:[#allocation12 + $0x1790] sm:$0xff]
    %v1773 = vld [vmem:[#allocation12 + $0x1798] sm:$0xff]
    %v1774 = vld [vmem:[#allocation12 + $0x17a0] sm:$0xff]
    %v1775 = vld [vmem:[#allocation12 + $0x17a8] sm:$0xff]
    %v1776 = vld [vmem:[#allocation12 + $0x17b0] sm:$0xff]
    %v1777 = vld [vmem:[#allocation12 + $0x17b8] sm:$0xff]
    %v1778 = vld [vmem:[#allocation12 + $0x17c0] sm:$0xff]
    %v1779 = vld [vmem:[#allocation12 + $0x17c8] sm:$0xff]
    %v1780 = vld [vmem:[#allocation12 + $0x17d0] sm:$0xff]
    %v1781 = vld [vmem:[#allocation12 + $0x17d8] sm:$0xff]
    %v1782 = vld [vmem:[#allocation12 + $0x17e0] sm:$0xff]
    %v1783 = vld [vmem:[#allocation12 + $0x17e8] sm:$0xff]
    %v1784 = vld [vmem:[#allocation12 + $0x17f0] sm:$0xff]
    %v1785 = vld [vmem:[#allocation12 + $0x17f8] sm:$0xff]
    %v1786 = vld [vmem:[#allocation12 + $0x1800] sm:$0xff]
    %v1787 = vld [vmem:[#allocation12 + $0x1808] sm:$0xff]
    %v1788 = vld [vmem:[#allocation12 + $0x1810] sm:$0xff]
    %v1789 = vld [vmem:[#allocation12 + $0x1818] sm:$0xff]
    %v1790 = vld [vmem:[#allocation12 + $0x1820] sm:$0xff]
    %v1791 = vld [vmem:[#allocation12 + $0x1828] sm:$0xff]
    %v1792 = vld [vmem:[#allocation12 + $0x1830] sm:$0xff]
    %v1793 = vld [vmem:[#allocation12 + $0x1838] sm:$0xff]
    %v1794 = vld [vmem:[#allocation12 + $0x1840] sm:$0xff]
    %v1795 = vld [vmem:[#allocation12 + $0x1848] sm:$0xff]
    %v1796 = vld [vmem:[#allocation12 + $0x1850] sm:$0xff]
    %v1797 = vld [vmem:[#allocation12 + $0x1858] sm:$0xff]
    %v1798 = vld [vmem:[#allocation12 + $0x1860] sm:$0xff]
    %v1799 = vld [vmem:[#allocation12 + $0x1868] sm:$0xff]
    %v1800 = vld [vmem:[#allocation12 + $0x1870] sm:$0xff]
    %v1801 = vld [vmem:[#allocation12 + $0x1878] sm:$0xff]
    %v1802 = vld [vmem:[#allocation12 + $0x1880] sm:$0xff]
    %v1803 = vld [vmem:[#allocation12 + $0x1888] sm:$0xff]
    %v1804 = vld [vmem:[#allocation12 + $0x1890] sm:$0xff]
    %v1805 = vld [vmem:[#allocation12 + $0x1898] sm:$0xff]
    %v1806 = vld [vmem:[#allocation12 + $0x18a0] sm:$0xff]
    %v1807 = vld [vmem:[#allocation12 + $0x18a8] sm:$0xff]
    %v1808 = vld [vmem:[#allocation12 + $0x18b0] sm:$0xff]
    %v1809 = vld [vmem:[#allocation12 + $0x18b8] sm:$0xff]
    %v1810 = vld [vmem:[#allocation12 + $0x18c0] sm:$0xff]
    %v1811 = vld [vmem:[#allocation12 + $0x18c8] sm:$0xff]
    %v1812 = vld [vmem:[#allocation12 + $0x18d0] sm:$0xff]
    %v1813 = vld [vmem:[#allocation12 + $0x18d8] sm:$0xff]
    %v1814 = vld [vmem:[#allocation12 + $0x18e0] sm:$0xff]
    %v1815 = vld [vmem:[#allocation12 + $0x18e8] sm:$0xff]
    %v1816 = vld [vmem:[#allocation12 + $0x18f0] sm:$0xff]
    %v1817 = vld [vmem:[#allocation12 + $0x18f8] sm:$0xff]
    %v1818 = vld [vmem:[#allocation12 + $0x1900] sm:$0xff]
    %v1819 = vld [vmem:[#allocation12 + $0x1908] sm:$0xff]
    %v1820 = vld [vmem:[#allocation12 + $0x1910] sm:$0xff]
    %v1821 = vld [vmem:[#allocation12 + $0x1918] sm:$0xff]
    %v1822 = vld [vmem:[#allocation12 + $0x1920] sm:$0xff]
    %v1823 = vld [vmem:[#allocation12 + $0x1928] sm:$0xff]
    %v1824 = vld [vmem:[#allocation12 + $0x1930] sm:$0xff]
    %v1825 = vld [vmem:[#allocation12 + $0x1938] sm:$0xff]
    %v1826 = vld [vmem:[#allocation12 + $0x1940] sm:$0xff]
    %v1827 = vld [vmem:[#allocation12 + $0x1948] sm:$0xff]
    %v1828 = vld [vmem:[#allocation12 + $0x1950] sm:$0xff]
    %v1829 = vld [vmem:[#allocation12 + $0x1958] sm:$0xff]
    %v1830 = vld [vmem:[#allocation12 + $0x1960] sm:$0xff]
    %v1831 = vld [vmem:[#allocation12 + $0x1968] sm:$0xff]
    %v1832 = vld [vmem:[#allocation12 + $0x1970] sm:$0xff]
    %v1833 = vld [vmem:[#allocation12 + $0x1978] sm:$0xff]
    %v1834 = vld [vmem:[#allocation12 + $0x1980] sm:$0xff]
    %v1835 = vld [vmem:[#allocation12 + $0x1988] sm:$0xff]
    %v1836 = vld [vmem:[#allocation12 + $0x1990] sm:$0xff]
    %v1837 = vld [vmem:[#allocation12 + $0x1998] sm:$0xff]
    %v1838 = vld [vmem:[#allocation12 + $0x19a0] sm:$0xff]
    %v1839 = vld [vmem:[#allocation12 + $0x19a8] sm:$0xff]
    %v1840 = vld [vmem:[#allocation12 + $0x19b0] sm:$0xff]
    %v1841 = vld [vmem:[#allocation12 + $0x19b8] sm:$0xff]
    %v1842 = vld [vmem:[#allocation12 + $0x19c0] sm:$0xff]
    %v1843 = vld [vmem:[#allocation12 + $0x19c8] sm:$0xff]
    %v1844 = vld [vmem:[#allocation12 + $0x19d0] sm:$0xff]
    %v1845 = vld [vmem:[#allocation12 + $0x19d8] sm:$0xff]
    %v1846 = vld [vmem:[#allocation12 + $0x19e0] sm:$0xff]
    %v1847 = vld [vmem:[#allocation12 + $0x19e8] sm:$0xff]
    %v1848 = vld [vmem:[#allocation12 + $0x19f0] sm:$0xff]
    %v1849 = vld [vmem:[#allocation12 + $0x19f8] sm:$0xff]
    %v1850 = vld [vmem:[#allocation12 + $0x1a00] sm:$0xff]
    %v1851 = vld [vmem:[#allocation12 + $0x1a08] sm:$0xff]
    %v1852 = vld [vmem:[#allocation12 + $0x1a10] sm:$0xff]
    %v1853 = vld [vmem:[#allocation12 + $0x1a18] sm:$0xff]
    %v1854 = vld [vmem:[#allocation12 + $0x1a20] sm:$0xff]
    %v1855 = vld [vmem:[#allocation12 + $0x1a28] sm:$0xff]
    %v1856 = vld [vmem:[#allocation12 + $0x1a30] sm:$0xff]
    %v1857 = vld [vmem:[#allocation12 + $0x1a38] sm:$0xff]
    %v1858 = vld [vmem:[#allocation12 + $0x1a40] sm:$0xff]
    %v1859 = vld [vmem:[#allocation12 + $0x1a48] sm:$0xff]
    %v1860 = vld [vmem:[#allocation12 + $0x1a50] sm:$0xff]
    %v1861 = vld [vmem:[#allocation12 + $0x1a58] sm:$0xff]
    %v1862 = vld [vmem:[#allocation12 + $0x1a60] sm:$0xff]
    %v1863 = vld [vmem:[#allocation12 + $0x1a68] sm:$0xff]
    %v1864 = vld [vmem:[#allocation12 + $0x1a70] sm:$0xff]
    %v1865 = vld [vmem:[#allocation12 + $0x1a78] sm:$0xff]
    %v1866 = vld [vmem:[#allocation12 + $0x1a80] sm:$0xff]
    %v1867 = vld [vmem:[#allocation12 + $0x1a88] sm:$0xff]
    %v1868 = vld [vmem:[#allocation12 + $0x1a90] sm:$0xff]
    %v1869 = vld [vmem:[#allocation12 + $0x1a98] sm:$0xff]
    %v1870 = vld [vmem:[#allocation12 + $0x1aa0] sm:$0xff]
    %v1871 = vld [vmem:[#allocation12 + $0x1aa8] sm:$0xff]
    %v1872 = vld [vmem:[#allocation12 + $0x1ab0] sm:$0xff]
    %v1873 = vld [vmem:[#allocation12 + $0x1ab8] sm:$0xff]
    %v1874 = vld [vmem:[#allocation12 + $0x1ac0] sm:$0xff]
    %v1875 = vld [vmem:[#allocation12 + $0x1ac8] sm:$0xff]
    %v1876 = vld [vmem:[#allocation12 + $0x1ad0] sm:$0xff]
    %v1877 = vld [vmem:[#allocation12 + $0x1ad8] sm:$0xff]
    %v1878 = vld [vmem:[#allocation12 + $0x1ae0] sm:$0xff]
    %v1879 = vld [vmem:[#allocation12 + $0x1ae8] sm:$0xff]
    %v1880 = vld [vmem:[#allocation12 + $0x1af0] sm:$0xff]
    %v1881 = vld [vmem:[#allocation12 + $0x1af8] sm:$0xff]
    %v1882 = vld [vmem:[#allocation12 + $0x1b00] sm:$0xff]
    %v1883 = vld [vmem:[#allocation12 + $0x1b08] sm:$0xff]
    %v1884 = vld [vmem:[#allocation12 + $0x1b10] sm:$0xff]
    %v1885 = vld [vmem:[#allocation12 + $0x1b18] sm:$0xff]
    %v1886 = vld [vmem:[#allocation12 + $0x1b20] sm:$0xff]
    %v1887 = vld [vmem:[#allocation12 + $0x1b28] sm:$0xff]
    %v1888 = vld [vmem:[#allocation12 + $0x1b30] sm:$0xff]
    %v1889 = vld [vmem:[#allocation12 + $0x1b38] sm:$0xff]
    %v1890 = vld [vmem:[#allocation12 + $0x1b40] sm:$0xff]
    %v1891 = vld [vmem:[#allocation12 + $0x1b48] sm:$0xff]
    %v1892 = vld [vmem:[#allocation12 + $0x1b50] sm:$0xff]
    %v1893 = vld [vmem:[#allocation12 + $0x1b58] sm:$0xff]
    %v1894 = vld [vmem:[#allocation12 + $0x1b60] sm:$0xff]
    %v1895 = vld [vmem:[#allocation12 + $0x1b68] sm:$0xff]
    %v1896 = vld [vmem:[#allocation12 + $0x1b70] sm:$0xff]
    %v1897 = vld [vmem:[#allocation12 + $0x1b78] sm:$0xff]
    %v1898 = vld [vmem:[#allocation12 + $0x1b80] sm:$0xff]
    %v1899 = vld [vmem:[#allocation12 + $0x1b88] sm:$0xff]
    %v1900 = vld [vmem:[#allocation12 + $0x1b90] sm:$0xff]
    %v1901 = vld [vmem:[#allocation12 + $0x1b98] sm:$0xff]
    %v1902 = vld [vmem:[#allocation12 + $0x1ba0] sm:$0xff]
    %v1903 = vld [vmem:[#allocation12 + $0x1ba8] sm:$0xff]
    %v1904 = vld [vmem:[#allocation12 + $0x1bb0] sm:$0xff]
    %v1905 = vld [vmem:[#allocation12 + $0x1bb8] sm:$0xff]
    %v1906 = vld [vmem:[#allocation12 + $0x1bc0] sm:$0xff]
    %v1907 = vld [vmem:[#allocation12 + $0x1bc8] sm:$0xff]
    %v1908 = vld [vmem:[#allocation12 + $0x1bd0] sm:$0xff]
    %v1909 = vld [vmem:[#allocation12 + $0x1bd8] sm:$0xff]
    %v1910 = vld [vmem:[#allocation12 + $0x1be0] sm:$0xff]
    %v1911 = vld [vmem:[#allocation12 + $0x1be8] sm:$0xff]
    %v1912 = vld [vmem:[#allocation12 + $0x1bf0] sm:$0xff]
    %v1913 = vld [vmem:[#allocation12 + $0x1bf8] sm:$0xff]
    %v1914 = vld [vmem:[#allocation12 + $0x1c00] sm:$0xff]
    %v1915 = vld [vmem:[#allocation12 + $0x1c08] sm:$0xff]
    %v1916 = vld [vmem:[#allocation12 + $0x1c10] sm:$0xff]
    %v1917 = vld [vmem:[#allocation12 + $0x1c18] sm:$0xff]
    %v1918 = vld [vmem:[#allocation12 + $0x1c20] sm:$0xff]
    %v1919 = vld [vmem:[#allocation12 + $0x1c28] sm:$0xff]
    %v1920 = vld [vmem:[#allocation12 + $0x1c30] sm:$0xff]
    %v1921 = vld [vmem:[#allocation12 + $0x1c38] sm:$0xff]
    %v1922 = vld [vmem:[#allocation12 + $0x1c40] sm:$0xff]
    %v1923 = vld [vmem:[#allocation12 + $0x1c48] sm:$0xff]
    %v1924 = vld [vmem:[#allocation12 + $0x1c50] sm:$0xff]
    %v1925 = vld [vmem:[#allocation12 + $0x1c58] sm:$0xff]
    %v1926 = vld [vmem:[#allocation12 + $0x1c60] sm:$0xff]
    %v1927 = vld [vmem:[#allocation12 + $0x1c68] sm:$0xff]
    %v1928 = vld [vmem:[#allocation12 + $0x1c70] sm:$0xff]
    %v1929 = vld [vmem:[#allocation12 + $0x1c78] sm:$0xff]
    %v1930 = vld [vmem:[#allocation12 + $0x1c80] sm:$0xff]
    %v1931 = vld [vmem:[#allocation12 + $0x1c88] sm:$0xff]
    %v1932 = vld [vmem:[#allocation12 + $0x1c90] sm:$0xff]
    %v1933 = vld [vmem:[#allocation12 + $0x1c98] sm:$0xff]
    %v1934 = vld [vmem:[#allocation12 + $0x1ca0] sm:$0xff]
    %v1935 = vld [vmem:[#allocation12 + $0x1ca8] sm:$0xff]
    %v1936 = vld [vmem:[#allocation12 + $0x1cb0] sm:$0xff]
    %v1937 = vld [vmem:[#allocation12 + $0x1cb8] sm:$0xff]
    %v1938 = vld [vmem:[#allocation12 + $0x1cc0] sm:$0xff]
    %v1939 = vld [vmem:[#allocation12 + $0x1cc8] sm:$0xff]
    %v1940 = vld [vmem:[#allocation12 + $0x1cd0] sm:$0xff]
    %v1941 = vld [vmem:[#allocation12 + $0x1cd8] sm:$0xff]
    %v1942 = vld [vmem:[#allocation12 + $0x1ce0] sm:$0xff]
    %v1943 = vld [vmem:[#allocation12 + $0x1ce8] sm:$0xff]
    %v1944 = vld [vmem:[#allocation12 + $0x1cf0] sm:$0xff]
    %v1945 = vld [vmem:[#allocation12 + $0x1cf8] sm:$0xff]
    %v1946 = vld [vmem:[#allocation12 + $0x1d00] sm:$0xff]
    %v1947 = vld [vmem:[#allocation12 + $0x1d08] sm:$0xff]
    %v1948 = vld [vmem:[#allocation12 + $0x1d10] sm:$0xff]
    %v1949 = vld [vmem:[#allocation12 + $0x1d18] sm:$0xff]
    %v1950 = vld [vmem:[#allocation12 + $0x1d20] sm:$0xff]
    %v1951 = vld [vmem:[#allocation12 + $0x1d28] sm:$0xff]
    %v1952 = vld [vmem:[#allocation12 + $0x1d30] sm:$0xff]
    %v1953 = vld [vmem:[#allocation12 + $0x1d38] sm:$0xff]
    %v1954 = vld [vmem:[#allocation12 + $0x1d40] sm:$0xff]
    %v1955 = vld [vmem:[#allocation12 + $0x1d48] sm:$0xff]
    %v1956 = vld [vmem:[#allocation12 + $0x1d50] sm:$0xff]
    %v1957 = vld [vmem:[#allocation12 + $0x1d58] sm:$0xff]
    %v1958 = vld [vmem:[#allocation12 + $0x1d60] sm:$0xff]
    %v1959 = vld [vmem:[#allocation12 + $0x1d68] sm:$0xff]
    %v1960 = vld [vmem:[#allocation12 + $0x1d70] sm:$0xff]
    %v1961 = vld [vmem:[#allocation12 + $0x1d78] sm:$0xff]
    %v1962 = vld [vmem:[#allocation12 + $0x1d80] sm:$0xff]
    %v1963 = vld [vmem:[#allocation12 + $0x1d88] sm:$0xff]
    %v1964 = vld [vmem:[#allocation12 + $0x1d90] sm:$0xff]
    %v1965 = vld [vmem:[#allocation12 + $0x1d98] sm:$0xff]
    %v1966 = vld [vmem:[#allocation12 + $0x1da0] sm:$0xff]
    %v1967 = vld [vmem:[#allocation12 + $0x1da8] sm:$0xff]
    %v1968 = vld [vmem:[#allocation12 + $0x1db0] sm:$0xff]
    %v1969 = vld [vmem:[#allocation12 + $0x1db8] sm:$0xff]
    %v1970 = vld [vmem:[#allocation12 + $0x1dc0] sm:$0xff]
    %v1971 = vld [vmem:[#allocation12 + $0x1dc8] sm:$0xff]
    %v1972 = vld [vmem:[#allocation12 + $0x1dd0] sm:$0xff]
    %v1973 = vld [vmem:[#allocation12 + $0x1dd8] sm:$0xff]
    %v1974 = vld [vmem:[#allocation12 + $0x1de0] sm:$0xff]
    %v1975 = vld [vmem:[#allocation12 + $0x1de8] sm:$0xff]
    %v1976 = vld [vmem:[#allocation12 + $0x1df0] sm:$0xff]
    %v1977 = vld [vmem:[#allocation12 + $0x1df8] sm:$0xff]
    %v1978 = vld [vmem:[#allocation12 + $0x1e00] sm:$0xff]
    %v1979 = vld [vmem:[#allocation12 + $0x1e08] sm:$0xff]
    %v1980 = vld [vmem:[#allocation12 + $0x1e10] sm:$0xff]
    %v1981 = vld [vmem:[#allocation12 + $0x1e18] sm:$0xff]
    %v1982 = vld [vmem:[#allocation12 + $0x1e20] sm:$0xff]
    %v1983 = vld [vmem:[#allocation12 + $0x1e28] sm:$0xff]
    %v1984 = vld [vmem:[#allocation12 + $0x1e30] sm:$0xff]
    %v1985 = vld [vmem:[#allocation12 + $0x1e38] sm:$0xff]
    %v1986 = vld [vmem:[#allocation12 + $0x1e40] sm:$0xff]
    %v1987 = vld [vmem:[#allocation12 + $0x1e48] sm:$0xff]
    %v1988 = vld [vmem:[#allocation12 + $0x1e50] sm:$0xff]
    %v1989 = vld [vmem:[#allocation12 + $0x1e58] sm:$0xff]
    %v1990 = vld [vmem:[#allocation12 + $0x1e60] sm:$0xff]
    %v1991 = vld [vmem:[#allocation12 + $0x1e68] sm:$0xff]
    %v1992 = vld [vmem:[#allocation12 + $0x1e70] sm:$0xff]
    %v1993 = vld [vmem:[#allocation12 + $0x1e78] sm:$0xff]
    %v1994 = vld [vmem:[#allocation12 + $0x1e80] sm:$0xff]
    %v1995 = vld [vmem:[#allocation12 + $0x1e88] sm:$0xff]
    %v1996 = vld [vmem:[#allocation12 + $0x1e90] sm:$0xff]
    %v1997 = vld [vmem:[#allocation12 + $0x1e98] sm:$0xff]
    %v1998 = vld [vmem:[#allocation12 + $0x1ea0] sm:$0xff]
    %v1999 = vld [vmem:[#allocation12 + $0x1ea8] sm:$0xff]
    %v2000 = vld [vmem:[#allocation12 + $0x1eb0] sm:$0xff]
    %v2001 = vld [vmem:[#allocation12 + $0x1eb8] sm:$0xff]
    %v2002 = vld [vmem:[#allocation12 + $0x1ec0] sm:$0xff]
    %v2003 = vld [vmem:[#allocation12 + $0x1ec8] sm:$0xff]
    %v2004 = vld [vmem:[#allocation12 + $0x1ed0] sm:$0xff]
    %v2005 = vld [vmem:[#allocation12 + $0x1ed8] sm:$0xff]
    %v2006 = vld [vmem:[#allocation12 + $0x1ee0] sm:$0xff]
    %v2007 = vld [vmem:[#allocation12 + $0x1ee8] sm:$0xff]
    %v2008 = vld [vmem:[#allocation12 + $0x1ef0] sm:$0xff]
    %v2009 = vld [vmem:[#allocation12 + $0x1ef8] sm:$0xff]
    %v2010 = vld [vmem:[#allocation12 + $0x1f00] sm:$0xff]
    %v2011 = vld [vmem:[#allocation12 + $0x1f08] sm:$0xff]
    %v2012 = vld [vmem:[#allocation12 + $0x1f10] sm:$0xff]
    %v2013 = vld [vmem:[#allocation12 + $0x1f18] sm:$0xff]
    %v2014 = vld [vmem:[#allocation12 + $0x1f20] sm:$0xff]
    %v2015 = vld [vmem:[#allocation12 + $0x1f28] sm:$0xff]
    %v2016 = vld [vmem:[#allocation12 + $0x1f30] sm:$0xff]
    %v2017 = vld [vmem:[#allocation12 + $0x1f38] sm:$0xff]
    %v2018 = vld [vmem:[#allocation12 + $0x1f40] sm:$0xff]
    %v2019 = vld [vmem:[#allocation12 + $0x1f48] sm:$0xff]
    %v2020 = vld [vmem:[#allocation12 + $0x1f50] sm:$0xff]
    %v2021 = vld [vmem:[#allocation12 + $0x1f58] sm:$0xff]
    %v2022 = vld [vmem:[#allocation12 + $0x1f60] sm:$0xff]
    %v2023 = vld [vmem:[#allocation12 + $0x1f68] sm:$0xff]
    %v2024 = vld [vmem:[#allocation12 + $0x1f70] sm:$0xff]
    %v2025 = vld [vmem:[#allocation12 + $0x1f78] sm:$0xff]
    %v2026 = vld [vmem:[#allocation12 + $0x1f80] sm:$0xff]
    %v2027 = vld [vmem:[#allocation12 + $0x1f88] sm:$0xff]
    %v2028 = vld [vmem:[#allocation12 + $0x1f90] sm:$0xff]
    %v2029 = vld [vmem:[#allocation12 + $0x1f98] sm:$0xff]
    %v2030 = vld [vmem:[#allocation12 + $0x1fa0] sm:$0xff]
    %v2031 = vld [vmem:[#allocation12 + $0x1fa8] sm:$0xff]
    %v2032 = vld [vmem:[#allocation12 + $0x1fb0] sm:$0xff]
    %v2033 = vld [vmem:[#allocation12 + $0x1fb8] sm:$0xff]
    %v2034 = vld [vmem:[#allocation12 + $0x1fc0] sm:$0xff]
    %v2035 = vld [vmem:[#allocation12 + $0x1fc8] sm:$0xff]
    %v2036 = vld [vmem:[#allocation12 + $0x1fd0] sm:$0xff]
    %v2037 = vld [vmem:[#allocation12 + $0x1fd8] sm:$0xff]
    %v2038 = vld [vmem:[#allocation12 + $0x1fe0] sm:$0xff]
    %v2039 = vld [vmem:[#allocation12 + $0x1fe8] sm:$0xff]
    %v2040 = vld [vmem:[#allocation12 + $0x1ff0] sm:$0xff]
    %v2041 = vld [vmem:[#allocation12 + $0x1ff8] sm:$0xff]
    %v2042 = vld [vmem:[#allocation13] sm:$0xff]
    %v2044 = vperm.slane %v2042, 0
    %v2045 = vperm.slane %v2042, 1
    %v2046 = vperm.slane %v2042, 2
    %v2047 = vperm.slane %v2042, 3
    %v2048 = vperm.slane %v2042, 4
    %v2049 = vperm.slane %v2042, 5
    %v2050 = vperm.slane %v2042, 6
    %v2051 = vperm.slane %v2042, 7
    %2060 = vmatpush.msra.mxu0 %v1138
    %2061 = vmatpush.msra.mxu0 %v1130
    %2062 = vmatpush.msra.mxu0 %v1122
    %2063 = vmatpush.msra.mxu0 %v1114
    %2064 = vmatpush.msra.mxu0 %v1106
    %2065 = vmatpush.msra.mxu0 %v1098
    %2066 = vmatpush.msra.mxu0 %v1090
    %2067 = vmatpush.msra.mxu0 %v1082
    %2068 = vmatpush.msra.mxu0 %v1074
    %2069 = vmatpush.msra.mxu0 %v1066
    %2070 = vmatpush.msra.mxu0 %v1058
    %2071 = vmatpush.msra.mxu0 %v1050
    %2072 = vmatpush.msra.mxu0 %v1042
    %2073 = vmatpush.msra.mxu0 %v1034
    %2074 = vmatpush.msra.mxu0 %v1026
    %2075 = vmatpush.msra.mxu0 %v1018
    %2076 = vmatmul.f32.gmra.mxu0 %v1010
    %v2077 = vpop.f32.mrf.mxu0
    %v2078 = vadd.f32 %v2044, %v2077
    %2079 = vdwg.mxu0
    %2080 = vmatpush.msra.mxu0 %v1266
    %2081 = vmatpush.msra.mxu0 %v1258
    %2082 = vmatpush.msra.mxu0 %v1250
    %2083 = vmatpush.msra.mxu0 %v1242
    %2084 = vmatpush.msra.mxu0 %v1234
    %2085 = vmatpush.msra.mxu0 %v1226
    %2086 = vmatpush.msra.mxu0 %v1218
    %2087 = vmatpush.msra.mxu0 %v1210
    %2088 = vmatpush.msra.mxu0 %v1202
    %2089 = vmatpush.msra.mxu0 %v1194
    %2090 = vmatpush.msra.mxu0 %v1186
    %2091 = vmatpush.msra.mxu0 %v1178
    %2092 = vmatpush.msra.mxu0 %v1170
    %2093 = vmatpush.msra.mxu0 %v1162
    %2094 = vmatpush.msra.mxu0 %v1154
    %2095 = vmatpush.msra.mxu0 %v1146
    %2096 = vmatmul.f32.gmra.mxu0 %v1011
    %v2097 = vpop.f32.mrf.mxu0
    %v2098 = vadd.f32 %v2078, %v2097
    %2099 = vdwg.mxu0
    %2100 = vmatpush.msra.mxu0 %v1394
    %2101 = vmatpush.msra.mxu0 %v1386
    %2102 = vmatpush.msra.mxu0 %v1378
    %2103 = vmatpush.msra.mxu0 %v1370
    %2104 = vmatpush.msra.mxu0 %v1362
    %2105 = vmatpush.msra.mxu0 %v1354
    %2106 = vmatpush.msra.mxu0 %v1346
    %2107 = vmatpush.msra.mxu0 %v1338
    %2108 = vmatpush.msra.mxu0 %v1330
    %2109 = vmatpush.msra.mxu0 %v1322
    %2110 = vmatpush.msra.mxu0 %v1314
    %2111 = vmatpush.msra.mxu0 %v1306
    %2112 = vmatpush.msra.mxu0 %v1298
    %2113 = vmatpush.msra.mxu0 %v1290
    %2114 = vmatpush.msra.mxu0 %v1282
    %2115 = vmatpush.msra.mxu0 %v1274
    %2116 = vmatmul.f32.gmra.mxu0 %v1012
    %v2117 = vpop.f32.mrf.mxu0
    %v2118 = vadd.f32 %v2098, %v2117
    %2119 = vdwg.mxu0
    %2120 = vmatpush.msra.mxu0 %v1522
    %2121 = vmatpush.msra.mxu0 %v1514
    %2122 = vmatpush.msra.mxu0 %v1506
    %2123 = vmatpush.msra.mxu0 %v1498
    %2124 = vmatpush.msra.mxu0 %v1490
    %2125 = vmatpush.msra.mxu0 %v1482
    %2126 = vmatpush.msra.mxu0 %v1474
    %2127 = vmatpush.msra.mxu0 %v1466
    %2128 = vmatpush.msra.mxu0 %v1458
    %2129 = vmatpush.msra.mxu0 %v1450
    %2130 = vmatpush.msra.mxu0 %v1442
    %2131 = vmatpush.msra.mxu0 %v1434
    %2132 = vmatpush.msra.mxu0 %v1426
    %2133 = vmatpush.msra.mxu0 %v1418
    %2134 = vmatpush.msra.mxu0 %v1410
    %2135 = vmatpush.msra.mxu0 %v1402
    %2136 = vmatmul.f32.gmra.mxu0 %v1013
    %v2137 = vpop.f32.mrf.mxu0
    %v2138 = vadd.f32 %v2118, %v2137
    %2139 = vdwg.mxu0
    %2140 = vmatpush.msra.mxu0 %v1650
    %2141 = vmatpush.msra.mxu0 %v1642
    %2142 = vmatpush.msra.mxu0 %v1634
    %2143 = vmatpush.msra.mxu0 %v1626
    %2144 = vmatpush.msra.mxu0 %v1618
    %2145 = vmatpush.msra.mxu0 %v1610
    %2146 = vmatpush.msra.mxu0 %v1602
    %2147 = vmatpush.msra.mxu0 %v1594
    %2148 = vmatpush.msra.mxu0 %v1586
    %2149 = vmatpush.msra.mxu0 %v1578
    %2150 = vmatpush.msra.mxu0 %v1570
    %2151 = vmatpush.msra.mxu0 %v1562
    %2152 = vmatpush.msra.mxu0 %v1554
    %2153 = vmatpush.msra.mxu0 %v1546
    %2154 = vmatpush.msra.mxu0 %v1538
    %2155 = vmatpush.msra.mxu0 %v1530
    %2156 = vmatmul.f32.gmra.mxu0 %v1014
    %v2157 = vpop.f32.mrf.mxu0
    %v2158 = vadd.f32 %v2138, %v2157
    %2159 = vdwg.mxu0
    %2160 = vmatpush.msra.mxu0 %v1778
    %2161 = vmatpush.msra.mxu0 %v1770
    %2162 = vmatpush.msra.mxu0 %v1762
    %2163 = vmatpush.msra.mxu0 %v1754
    %2164 = vmatpush.msra.mxu0 %v1746
    %2165 = vmatpush.msra.mxu0 %v1738
    %2166 = vmatpush.msra.mxu0 %v1730
    %2167 = vmatpush.msra.mxu0 %v1722
    %2168 = vmatpush.msra.mxu0 %v1714
    %2169 = vmatpush.msra.mxu0 %v1706
    %2170 = vmatpush.msra.mxu0 %v1698
    %2171 = vmatpush.msra.mxu0 %v1690
    %2172 = vmatpush.msra.mxu0 %v1682
    %2173 = vmatpush.msra.mxu0 %v1674
    %2174 = vmatpush.msra.mxu0 %v1666
    %2175 = vmatpush.msra.mxu0 %v1658
    %2176 = vmatmul.f32.gmra.mxu0 %v1015
    %v2177 = vpop.f32.mrf.mxu0
    %v2178 = vadd.f32 %v2158, %v2177
    %2179 = vdwg.mxu0
    %2180 = vmatpush.msra.mxu0 %v1906
    %2181 = vmatpush.msra.mxu0 %v1898
    %2182 = vmatpush.msra.mxu0 %v1890
    %2183 = vmatpush.msra.mxu0 %v1882
    %2184 = vmatpush.msra.mxu0 %v1874
    %2185 = vmatpush.msra.mxu0 %v1866
    %2186 = vmatpush.msra.mxu0 %v1858
    %2187 = vmatpush.msra.mxu0 %v1850
    %2188 = vmatpush.msra.mxu0 %v1842
    %2189 = vmatpush.msra.mxu0 %v1834
    %2190 = vmatpush.msra.mxu0 %v1826
    %2191 = vmatpush.msra.mxu0 %v1818
    %2192 = vmatpush.msra.mxu0 %v1810
    %2193 = vmatpush.msra.mxu0 %v1802
    %2194 = vmatpush.msra.mxu0 %v1794
    %2195 = vmatpush.msra.mxu0 %v1786
    %2196 = vmatmul.f32.gmra.mxu0 %v1016
    %v2197 = vpop.f32.mrf.mxu0
    %v2198 = vadd.f32 %v2178, %v2197
    %2199 = vdwg.mxu0
    %2200 = vmatpush.msra.mxu0 %v2034
    %2201 = vmatpush.msra.mxu0 %v2026
    %2202 = vmatpush.msra.mxu0 %v2018
    %2203 = vmatpush.msra.mxu0 %v2010
    %2204 = vmatpush.msra.mxu0 %v2002
    %2205 = vmatpush.msra.mxu0 %v1994
    %2206 = vmatpush.msra.mxu0 %v1986
    %2207 = vmatpush.msra.mxu0 %v1978
    %2208 = vmatpush.msra.mxu0 %v1970
    %2209 = vmatpush.msra.mxu0 %v1962
    %2210 = vmatpush.msra.mxu0 %v1954
    %2211 = vmatpush.msra.mxu0 %v1946
    %2212 = vmatpush.msra.mxu0 %v1938
    %2213 = vmatpush.msra.mxu0 %v1930
    %2214 = vmatpush.msra.mxu0 %v1922
    %2215 = vmatpush.msra.mxu0 %v1914
    %2216 = vmatmul.f32.gmra.mxu0 %v1017
    %v2217 = vpop.f32.mrf.mxu0
    %v2218 = vadd.f32 %v2198, %v2217
    %2219 = vdwg.mxu0
    %2220 = vmatpush.msra.mxu0 %v1139
    %2221 = vmatpush.msra.mxu0 %v1131
    %2222 = vmatpush.msra.mxu0 %v1123
    %2223 = vmatpush.msra.mxu0 %v1115
    %2224 = vmatpush.msra.mxu0 %v1107
    %2225 = vmatpush.msra.mxu0 %v1099
    %2226 = vmatpush.msra.mxu0 %v1091
    %2227 = vmatpush.msra.mxu0 %v1083
    %2228 = vmatpush.msra.mxu0 %v1075
    %2229 = vmatpush.msra.mxu0 %v1067
    %2230 = vmatpush.msra.mxu0 %v1059
    %2231 = vmatpush.msra.mxu0 %v1051
    %2232 = vmatpush.msra.mxu0 %v1043
    %2233 = vmatpush.msra.mxu0 %v1035
    %2234 = vmatpush.msra.mxu0 %v1027
    %2235 = vmatpush.msra.mxu0 %v1019
    %2236 = vmatmul.f32.gmra.mxu0 %v1010
    %v2237 = vpop.f32.mrf.mxu0
    %v2238 = vadd.f32 %v2045, %v2237
    %2239 = vdwg.mxu0
    %2240 = vmatpush.msra.mxu0 %v1267
    %2241 = vmatpush.msra.mxu0 %v1259
    %2242 = vmatpush.msra.mxu0 %v1251
    %2243 = vmatpush.msra.mxu0 %v1243
    %2244 = vmatpush.msra.mxu0 %v1235
    %2245 = vmatpush.msra.mxu0 %v1227
    %2246 = vmatpush.msra.mxu0 %v1219
    %2247 = vmatpush.msra.mxu0 %v1211
    %2248 = vmatpush.msra.mxu0 %v1203
    %2249 = vmatpush.msra.mxu0 %v1195
    %2250 = vmatpush.msra.mxu0 %v1187
    %2251 = vmatpush.msra.mxu0 %v1179
    %2252 = vmatpush.msra.mxu0 %v1171
    %2253 = vmatpush.msra.mxu0 %v1163
    %2254 = vmatpush.msra.mxu0 %v1155
    %2255 = vmatpush.msra.mxu0 %v1147
    %2256 = vmatmul.f32.gmra.mxu0 %v1011
    %v2257 = vpop.f32.mrf.mxu0
    %v2258 = vadd.f32 %v2238, %v2257
    %2259 = vdwg.mxu0
    %2260 = vmatpush.msra.mxu0 %v1395
    %2261 = vmatpush.msra.mxu0 %v1387
    %2262 = vmatpush.msra.mxu0 %v1379
    %2263 = vmatpush.msra.mxu0 %v1371
    %2264 = vmatpush.msra.mxu0 %v1363
    %2265 = vmatpush.msra.mxu0 %v1355
    %2266 = vmatpush.msra.mxu0 %v1347
    %2267 = vmatpush.msra.mxu0 %v1339
    %2268 = vmatpush.msra.mxu0 %v1331
    %2269 = vmatpush.msra.mxu0 %v1323
    %2270 = vmatpush.msra.mxu0 %v1315
    %2271 = vmatpush.msra.mxu0 %v1307
    %2272 = vmatpush.msra.mxu0 %v1299
    %2273 = vmatpush.msra.mxu0 %v1291
    %2274 = vmatpush.msra.mxu0 %v1283
    %2275 = vmatpush.msra.mxu0 %v1275
    %2276 = vmatmul.f32.gmra.mxu0 %v1012
    %v2277 = vpop.f32.mrf.mxu0
    %v2278 = vadd.f32 %v2258, %v2277
    %2279 = vdwg.mxu0
    %2280 = vmatpush.msra.mxu0 %v1523
    %2281 = vmatpush.msra.mxu0 %v1515
    %2282 = vmatpush.msra.mxu0 %v1507
    %2283 = vmatpush.msra.mxu0 %v1499
    %2284 = vmatpush.msra.mxu0 %v1491
    %2285 = vmatpush.msra.mxu0 %v1483
    %2286 = vmatpush.msra.mxu0 %v1475
    %2287 = vmatpush.msra.mxu0 %v1467
    %2288 = vmatpush.msra.mxu0 %v1459
    %2289 = vmatpush.msra.mxu0 %v1451
    %2290 = vmatpush.msra.mxu0 %v1443
    %2291 = vmatpush.msra.mxu0 %v1435
    %2292 = vmatpush.msra.mxu0 %v1427
    %2293 = vmatpush.msra.mxu0 %v1419
    %2294 = vmatpush.msra.mxu0 %v1411
    %2295 = vmatpush.msra.mxu0 %v1403
    %2296 = vmatmul.f32.gmra.mxu0 %v1013
    %v2297 = vpop.f32.mrf.mxu0
    %v2298 = vadd.f32 %v2278, %v2297
    %2299 = vdwg.mxu0
    %2300 = vmatpush.msra.mxu0 %v1651
    %2301 = vmatpush.msra.mxu0 %v1643
    %2302 = vmatpush.msra.mxu0 %v1635
    %2303 = vmatpush.msra.mxu0 %v1627
    %2304 = vmatpush.msra.mxu0 %v1619
    %2305 = vmatpush.msra.mxu0 %v1611
    %2306 = vmatpush.msra.mxu0 %v1603
    %2307 = vmatpush.msra.mxu0 %v1595
    %2308 = vmatpush.msra.mxu0 %v1587
    %2309 = vmatpush.msra.mxu0 %v1579
    %2310 = vmatpush.msra.mxu0 %v1571
    %2311 = vmatpush.msra.mxu0 %v1563
    %2312 = vmatpush.msra.mxu0 %v1555
    %2313 = vmatpush.msra.mxu0 %v1547
    %2314 = vmatpush.msra.mxu0 %v1539
    %2315 = vmatpush.msra.mxu0 %v1531
    %2316 = vmatmul.f32.gmra.mxu0 %v1014
    %v2317 = vpop.f32.mrf.mxu0
    %v2318 = vadd.f32 %v2298, %v2317
    %2319 = vdwg.mxu0
    %2320 = vmatpush.msra.mxu0 %v1779
    %2321 = vmatpush.msra.mxu0 %v1771
    %2322 = vmatpush.msra.mxu0 %v1763
    %2323 = vmatpush.msra.mxu0 %v1755
    %2324 = vmatpush.msra.mxu0 %v1747
    %2325 = vmatpush.msra.mxu0 %v1739
    %2326 = vmatpush.msra.mxu0 %v1731
    %2327 = vmatpush.msra.mxu0 %v1723
    %2328 = vmatpush.msra.mxu0 %v1715
    %2329 = vmatpush.msra.mxu0 %v1707
    %2330 = vmatpush.msra.mxu0 %v1699
    %2331 = vmatpush.msra.mxu0 %v1691
    %2332 = vmatpush.msra.mxu0 %v1683
    %2333 = vmatpush.msra.mxu0 %v1675
    %2334 = vmatpush.msra.mxu0 %v1667
    %2335 = vmatpush.msra.mxu0 %v1659
    %2336 = vmatmul.f32.gmra.mxu0 %v1015
    %v2337 = vpop.f32.mrf.mxu0
    %v2338 = vadd.f32 %v2318, %v2337
    %2339 = vdwg.mxu0
    %2340 = vmatpush.msra.mxu0 %v1907
    %2341 = vmatpush.msra.mxu0 %v1899
    %2342 = vmatpush.msra.mxu0 %v1891
    %2343 = vmatpush.msra.mxu0 %v1883
    %2344 = vmatpush.msra.mxu0 %v1875
    %2345 = vmatpush.msra.mxu0 %v1867
    %2346 = vmatpush.msra.mxu0 %v1859
    %2347 = vmatpush.msra.mxu0 %v1851
    %2348 = vmatpush.msra.mxu0 %v1843
    %2349 = vmatpush.msra.mxu0 %v1835
    %2350 = vmatpush.msra.mxu0 %v1827
    %2351 = vmatpush.msra.mxu0 %v1819
    %2352 = vmatpush.msra.mxu0 %v1811
    %2353 = vmatpush.msra.mxu0 %v1803
    %2354 = vmatpush.msra.mxu0 %v1795
    %2355 = vmatpush.msra.mxu0 %v1787
    %2356 = vmatmul.f32.gmra.mxu0 %v1016
    %v2357 = vpop.f32.mrf.mxu0
    %v2358 = vadd.f32 %v2338, %v2357
    %2359 = vdwg.mxu0
    %2360 = vmatpush.msra.mxu0 %v2035
    %2361 = vmatpush.msra.mxu0 %v2027
    %2362 = vmatpush.msra.mxu0 %v2019
    %2363 = vmatpush.msra.mxu0 %v2011
    %2364 = vmatpush.msra.mxu0 %v2003
    %2365 = vmatpush.msra.mxu0 %v1995
    %2366 = vmatpush.msra.mxu0 %v1987
    %2367 = vmatpush.msra.mxu0 %v1979
    %2368 = vmatpush.msra.mxu0 %v1971
    %2369 = vmatpush.msra.mxu0 %v1963
    %2370 = vmatpush.msra.mxu0 %v1955
    %2371 = vmatpush.msra.mxu0 %v1947
    %2372 = vmatpush.msra.mxu0 %v1939
    %2373 = vmatpush.msra.mxu0 %v1931
    %2374 = vmatpush.msra.mxu0 %v1923
    %2375 = vmatpush.msra.mxu0 %v1915
    %2376 = vmatmul.f32.gmra.mxu0 %v1017
    %v2377 = vpop.f32.mrf.mxu0
    %v2378 = vadd.f32 %v2358, %v2377
    %2379 = vdwg.mxu0
    %2380 = vmatpush.msra.mxu0 %v1140
    %2381 = vmatpush.msra.mxu0 %v1132
    %2382 = vmatpush.msra.mxu0 %v1124
    %2383 = vmatpush.msra.mxu0 %v1116
    %2384 = vmatpush.msra.mxu0 %v1108
    %2385 = vmatpush.msra.mxu0 %v1100
    %2386 = vmatpush.msra.mxu0 %v1092
    %2387 = vmatpush.msra.mxu0 %v1084
    %2388 = vmatpush.msra.mxu0 %v1076
    %2389 = vmatpush.msra.mxu0 %v1068
    %2390 = vmatpush.msra.mxu0 %v1060
    %2391 = vmatpush.msra.mxu0 %v1052
    %2392 = vmatpush.msra.mxu0 %v1044
    %2393 = vmatpush.msra.mxu0 %v1036
    %2394 = vmatpush.msra.mxu0 %v1028
    %2395 = vmatpush.msra.mxu0 %v1020
    %2396 = vmatmul.f32.gmra.mxu0 %v1010
    %v2397 = vpop.f32.mrf.mxu0
    %v2398 = vadd.f32 %v2046, %v2397
    %2399 = vdwg.mxu0
    %2400 = vmatpush.msra.mxu0 %v1268
    %2401 = vmatpush.msra.mxu0 %v1260
    %2402 = vmatpush.msra.mxu0 %v1252
    %2403 = vmatpush.msra.mxu0 %v1244
    %2404 = vmatpush.msra.mxu0 %v1236
    %2405 = vmatpush.msra.mxu0 %v1228
    %2406 = vmatpush.msra.mxu0 %v1220
    %2407 = vmatpush.msra.mxu0 %v1212
    %2408 = vmatpush.msra.mxu0 %v1204
    %2409 = vmatpush.msra.mxu0 %v1196
    %2410 = vmatpush.msra.mxu0 %v1188
    %2411 = vmatpush.msra.mxu0 %v1180
    %2412 = vmatpush.msra.mxu0 %v1172
    %2413 = vmatpush.msra.mxu0 %v1164
    %2414 = vmatpush.msra.mxu0 %v1156
    %2415 = vmatpush.msra.mxu0 %v1148
    %2416 = vmatmul.f32.gmra.mxu0 %v1011
    %v2417 = vpop.f32.mrf.mxu0
    %v2418 = vadd.f32 %v2398, %v2417
    %2419 = vdwg.mxu0
    %2420 = vmatpush.msra.mxu0 %v1396
    %2421 = vmatpush.msra.mxu0 %v1388
    %2422 = vmatpush.msra.mxu0 %v1380
    %2423 = vmatpush.msra.mxu0 %v1372
    %2424 = vmatpush.msra.mxu0 %v1364
    %2425 = vmatpush.msra.mxu0 %v1356
    %2426 = vmatpush.msra.mxu0 %v1348
    %2427 = vmatpush.msra.mxu0 %v1340
    %2428 = vmatpush.msra.mxu0 %v1332
    %2429 = vmatpush.msra.mxu0 %v1324
    %2430 = vmatpush.msra.mxu0 %v1316
    %2431 = vmatpush.msra.mxu0 %v1308
    %2432 = vmatpush.msra.mxu0 %v1300
    %2433 = vmatpush.msra.mxu0 %v1292
    %2434 = vmatpush.msra.mxu0 %v1284
    %2435 = vmatpush.msra.mxu0 %v1276
    %2436 = vmatmul.f32.gmra.mxu0 %v1012
    %v2437 = vpop.f32.mrf.mxu0
    %v2438 = vadd.f32 %v2418, %v2437
    %2439 = vdwg.mxu0
    %2440 = vmatpush.msra.mxu0 %v1524
    %2441 = vmatpush.msra.mxu0 %v1516
    %2442 = vmatpush.msra.mxu0 %v1508
    %2443 = vmatpush.msra.mxu0 %v1500
    %2444 = vmatpush.msra.mxu0 %v1492
    %2445 = vmatpush.msra.mxu0 %v1484
    %2446 = vmatpush.msra.mxu0 %v1476
    %2447 = vmatpush.msra.mxu0 %v1468
    %2448 = vmatpush.msra.mxu0 %v1460
    %2449 = vmatpush.msra.mxu0 %v1452
    %2450 = vmatpush.msra.mxu0 %v1444
    %2451 = vmatpush.msra.mxu0 %v1436
    %2452 = vmatpush.msra.mxu0 %v1428
    %2453 = vmatpush.msra.mxu0 %v1420
    %2454 = vmatpush.msra.mxu0 %v1412
    %2455 = vmatpush.msra.mxu0 %v1404
    %2456 = vmatmul.f32.gmra.mxu0 %v1013
    %v2457 = vpop.f32.mrf.mxu0
    %v2458 = vadd.f32 %v2438, %v2457
    %2459 = vdwg.mxu0
    %2460 = vmatpush.msra.mxu0 %v1652
    %2461 = vmatpush.msra.mxu0 %v1644
    %2462 = vmatpush.msra.mxu0 %v1636
    %2463 = vmatpush.msra.mxu0 %v1628
    %2464 = vmatpush.msra.mxu0 %v1620
    %2465 = vmatpush.msra.mxu0 %v1612
    %2466 = vmatpush.msra.mxu0 %v1604
    %2467 = vmatpush.msra.mxu0 %v1596
    %2468 = vmatpush.msra.mxu0 %v1588
    %2469 = vmatpush.msra.mxu0 %v1580
    %2470 = vmatpush.msra.mxu0 %v1572
    %2471 = vmatpush.msra.mxu0 %v1564
    %2472 = vmatpush.msra.mxu0 %v1556
    %2473 = vmatpush.msra.mxu0 %v1548
    %2474 = vmatpush.msra.mxu0 %v1540
    %2475 = vmatpush.msra.mxu0 %v1532
    %2476 = vmatmul.f32.gmra.mxu0 %v1014
    %v2477 = vpop.f32.mrf.mxu0
    %v2478 = vadd.f32 %v2458, %v2477
    %2479 = vdwg.mxu0
    %2480 = vmatpush.msra.mxu0 %v1780
    %2481 = vmatpush.msra.mxu0 %v1772
    %2482 = vmatpush.msra.mxu0 %v1764
    %2483 = vmatpush.msra.mxu0 %v1756
    %2484 = vmatpush.msra.mxu0 %v1748
    %2485 = vmatpush.msra.mxu0 %v1740
    %2486 = vmatpush.msra.mxu0 %v1732
    %2487 = vmatpush.msra.mxu0 %v1724
    %2488 = vmatpush.msra.mxu0 %v1716
    %2489 = vmatpush.msra.mxu0 %v1708
    %2490 = vmatpush.msra.mxu0 %v1700
    %2491 = vmatpush.msra.mxu0 %v1692
    %2492 = vmatpush.msra.mxu0 %v1684
    %2493 = vmatpush.msra.mxu0 %v1676
    %2494 = vmatpush.msra.mxu0 %v1668
    %2495 = vmatpush.msra.mxu0 %v1660
    %2496 = vmatmul.f32.gmra.mxu0 %v1015
    %v2497 = vpop.f32.mrf.mxu0
    %v2498 = vadd.f32 %v2478, %v2497
    %2499 = vdwg.mxu0
    %2500 = vmatpush.msra.mxu0 %v1908
    %2501 = vmatpush.msra.mxu0 %v1900
    %2502 = vmatpush.msra.mxu0 %v1892
    %2503 = vmatpush.msra.mxu0 %v1884
    %2504 = vmatpush.msra.mxu0 %v1876
    %2505 = vmatpush.msra.mxu0 %v1868
    %2506 = vmatpush.msra.mxu0 %v1860
    %2507 = vmatpush.msra.mxu0 %v1852
    %2508 = vmatpush.msra.mxu0 %v1844
    %2509 = vmatpush.msra.mxu0 %v1836
    %2510 = vmatpush.msra.mxu0 %v1828
    %2511 = vmatpush.msra.mxu0 %v1820
    %2512 = vmatpush.msra.mxu0 %v1812
    %2513 = vmatpush.msra.mxu0 %v1804
    %2514 = vmatpush.msra.mxu0 %v1796
    %2515 = vmatpush.msra.mxu0 %v1788
    %2516 = vmatmul.f32.gmra.mxu0 %v1016
    %v2517 = vpop.f32.mrf.mxu0
    %v2518 = vadd.f32 %v2498, %v2517
    %2519 = vdwg.mxu0
    %2520 = vmatpush.msra.mxu0 %v2036
    %2521 = vmatpush.msra.mxu0 %v2028
    %2522 = vmatpush.msra.mxu0 %v2020
    %2523 = vmatpush.msra.mxu0 %v2012
    %2524 = vmatpush.msra.mxu0 %v2004
    %2525 = vmatpush.msra.mxu0 %v1996
    %2526 = vmatpush.msra.mxu0 %v1988
    %2527 = vmatpush.msra.mxu0 %v1980
    %2528 = vmatpush.msra.mxu0 %v1972
    %2529 = vmatpush.msra.mxu0 %v1964
    %2530 = vmatpush.msra.mxu0 %v1956
    %2531 = vmatpush.msra.mxu0 %v1948
    %2532 = vmatpush.msra.mxu0 %v1940
    %2533 = vmatpush.msra.mxu0 %v1932
    %2534 = vmatpush.msra.mxu0 %v1924
    %2535 = vmatpush.msra.mxu0 %v1916
    %2536 = vmatmul.f32.gmra.mxu0 %v1017
    %v2537 = vpop.f32.mrf.mxu0
    %v2538 = vadd.f32 %v2518, %v2537
    %2539 = vdwg.mxu0
    %2540 = vmatpush.msra.mxu0 %v1141
    %2541 = vmatpush.msra.mxu0 %v1133
    %2542 = vmatpush.msra.mxu0 %v1125
    %2543 = vmatpush.msra.mxu0 %v1117
    %2544 = vmatpush.msra.mxu0 %v1109
    %2545 = vmatpush.msra.mxu0 %v1101
    %2546 = vmatpush.msra.mxu0 %v1093
    %2547 = vmatpush.msra.mxu0 %v1085
    %2548 = vmatpush.msra.mxu0 %v1077
    %2549 = vmatpush.msra.mxu0 %v1069
    %2550 = vmatpush.msra.mxu0 %v1061
    %2551 = vmatpush.msra.mxu0 %v1053
    %2552 = vmatpush.msra.mxu0 %v1045
    %2553 = vmatpush.msra.mxu0 %v1037
    %2554 = vmatpush.msra.mxu0 %v1029
    %2555 = vmatpush.msra.mxu0 %v1021
    %2556 = vmatmul.f32.gmra.mxu0 %v1010
    %v2557 = vpop.f32.mrf.mxu0
    %v2558 = vadd.f32 %v2047, %v2557
    %2559 = vdwg.mxu0
    %2560 = vmatpush.msra.mxu0 %v1269
    %2561 = vmatpush.msra.mxu0 %v1261
    %2562 = vmatpush.msra.mxu0 %v1253
    %2563 = vmatpush.msra.mxu0 %v1245
    %2564 = vmatpush.msra.mxu0 %v1237
    %2565 = vmatpush.msra.mxu0 %v1229
    %2566 = vmatpush.msra.mxu0 %v1221
    %2567 = vmatpush.msra.mxu0 %v1213
    %2568 = vmatpush.msra.mxu0 %v1205
    %2569 = vmatpush.msra.mxu0 %v1197
    %2570 = vmatpush.msra.mxu0 %v1189
    %2571 = vmatpush.msra.mxu0 %v1181
    %2572 = vmatpush.msra.mxu0 %v1173
    %2573 = vmatpush.msra.mxu0 %v1165
    %2574 = vmatpush.msra.mxu0 %v1157
    %2575 = vmatpush.msra.mxu0 %v1149
    %2576 = vmatmul.f32.gmra.mxu0 %v1011
    %v2577 = vpop.f32.mrf.mxu0
    %v2578 = vadd.f32 %v2558, %v2577
    %2579 = vdwg.mxu0
    %2580 = vmatpush.msra.mxu0 %v1397
    %2581 = vmatpush.msra.mxu0 %v1389
    %2582 = vmatpush.msra.mxu0 %v1381
    %2583 = vmatpush.msra.mxu0 %v1373
    %2584 = vmatpush.msra.mxu0 %v1365
    %2585 = vmatpush.msra.mxu0 %v1357
    %2586 = vmatpush.msra.mxu0 %v1349
    %2587 = vmatpush.msra.mxu0 %v1341
    %2588 = vmatpush.msra.mxu0 %v1333
    %2589 = vmatpush.msra.mxu0 %v1325
    %2590 = vmatpush.msra.mxu0 %v1317
    %2591 = vmatpush.msra.mxu0 %v1309
    %2592 = vmatpush.msra.mxu0 %v1301
    %2593 = vmatpush.msra.mxu0 %v1293
    %2594 = vmatpush.msra.mxu0 %v1285
    %2595 = vmatpush.msra.mxu0 %v1277
    %2596 = vmatmul.f32.gmra.mxu0 %v1012
    %v2597 = vpop.f32.mrf.mxu0
    %v2598 = vadd.f32 %v2578, %v2597
    %2599 = vdwg.mxu0
    %2600 = vmatpush.msra.mxu0 %v1525
    %2601 = vmatpush.msra.mxu0 %v1517
    %2602 = vmatpush.msra.mxu0 %v1509
    %2603 = vmatpush.msra.mxu0 %v1501
    %2604 = vmatpush.msra.mxu0 %v1493
    %2605 = vmatpush.msra.mxu0 %v1485
    %2606 = vmatpush.msra.mxu0 %v1477
    %2607 = vmatpush.msra.mxu0 %v1469
    %2608 = vmatpush.msra.mxu0 %v1461
    %2609 = vmatpush.msra.mxu0 %v1453
    %2610 = vmatpush.msra.mxu0 %v1445
    %2611 = vmatpush.msra.mxu0 %v1437
    %2612 = vmatpush.msra.mxu0 %v1429
    %2613 = vmatpush.msra.mxu0 %v1421
    %2614 = vmatpush.msra.mxu0 %v1413
    %2615 = vmatpush.msra.mxu0 %v1405
    %2616 = vmatmul.f32.gmra.mxu0 %v1013
    %v2617 = vpop.f32.mrf.mxu0
    %v2618 = vadd.f32 %v2598, %v2617
    %2619 = vdwg.mxu0
    %2620 = vmatpush.msra.mxu0 %v1653
    %2621 = vmatpush.msra.mxu0 %v1645
    %2622 = vmatpush.msra.mxu0 %v1637
    %2623 = vmatpush.msra.mxu0 %v1629
    %2624 = vmatpush.msra.mxu0 %v1621
    %2625 = vmatpush.msra.mxu0 %v1613
    %2626 = vmatpush.msra.mxu0 %v1605
    %2627 = vmatpush.msra.mxu0 %v1597
    %2628 = vmatpush.msra.mxu0 %v1589
    %2629 = vmatpush.msra.mxu0 %v1581
    %2630 = vmatpush.msra.mxu0 %v1573
    %2631 = vmatpush.msra.mxu0 %v1565
    %2632 = vmatpush.msra.mxu0 %v1557
    %2633 = vmatpush.msra.mxu0 %v1549
    %2634 = vmatpush.msra.mxu0 %v1541
    %2635 = vmatpush.msra.mxu0 %v1533
    %2636 = vmatmul.f32.gmra.mxu0 %v1014
    %v2637 = vpop.f32.mrf.mxu0
    %v2638 = vadd.f32 %v2618, %v2637
    %2639 = vdwg.mxu0
    %2640 = vmatpush.msra.mxu0 %v1781
    %2641 = vmatpush.msra.mxu0 %v1773
    %2642 = vmatpush.msra.mxu0 %v1765
    %2643 = vmatpush.msra.mxu0 %v1757
    %2644 = vmatpush.msra.mxu0 %v1749
    %2645 = vmatpush.msra.mxu0 %v1741
    %2646 = vmatpush.msra.mxu0 %v1733
    %2647 = vmatpush.msra.mxu0 %v1725
    %2648 = vmatpush.msra.mxu0 %v1717
    %2649 = vmatpush.msra.mxu0 %v1709
    %2650 = vmatpush.msra.mxu0 %v1701
    %2651 = vmatpush.msra.mxu0 %v1693
    %2652 = vmatpush.msra.mxu0 %v1685
    %2653 = vmatpush.msra.mxu0 %v1677
    %2654 = vmatpush.msra.mxu0 %v1669
    %2655 = vmatpush.msra.mxu0 %v1661
    %2656 = vmatmul.f32.gmra.mxu0 %v1015
    %v2657 = vpop.f32.mrf.mxu0
    %v2658 = vadd.f32 %v2638, %v2657
    %2659 = vdwg.mxu0
    %2660 = vmatpush.msra.mxu0 %v1909
    %2661 = vmatpush.msra.mxu0 %v1901
    %2662 = vmatpush.msra.mxu0 %v1893
    %2663 = vmatpush.msra.mxu0 %v1885
    %2664 = vmatpush.msra.mxu0 %v1877
    %2665 = vmatpush.msra.mxu0 %v1869
    %2666 = vmatpush.msra.mxu0 %v1861
    %2667 = vmatpush.msra.mxu0 %v1853
    %2668 = vmatpush.msra.mxu0 %v1845
    %2669 = vmatpush.msra.mxu0 %v1837
    %2670 = vmatpush.msra.mxu0 %v1829
    %2671 = vmatpush.msra.mxu0 %v1821
    %2672 = vmatpush.msra.mxu0 %v1813
    %2673 = vmatpush.msra.mxu0 %v1805
    %2674 = vmatpush.msra.mxu0 %v1797
    %2675 = vmatpush.msra.mxu0 %v1789
    %2676 = vmatmul.f32.gmra.mxu0 %v1016
    %v2677 = vpop.f32.mrf.mxu0
    %v2678 = vadd.f32 %v2658, %v2677
    %2679 = vdwg.mxu0
    %2680 = vmatpush.msra.mxu0 %v2037
    %2681 = vmatpush.msra.mxu0 %v2029
    %2682 = vmatpush.msra.mxu0 %v2021
    %2683 = vmatpush.msra.mxu0 %v2013
    %2684 = vmatpush.msra.mxu0 %v2005
    %2685 = vmatpush.msra.mxu0 %v1997
    %2686 = vmatpush.msra.mxu0 %v1989
    %2687 = vmatpush.msra.mxu0 %v1981
    %2688 = vmatpush.msra.mxu0 %v1973
    %2689 = vmatpush.msra.mxu0 %v1965
    %2690 = vmatpush.msra.mxu0 %v1957
    %2691 = vmatpush.msra.mxu0 %v1949
    %2692 = vmatpush.msra.mxu0 %v1941
    %2693 = vmatpush.msra.mxu0 %v1933
    %2694 = vmatpush.msra.mxu0 %v1925
    %2695 = vmatpush.msra.mxu0 %v1917
    %2696 = vmatmul.f32.gmra.mxu0 %v1017
    %v2697 = vpop.f32.mrf.mxu0
    %v2698 = vadd.f32 %v2678, %v2697
    %2699 = vdwg.mxu0
    %2700 = vmatpush.msra.mxu0 %v1142
    %2701 = vmatpush.msra.mxu0 %v1134
    %2702 = vmatpush.msra.mxu0 %v1126
    %2703 = vmatpush.msra.mxu0 %v1118
    %2704 = vmatpush.msra.mxu0 %v1110
    %2705 = vmatpush.msra.mxu0 %v1102
    %2706 = vmatpush.msra.mxu0 %v1094
    %2707 = vmatpush.msra.mxu0 %v1086
    %2708 = vmatpush.msra.mxu0 %v1078
    %2709 = vmatpush.msra.mxu0 %v1070
    %2710 = vmatpush.msra.mxu0 %v1062
    %2711 = vmatpush.msra.mxu0 %v1054
    %2712 = vmatpush.msra.mxu0 %v1046
    %2713 = vmatpush.msra.mxu0 %v1038
    %2714 = vmatpush.msra.mxu0 %v1030
    %2715 = vmatpush.msra.mxu0 %v1022
    %2716 = vmatmul.f32.gmra.mxu0 %v1010
    %v2717 = vpop.f32.mrf.mxu0
    %v2718 = vadd.f32 %v2048, %v2717
    %2719 = vdwg.mxu0
    %2720 = vmatpush.msra.mxu0 %v1270
    %2721 = vmatpush.msra.mxu0 %v1262
    %2722 = vmatpush.msra.mxu0 %v1254
    %2723 = vmatpush.msra.mxu0 %v1246
    %2724 = vmatpush.msra.mxu0 %v1238
    %2725 = vmatpush.msra.mxu0 %v1230
    %2726 = vmatpush.msra.mxu0 %v1222
    %2727 = vmatpush.msra.mxu0 %v1214
    %2728 = vmatpush.msra.mxu0 %v1206
    %2729 = vmatpush.msra.mxu0 %v1198
    %2730 = vmatpush.msra.mxu0 %v1190
    %2731 = vmatpush.msra.mxu0 %v1182
    %2732 = vmatpush.msra.mxu0 %v1174
    %2733 = vmatpush.msra.mxu0 %v1166
    %2734 = vmatpush.msra.mxu0 %v1158
    %2735 = vmatpush.msra.mxu0 %v1150
    %2736 = vmatmul.f32.gmra.mxu0 %v1011
    %v2737 = vpop.f32.mrf.mxu0
    %v2738 = vadd.f32 %v2718, %v2737
    %2739 = vdwg.mxu0
    %2740 = vmatpush.msra.mxu0 %v1398
    %2741 = vmatpush.msra.mxu0 %v1390
    %2742 = vmatpush.msra.mxu0 %v1382
    %2743 = vmatpush.msra.mxu0 %v1374
    %2744 = vmatpush.msra.mxu0 %v1366
    %2745 = vmatpush.msra.mxu0 %v1358
    %2746 = vmatpush.msra.mxu0 %v1350
    %2747 = vmatpush.msra.mxu0 %v1342
    %2748 = vmatpush.msra.mxu0 %v1334
    %2749 = vmatpush.msra.mxu0 %v1326
    %2750 = vmatpush.msra.mxu0 %v1318
    %2751 = vmatpush.msra.mxu0 %v1310
    %2752 = vmatpush.msra.mxu0 %v1302
    %2753 = vmatpush.msra.mxu0 %v1294
    %2754 = vmatpush.msra.mxu0 %v1286
    %2755 = vmatpush.msra.mxu0 %v1278
    %2756 = vmatmul.f32.gmra.mxu0 %v1012
    %v2757 = vpop.f32.mrf.mxu0
    %v2758 = vadd.f32 %v2738, %v2757
    %2759 = vdwg.mxu0
    %2760 = vmatpush.msra.mxu0 %v1526
    %2761 = vmatpush.msra.mxu0 %v1518
    %2762 = vmatpush.msra.mxu0 %v1510
    %2763 = vmatpush.msra.mxu0 %v1502
    %2764 = vmatpush.msra.mxu0 %v1494
    %2765 = vmatpush.msra.mxu0 %v1486
    %2766 = vmatpush.msra.mxu0 %v1478
    %2767 = vmatpush.msra.mxu0 %v1470
    %2768 = vmatpush.msra.mxu0 %v1462
    %2769 = vmatpush.msra.mxu0 %v1454
    %2770 = vmatpush.msra.mxu0 %v1446
    %2771 = vmatpush.msra.mxu0 %v1438
    %2772 = vmatpush.msra.mxu0 %v1430
    %2773 = vmatpush.msra.mxu0 %v1422
    %2774 = vmatpush.msra.mxu0 %v1414
    %2775 = vmatpush.msra.mxu0 %v1406
    %2776 = vmatmul.f32.gmra.mxu0 %v1013
    %v2777 = vpop.f32.mrf.mxu0
    %v2778 = vadd.f32 %v2758, %v2777
    %2779 = vdwg.mxu0
    %2780 = vmatpush.msra.mxu0 %v1654
    %2781 = vmatpush.msra.mxu0 %v1646
    %2782 = vmatpush.msra.mxu0 %v1638
    %2783 = vmatpush.msra.mxu0 %v1630
    %2784 = vmatpush.msra.mxu0 %v1622
    %2785 = vmatpush.msra.mxu0 %v1614
    %2786 = vmatpush.msra.mxu0 %v1606
    %2787 = vmatpush.msra.mxu0 %v1598
    %2788 = vmatpush.msra.mxu0 %v1590
    %2789 = vmatpush.msra.mxu0 %v1582
    %2790 = vmatpush.msra.mxu0 %v1574
    %2791 = vmatpush.msra.mxu0 %v1566
    %2792 = vmatpush.msra.mxu0 %v1558
    %2793 = vmatpush.msra.mxu0 %v1550
    %2794 = vmatpush.msra.mxu0 %v1542
    %2795 = vmatpush.msra.mxu0 %v1534
    %2796 = vmatmul.f32.gmra.mxu0 %v1014
    %v2797 = vpop.f32.mrf.mxu0
    %v2798 = vadd.f32 %v2778, %v2797
    %2799 = vdwg.mxu0
    %2800 = vmatpush.msra.mxu0 %v1782
    %2801 = vmatpush.msra.mxu0 %v1774
    %2802 = vmatpush.msra.mxu0 %v1766
    %2803 = vmatpush.msra.mxu0 %v1758
    %2804 = vmatpush.msra.mxu0 %v1750
    %2805 = vmatpush.msra.mxu0 %v1742
    %2806 = vmatpush.msra.mxu0 %v1734
    %2807 = vmatpush.msra.mxu0 %v1726
    %2808 = vmatpush.msra.mxu0 %v1718
    %2809 = vmatpush.msra.mxu0 %v1710
    %2810 = vmatpush.msra.mxu0 %v1702
    %2811 = vmatpush.msra.mxu0 %v1694
    %2812 = vmatpush.msra.mxu0 %v1686
    %2813 = vmatpush.msra.mxu0 %v1678
    %2814 = vmatpush.msra.mxu0 %v1670
    %2815 = vmatpush.msra.mxu0 %v1662
    %2816 = vmatmul.f32.gmra.mxu0 %v1015
    %v2817 = vpop.f32.mrf.mxu0
    %v2818 = vadd.f32 %v2798, %v2817
    %2819 = vdwg.mxu0
    %2820 = vmatpush.msra.mxu0 %v1910
    %2821 = vmatpush.msra.mxu0 %v1902
    %2822 = vmatpush.msra.mxu0 %v1894
    %2823 = vmatpush.msra.mxu0 %v1886
    %2824 = vmatpush.msra.mxu0 %v1878
    %2825 = vmatpush.msra.mxu0 %v1870
    %2826 = vmatpush.msra.mxu0 %v1862
    %2827 = vmatpush.msra.mxu0 %v1854
    %2828 = vmatpush.msra.mxu0 %v1846
    %2829 = vmatpush.msra.mxu0 %v1838
    %2830 = vmatpush.msra.mxu0 %v1830
    %2831 = vmatpush.msra.mxu0 %v1822
    %2832 = vmatpush.msra.mxu0 %v1814
    %2833 = vmatpush.msra.mxu0 %v1806
    %2834 = vmatpush.msra.mxu0 %v1798
    %2835 = vmatpush.msra.mxu0 %v1790
    %2836 = vmatmul.f32.gmra.mxu0 %v1016
    %v2837 = vpop.f32.mrf.mxu0
    %v2838 = vadd.f32 %v2818, %v2837
    %2839 = vdwg.mxu0
    %2840 = vmatpush.msra.mxu0 %v2038
    %2841 = vmatpush.msra.mxu0 %v2030
    %2842 = vmatpush.msra.mxu0 %v2022
    %2843 = vmatpush.msra.mxu0 %v2014
    %2844 = vmatpush.msra.mxu0 %v2006
    %2845 = vmatpush.msra.mxu0 %v1998
    %2846 = vmatpush.msra.mxu0 %v1990
    %2847 = vmatpush.msra.mxu0 %v1982
    %2848 = vmatpush.msra.mxu0 %v1974
    %2849 = vmatpush.msra.mxu0 %v1966
    %2850 = vmatpush.msra.mxu0 %v1958
    %2851 = vmatpush.msra.mxu0 %v1950
    %2852 = vmatpush.msra.mxu0 %v1942
    %2853 = vmatpush.msra.mxu0 %v1934
    %2854 = vmatpush.msra.mxu0 %v1926
    %2855 = vmatpush.msra.mxu0 %v1918
    %2856 = vmatmul.f32.gmra.mxu0 %v1017
    %v2857 = vpop.f32.mrf.mxu0
    %v2858 = vadd.f32 %v2838, %v2857
    %2859 = vdwg.mxu0
    %2860 = vmatpush.msra.mxu0 %v1143
    %2861 = vmatpush.msra.mxu0 %v1135
    %2862 = vmatpush.msra.mxu0 %v1127
    %2863 = vmatpush.msra.mxu0 %v1119
    %2864 = vmatpush.msra.mxu0 %v1111
    %2865 = vmatpush.msra.mxu0 %v1103
    %2866 = vmatpush.msra.mxu0 %v1095
    %2867 = vmatpush.msra.mxu0 %v1087
    %2868 = vmatpush.msra.mxu0 %v1079
    %2869 = vmatpush.msra.mxu0 %v1071
    %2870 = vmatpush.msra.mxu0 %v1063
    %2871 = vmatpush.msra.mxu0 %v1055
    %2872 = vmatpush.msra.mxu0 %v1047
    %2873 = vmatpush.msra.mxu0 %v1039
    %2874 = vmatpush.msra.mxu0 %v1031
    %2875 = vmatpush.msra.mxu0 %v1023
    %2876 = vmatmul.f32.gmra.mxu0 %v1010
    %v2877 = vpop.f32.mrf.mxu0
    %v2878 = vadd.f32 %v2049, %v2877
    %2879 = vdwg.mxu0
    %2880 = vmatpush.msra.mxu0 %v1271
    %2881 = vmatpush.msra.mxu0 %v1263
    %2882 = vmatpush.msra.mxu0 %v1255
    %2883 = vmatpush.msra.mxu0 %v1247
    %2884 = vmatpush.msra.mxu0 %v1239
    %2885 = vmatpush.msra.mxu0 %v1231
    %2886 = vmatpush.msra.mxu0 %v1223
    %2887 = vmatpush.msra.mxu0 %v1215
    %2888 = vmatpush.msra.mxu0 %v1207
    %2889 = vmatpush.msra.mxu0 %v1199
    %2890 = vmatpush.msra.mxu0 %v1191
    %2891 = vmatpush.msra.mxu0 %v1183
    %2892 = vmatpush.msra.mxu0 %v1175
    %2893 = vmatpush.msra.mxu0 %v1167
    %2894 = vmatpush.msra.mxu0 %v1159
    %2895 = vmatpush.msra.mxu0 %v1151
    %2896 = vmatmul.f32.gmra.mxu0 %v1011
    %v2897 = vpop.f32.mrf.mxu0
    %v2898 = vadd.f32 %v2878, %v2897
    %2899 = vdwg.mxu0
    %2900 = vmatpush.msra.mxu0 %v1399
    %2901 = vmatpush.msra.mxu0 %v1391
    %2902 = vmatpush.msra.mxu0 %v1383
    %2903 = vmatpush.msra.mxu0 %v1375
    %2904 = vmatpush.msra.mxu0 %v1367
    %2905 = vmatpush.msra.mxu0 %v1359
    %2906 = vmatpush.msra.mxu0 %v1351
    %2907 = vmatpush.msra.mxu0 %v1343
    %2908 = vmatpush.msra.mxu0 %v1335
    %2909 = vmatpush.msra.mxu0 %v1327
    %2910 = vmatpush.msra.mxu0 %v1319
    %2911 = vmatpush.msra.mxu0 %v1311
    %2912 = vmatpush.msra.mxu0 %v1303
    %2913 = vmatpush.msra.mxu0 %v1295
    %2914 = vmatpush.msra.mxu0 %v1287
    %2915 = vmatpush.msra.mxu0 %v1279
    %2916 = vmatmul.f32.gmra.mxu0 %v1012
    %v2917 = vpop.f32.mrf.mxu0
    %v2918 = vadd.f32 %v2898, %v2917
    %2919 = vdwg.mxu0
    %2920 = vmatpush.msra.mxu0 %v1527
    %2921 = vmatpush.msra.mxu0 %v1519
    %2922 = vmatpush.msra.mxu0 %v1511
    %2923 = vmatpush.msra.mxu0 %v1503
    %2924 = vmatpush.msra.mxu0 %v1495
    %2925 = vmatpush.msra.mxu0 %v1487
    %2926 = vmatpush.msra.mxu0 %v1479
    %2927 = vmatpush.msra.mxu0 %v1471
    %2928 = vmatpush.msra.mxu0 %v1463
    %2929 = vmatpush.msra.mxu0 %v1455
    %2930 = vmatpush.msra.mxu0 %v1447
    %2931 = vmatpush.msra.mxu0 %v1439
    %2932 = vmatpush.msra.mxu0 %v1431
    %2933 = vmatpush.msra.mxu0 %v1423
    %2934 = vmatpush.msra.mxu0 %v1415
    %2935 = vmatpush.msra.mxu0 %v1407
    %2936 = vmatmul.f32.gmra.mxu0 %v1013
    %v2937 = vpop.f32.mrf.mxu0
    %v2938 = vadd.f32 %v2918, %v2937
    %2939 = vdwg.mxu0
    %2940 = vmatpush.msra.mxu0 %v1655
    %2941 = vmatpush.msra.mxu0 %v1647
    %2942 = vmatpush.msra.mxu0 %v1639
    %2943 = vmatpush.msra.mxu0 %v1631
    %2944 = vmatpush.msra.mxu0 %v1623
    %2945 = vmatpush.msra.mxu0 %v1615
    %2946 = vmatpush.msra.mxu0 %v1607
    %2947 = vmatpush.msra.mxu0 %v1599
    %2948 = vmatpush.msra.mxu0 %v1591
    %2949 = vmatpush.msra.mxu0 %v1583
    %2950 = vmatpush.msra.mxu0 %v1575
    %2951 = vmatpush.msra.mxu0 %v1567
    %2952 = vmatpush.msra.mxu0 %v1559
    %2953 = vmatpush.msra.mxu0 %v1551
    %2954 = vmatpush.msra.mxu0 %v1543
    %2955 = vmatpush.msra.mxu0 %v1535
    %2956 = vmatmul.f32.gmra.mxu0 %v1014
    %v2957 = vpop.f32.mrf.mxu0
    %v2958 = vadd.f32 %v2938, %v2957
    %2959 = vdwg.mxu0
    %2960 = vmatpush.msra.mxu0 %v1783
    %2961 = vmatpush.msra.mxu0 %v1775
    %2962 = vmatpush.msra.mxu0 %v1767
    %2963 = vmatpush.msra.mxu0 %v1759
    %2964 = vmatpush.msra.mxu0 %v1751
    %2965 = vmatpush.msra.mxu0 %v1743
    %2966 = vmatpush.msra.mxu0 %v1735
    %2967 = vmatpush.msra.mxu0 %v1727
    %2968 = vmatpush.msra.mxu0 %v1719
    %2969 = vmatpush.msra.mxu0 %v1711
    %2970 = vmatpush.msra.mxu0 %v1703
    %2971 = vmatpush.msra.mxu0 %v1695
    %2972 = vmatpush.msra.mxu0 %v1687
    %2973 = vmatpush.msra.mxu0 %v1679
    %2974 = vmatpush.msra.mxu0 %v1671
    %2975 = vmatpush.msra.mxu0 %v1663
    %2976 = vmatmul.f32.gmra.mxu0 %v1015
    %v2977 = vpop.f32.mrf.mxu0
    %v2978 = vadd.f32 %v2958, %v2977
    %2979 = vdwg.mxu0
    %2980 = vmatpush.msra.mxu0 %v1911
    %2981 = vmatpush.msra.mxu0 %v1903
    %2982 = vmatpush.msra.mxu0 %v1895
    %2983 = vmatpush.msra.mxu0 %v1887
    %2984 = vmatpush.msra.mxu0 %v1879
    %2985 = vmatpush.msra.mxu0 %v1871
    %2986 = vmatpush.msra.mxu0 %v1863
    %2987 = vmatpush.msra.mxu0 %v1855
    %2988 = vmatpush.msra.mxu0 %v1847
    %2989 = vmatpush.msra.mxu0 %v1839
    %2990 = vmatpush.msra.mxu0 %v1831
    %2991 = vmatpush.msra.mxu0 %v1823
    %2992 = vmatpush.msra.mxu0 %v1815
    %2993 = vmatpush.msra.mxu0 %v1807
    %2994 = vmatpush.msra.mxu0 %v1799
    %2995 = vmatpush.msra.mxu0 %v1791
    %2996 = vmatmul.f32.gmra.mxu0 %v1016
    %v2997 = vpop.f32.mrf.mxu0
    %v2998 = vadd.f32 %v2978, %v2997
    %2999 = vdwg.mxu0
    %3000 = vmatpush.msra.mxu0 %v2039
    %3001 = vmatpush.msra.mxu0 %v2031
    %3002 = vmatpush.msra.mxu0 %v2023
    %3003 = vmatpush.msra.mxu0 %v2015
    %3004 = vmatpush.msra.mxu0 %v2007
    %3005 = vmatpush.msra.mxu0 %v1999
    %3006 = vmatpush.msra.mxu0 %v1991
    %3007 = vmatpush.msra.mxu0 %v1983
    %3008 = vmatpush.msra.mxu0 %v1975
    %3009 = vmatpush.msra.mxu0 %v1967
    %3010 = vmatpush.msra.mxu0 %v1959
    %3011 = vmatpush.msra.mxu0 %v1951
    %3012 = vmatpush.msra.mxu0 %v1943
    %3013 = vmatpush.msra.mxu0 %v1935
    %3014 = vmatpush.msra.mxu0 %v1927
    %3015 = vmatpush.msra.mxu0 %v1919
    %3016 = vmatmul.f32.gmra.mxu0 %v1017
    %v3017 = vpop.f32.mrf.mxu0
    %v3018 = vadd.f32 %v2998, %v3017
    %3019 = vdwg.mxu0
    %3020 = vmatpush.msra.mxu0 %v1144
    %3021 = vmatpush.msra.mxu0 %v1136
    %3022 = vmatpush.msra.mxu0 %v1128
    %3023 = vmatpush.msra.mxu0 %v1120
    %3024 = vmatpush.msra.mxu0 %v1112
    %3025 = vmatpush.msra.mxu0 %v1104
    %3026 = vmatpush.msra.mxu0 %v1096
    %3027 = vmatpush.msra.mxu0 %v1088
    %3028 = vmatpush.msra.mxu0 %v1080
    %3029 = vmatpush.msra.mxu0 %v1072
    %3030 = vmatpush.msra.mxu0 %v1064
    %3031 = vmatpush.msra.mxu0 %v1056
    %3032 = vmatpush.msra.mxu0 %v1048
    %3033 = vmatpush.msra.mxu0 %v1040
    %3034 = vmatpush.msra.mxu0 %v1032
    %3035 = vmatpush.msra.mxu0 %v1024
    %3036 = vmatmul.f32.gmra.mxu0 %v1010
    %v3037 = vpop.f32.mrf.mxu0
    %v3038 = vadd.f32 %v2050, %v3037
    %3039 = vdwg.mxu0
    %3040 = vmatpush.msra.mxu0 %v1272
    %3041 = vmatpush.msra.mxu0 %v1264
    %3042 = vmatpush.msra.mxu0 %v1256
    %3043 = vmatpush.msra.mxu0 %v1248
    %3044 = vmatpush.msra.mxu0 %v1240
    %3045 = vmatpush.msra.mxu0 %v1232
    %3046 = vmatpush.msra.mxu0 %v1224
    %3047 = vmatpush.msra.mxu0 %v1216
    %3048 = vmatpush.msra.mxu0 %v1208
    %3049 = vmatpush.msra.mxu0 %v1200
    %3050 = vmatpush.msra.mxu0 %v1192
    %3051 = vmatpush.msra.mxu0 %v1184
    %3052 = vmatpush.msra.mxu0 %v1176
    %3053 = vmatpush.msra.mxu0 %v1168
    %3054 = vmatpush.msra.mxu0 %v1160
    %3055 = vmatpush.msra.mxu0 %v1152
    %3056 = vmatmul.f32.gmra.mxu0 %v1011
    %v3057 = vpop.f32.mrf.mxu0
    %v3058 = vadd.f32 %v3038, %v3057
    %3059 = vdwg.mxu0
    %3060 = vmatpush.msra.mxu0 %v1400
    %3061 = vmatpush.msra.mxu0 %v1392
    %3062 = vmatpush.msra.mxu0 %v1384
    %3063 = vmatpush.msra.mxu0 %v1376
    %3064 = vmatpush.msra.mxu0 %v1368
    %3065 = vmatpush.msra.mxu0 %v1360
    %3066 = vmatpush.msra.mxu0 %v1352
    %3067 = vmatpush.msra.mxu0 %v1344
    %3068 = vmatpush.msra.mxu0 %v1336
    %3069 = vmatpush.msra.mxu0 %v1328
    %3070 = vmatpush.msra.mxu0 %v1320
    %3071 = vmatpush.msra.mxu0 %v1312
    %3072 = vmatpush.msra.mxu0 %v1304
    %3073 = vmatpush.msra.mxu0 %v1296
    %3074 = vmatpush.msra.mxu0 %v1288
    %3075 = vmatpush.msra.mxu0 %v1280
    %3076 = vmatmul.f32.gmra.mxu0 %v1012
    %v3077 = vpop.f32.mrf.mxu0
    %v3078 = vadd.f32 %v3058, %v3077
    %3079 = vdwg.mxu0
    %3080 = vmatpush.msra.mxu0 %v1528
    %3081 = vmatpush.msra.mxu0 %v1520
    %3082 = vmatpush.msra.mxu0 %v1512
    %3083 = vmatpush.msra.mxu0 %v1504
    %3084 = vmatpush.msra.mxu0 %v1496
    %3085 = vmatpush.msra.mxu0 %v1488
    %3086 = vmatpush.msra.mxu0 %v1480
    %3087 = vmatpush.msra.mxu0 %v1472
    %3088 = vmatpush.msra.mxu0 %v1464
    %3089 = vmatpush.msra.mxu0 %v1456
    %3090 = vmatpush.msra.mxu0 %v1448
    %3091 = vmatpush.msra.mxu0 %v1440
    %3092 = vmatpush.msra.mxu0 %v1432
    %3093 = vmatpush.msra.mxu0 %v1424
    %3094 = vmatpush.msra.mxu0 %v1416
    %3095 = vmatpush.msra.mxu0 %v1408
    %3096 = vmatmul.f32.gmra.mxu0 %v1013
    %v3097 = vpop.f32.mrf.mxu0
    %v3098 = vadd.f32 %v3078, %v3097
    %3099 = vdwg.mxu0
    %3100 = vmatpush.msra.mxu0 %v1656
    %3101 = vmatpush.msra.mxu0 %v1648
    %3102 = vmatpush.msra.mxu0 %v1640
    %3103 = vmatpush.msra.mxu0 %v1632
    %3104 = vmatpush.msra.mxu0 %v1624
    %3105 = vmatpush.msra.mxu0 %v1616
    %3106 = vmatpush.msra.mxu0 %v1608
    %3107 = vmatpush.msra.mxu0 %v1600
    %3108 = vmatpush.msra.mxu0 %v1592
    %3109 = vmatpush.msra.mxu0 %v1584
    %3110 = vmatpush.msra.mxu0 %v1576
    %3111 = vmatpush.msra.mxu0 %v1568
    %3112 = vmatpush.msra.mxu0 %v1560
    %3113 = vmatpush.msra.mxu0 %v1552
    %3114 = vmatpush.msra.mxu0 %v1544
    %3115 = vmatpush.msra.mxu0 %v1536
    %3116 = vmatmul.f32.gmra.mxu0 %v1014
    %v3117 = vpop.f32.mrf.mxu0
    %v3118 = vadd.f32 %v3098, %v3117
    %3119 = vdwg.mxu0
    %3120 = vmatpush.msra.mxu0 %v1784
    %3121 = vmatpush.msra.mxu0 %v1776
    %3122 = vmatpush.msra.mxu0 %v1768
    %3123 = vmatpush.msra.mxu0 %v1760
    %3124 = vmatpush.msra.mxu0 %v1752
    %3125 = vmatpush.msra.mxu0 %v1744
    %3126 = vmatpush.msra.mxu0 %v1736
    %3127 = vmatpush.msra.mxu0 %v1728
    %3128 = vmatpush.msra.mxu0 %v1720
    %3129 = vmatpush.msra.mxu0 %v1712
    %3130 = vmatpush.msra.mxu0 %v1704
    %3131 = vmatpush.msra.mxu0 %v1696
    %3132 = vmatpush.msra.mxu0 %v1688
    %3133 = vmatpush.msra.mxu0 %v1680
    %3134 = vmatpush.msra.mxu0 %v1672
    %3135 = vmatpush.msra.mxu0 %v1664
    %3136 = vmatmul.f32.gmra.mxu0 %v1015
    %v3137 = vpop.f32.mrf.mxu0
    %v3138 = vadd.f32 %v3118, %v3137
    %3139 = vdwg.mxu0
    %3140 = vmatpush.msra.mxu0 %v1912
    %3141 = vmatpush.msra.mxu0 %v1904
    %3142 = vmatpush.msra.mxu0 %v1896
    %3143 = vmatpush.msra.mxu0 %v1888
    %3144 = vmatpush.msra.mxu0 %v1880
    %3145 = vmatpush.msra.mxu0 %v1872
    %3146 = vmatpush.msra.mxu0 %v1864
    %3147 = vmatpush.msra.mxu0 %v1856
    %3148 = vmatpush.msra.mxu0 %v1848
    %3149 = vmatpush.msra.mxu0 %v1840
    %3150 = vmatpush.msra.mxu0 %v1832
    %3151 = vmatpush.msra.mxu0 %v1824
    %3152 = vmatpush.msra.mxu0 %v1816
    %3153 = vmatpush.msra.mxu0 %v1808
    %3154 = vmatpush.msra.mxu0 %v1800
    %3155 = vmatpush.msra.mxu0 %v1792
    %3156 = vmatmul.f32.gmra.mxu0 %v1016
    %v3157 = vpop.f32.mrf.mxu0
    %v3158 = vadd.f32 %v3138, %v3157
    %3159 = vdwg.mxu0
    %3160 = vmatpush.msra.mxu0 %v2040
    %3161 = vmatpush.msra.mxu0 %v2032
    %3162 = vmatpush.msra.mxu0 %v2024
    %3163 = vmatpush.msra.mxu0 %v2016
    %3164 = vmatpush.msra.mxu0 %v2008
    %3165 = vmatpush.msra.mxu0 %v2000
    %3166 = vmatpush.msra.mxu0 %v1992
    %3167 = vmatpush.msra.mxu0 %v1984
    %3168 = vmatpush.msra.mxu0 %v1976
    %3169 = vmatpush.msra.mxu0 %v1968
    %3170 = vmatpush.msra.mxu0 %v1960
    %3171 = vmatpush.msra.mxu0 %v1952
    %3172 = vmatpush.msra.mxu0 %v1944
    %3173 = vmatpush.msra.mxu0 %v1936
    %3174 = vmatpush.msra.mxu0 %v1928
    %3175 = vmatpush.msra.mxu0 %v1920
    %3176 = vmatmul.f32.gmra.mxu0 %v1017
    %v3177 = vpop.f32.mrf.mxu0
    %v3178 = vadd.f32 %v3158, %v3177
    %3179 = vdwg.mxu0
    %3180 = vmatpush.msra.mxu0 %v1145
    %3181 = vmatpush.msra.mxu0 %v1137
    %3182 = vmatpush.msra.mxu0 %v1129
    %3183 = vmatpush.msra.mxu0 %v1121
    %3184 = vmatpush.msra.mxu0 %v1113
    %3185 = vmatpush.msra.mxu0 %v1105
    %3186 = vmatpush.msra.mxu0 %v1097
    %3187 = vmatpush.msra.mxu0 %v1089
    %3188 = vmatpush.msra.mxu0 %v1081
    %3189 = vmatpush.msra.mxu0 %v1073
    %3190 = vmatpush.msra.mxu0 %v1065
    %3191 = vmatpush.msra.mxu0 %v1057
    %3192 = vmatpush.msra.mxu0 %v1049
    %3193 = vmatpush.msra.mxu0 %v1041
    %3194 = vmatpush.msra.mxu0 %v1033
    %3195 = vmatpush.msra.mxu0 %v1025
    %3196 = vmatmul.f32.gmra.mxu0 %v1010
    %v3197 = vpop.f32.mrf.mxu0
    %v3198 = vadd.f32 %v2051, %v3197
    %3199 = vdwg.mxu0
    %3200 = vmatpush.msra.mxu0 %v1273
    %3201 = vmatpush.msra.mxu0 %v1265
    %3202 = vmatpush.msra.mxu0 %v1257
    %3203 = vmatpush.msra.mxu0 %v1249
    %3204 = vmatpush.msra.mxu0 %v1241
    %3205 = vmatpush.msra.mxu0 %v1233
    %3206 = vmatpush.msra.mxu0 %v1225
    %3207 = vmatpush.msra.mxu0 %v1217
    %3208 = vmatpush.msra.mxu0 %v1209
    %3209 = vmatpush.msra.mxu0 %v1201
    %3210 = vmatpush.msra.mxu0 %v1193
    %3211 = vmatpush.msra.mxu0 %v1185
    %3212 = vmatpush.msra.mxu0 %v1177
    %3213 = vmatpush.msra.mxu0 %v1169
    %3214 = vmatpush.msra.mxu0 %v1161
    %3215 = vmatpush.msra.mxu0 %v1153
    %3216 = vmatmul.f32.gmra.mxu0 %v1011
    %v3217 = vpop.f32.mrf.mxu0
    %v3218 = vadd.f32 %v3198, %v3217
    %3219 = vdwg.mxu0
    %3220 = vmatpush.msra.mxu0 %v1401
    %3221 = vmatpush.msra.mxu0 %v1393
    %3222 = vmatpush.msra.mxu0 %v1385
    %3223 = vmatpush.msra.mxu0 %v1377
    %3224 = vmatpush.msra.mxu0 %v1369
    %3225 = vmatpush.msra.mxu0 %v1361
    %3226 = vmatpush.msra.mxu0 %v1353
    %3227 = vmatpush.msra.mxu0 %v1345
    %3228 = vmatpush.msra.mxu0 %v1337
    %3229 = vmatpush.msra.mxu0 %v1329
    %3230 = vmatpush.msra.mxu0 %v1321
    %3231 = vmatpush.msra.mxu0 %v1313
    %3232 = vmatpush.msra.mxu0 %v1305
    %3233 = vmatpush.msra.mxu0 %v1297
    %3234 = vmatpush.msra.mxu0 %v1289
    %3235 = vmatpush.msra.mxu0 %v1281
    %3236 = vmatmul.f32.gmra.mxu0 %v1012
    %v3237 = vpop.f32.mrf.mxu0
    %v3238 = vadd.f32 %v3218, %v3237
    %3239 = vdwg.mxu0
    %3240 = vmatpush.msra.mxu0 %v1529
    %3241 = vmatpush.msra.mxu0 %v1521
    %3242 = vmatpush.msra.mxu0 %v1513
    %3243 = vmatpush.msra.mxu0 %v1505
    %3244 = vmatpush.msra.mxu0 %v1497
    %3245 = vmatpush.msra.mxu0 %v1489
    %3246 = vmatpush.msra.mxu0 %v1481
    %3247 = vmatpush.msra.mxu0 %v1473
    %3248 = vmatpush.msra.mxu0 %v1465
    %3249 = vmatpush.msra.mxu0 %v1457
    %3250 = vmatpush.msra.mxu0 %v1449
    %3251 = vmatpush.msra.mxu0 %v1441
    %3252 = vmatpush.msra.mxu0 %v1433
    %3253 = vmatpush.msra.mxu0 %v1425
    %3254 = vmatpush.msra.mxu0 %v1417
    %3255 = vmatpush.msra.mxu0 %v1409
    %3256 = vmatmul.f32.gmra.mxu0 %v1013
    %v3257 = vpop.f32.mrf.mxu0
    %v3258 = vadd.f32 %v3238, %v3257
    %3259 = vdwg.mxu0
    %3260 = vmatpush.msra.mxu0 %v1657
    %3261 = vmatpush.msra.mxu0 %v1649
    %3262 = vmatpush.msra.mxu0 %v1641
    %3263 = vmatpush.msra.mxu0 %v1633
    %3264 = vmatpush.msra.mxu0 %v1625
    %3265 = vmatpush.msra.mxu0 %v1617
    %3266 = vmatpush.msra.mxu0 %v1609
    %3267 = vmatpush.msra.mxu0 %v1601
    %3268 = vmatpush.msra.mxu0 %v1593
    %3269 = vmatpush.msra.mxu0 %v1585
    %3270 = vmatpush.msra.mxu0 %v1577
    %3271 = vmatpush.msra.mxu0 %v1569
    %3272 = vmatpush.msra.mxu0 %v1561
    %3273 = vmatpush.msra.mxu0 %v1553
    %3274 = vmatpush.msra.mxu0 %v1545
    %3275 = vmatpush.msra.mxu0 %v1537
    %3276 = vmatmul.f32.gmra.mxu0 %v1014
    %v3277 = vpop.f32.mrf.mxu0
    %v3278 = vadd.f32 %v3258, %v3277
    %3279 = vdwg.mxu0
    %3280 = vmatpush.msra.mxu0 %v1785
    %3281 = vmatpush.msra.mxu0 %v1777
    %3282 = vmatpush.msra.mxu0 %v1769
    %3283 = vmatpush.msra.mxu0 %v1761
    %3284 = vmatpush.msra.mxu0 %v1753
    %3285 = vmatpush.msra.mxu0 %v1745
    %3286 = vmatpush.msra.mxu0 %v1737
    %3287 = vmatpush.msra.mxu0 %v1729
    %3288 = vmatpush.msra.mxu0 %v1721
    %3289 = vmatpush.msra.mxu0 %v1713
    %3290 = vmatpush.msra.mxu0 %v1705
    %3291 = vmatpush.msra.mxu0 %v1697
    %3292 = vmatpush.msra.mxu0 %v1689
    %3293 = vmatpush.msra.mxu0 %v1681
    %3294 = vmatpush.msra.mxu0 %v1673
    %3295 = vmatpush.msra.mxu0 %v1665
    %3296 = vmatmul.f32.gmra.mxu0 %v1015
    %v3297 = vpop.f32.mrf.mxu0
    %v3298 = vadd.f32 %v3278, %v3297
    %3299 = vdwg.mxu0
    %3300 = vmatpush.msra.mxu0 %v1913
    %3301 = vmatpush.msra.mxu0 %v1905
    %3302 = vmatpush.msra.mxu0 %v1897
    %3303 = vmatpush.msra.mxu0 %v1889
    %3304 = vmatpush.msra.mxu0 %v1881
    %3305 = vmatpush.msra.mxu0 %v1873
    %3306 = vmatpush.msra.mxu0 %v1865
    %3307 = vmatpush.msra.mxu0 %v1857
    %3308 = vmatpush.msra.mxu0 %v1849
    %3309 = vmatpush.msra.mxu0 %v1841
    %3310 = vmatpush.msra.mxu0 %v1833
    %3311 = vmatpush.msra.mxu0 %v1825
    %3312 = vmatpush.msra.mxu0 %v1817
    %3313 = vmatpush.msra.mxu0 %v1809
    %3314 = vmatpush.msra.mxu0 %v1801
    %3315 = vmatpush.msra.mxu0 %v1793
    %3316 = vmatmul.f32.gmra.mxu0 %v1016
    %v3317 = vpop.f32.mrf.mxu0
    %v3318 = vadd.f32 %v3298, %v3317
    %3319 = vdwg.mxu0
    %3320 = vmatpush.msra.mxu0 %v2041
    %3321 = vmatpush.msra.mxu0 %v2033
    %3322 = vmatpush.msra.mxu0 %v2025
    %3323 = vmatpush.msra.mxu0 %v2017
    %3324 = vmatpush.msra.mxu0 %v2009
    %3325 = vmatpush.msra.mxu0 %v2001
    %3326 = vmatpush.msra.mxu0 %v1993
    %3327 = vmatpush.msra.mxu0 %v1985
    %3328 = vmatpush.msra.mxu0 %v1977
    %3329 = vmatpush.msra.mxu0 %v1969
    %3330 = vmatpush.msra.mxu0 %v1961
    %3331 = vmatpush.msra.mxu0 %v1953
    %3332 = vmatpush.msra.mxu0 %v1945
    %3333 = vmatpush.msra.mxu0 %v1937
    %3334 = vmatpush.msra.mxu0 %v1929
    %3335 = vmatpush.msra.mxu0 %v1921
    %3336 = vmatmul.f32.gmra.mxu0 %v1017
    %v3337 = vpop.f32.mrf.mxu0
    %v3338 = vadd.f32 %v3318, %v3337
    %3339 = vdwg.mxu0
    %v3340 = vmul.f32 %v2218, %v2218
    %v3341 = vmul.f32 %v2378, %v2378
    %v3342 = vmul.f32 %v2538, %v2538
    %v3343 = vmul.f32 %v2698, %v2698
    %v3344 = vmul.f32 %v2858, %v2858
    %v3345 = vmul.f32 %v3018, %v3018
    %v3346 = vadd.f32 %v3340, %v3341
    %v3347 = vadd.f32 %v3346, %v3342
    %v3348 = vadd.f32 %v3347, %v3343
    %v3349 = vadd.f32 %v3348, %v3344
    %v3350 = vadd.f32 %v3349, %v3345
    %3351 = vadd.xlane.f32.xlu0 %v3350
    %v3352 = vpop.xlane.xlu0 %3351
    %vm3353 = vcmask 7168
    %3354 = vst.msk [vmem:[%s17] sm:$0xff] %vm3353, %v3352
    %v3355 = vld [vmem:[#allocation15] sm:$0x3f]
    %v3357 = vperm.slane %v3355, 0
    %v3358 = vperm.slane %v3355, 2
    %v3359 = vperm.slane %v3355, 4
    %v3360 = vperm.slane %v3355, 5
    %v3365 = vadd.f32 %v2218, %v3357
    %v3366 = vadd.f32 %v2538, %v3358
    %v3367 = vadd.f32 %v2858, %v3359
    %v3368 = vadd.f32 %v3018, %v3360
    %v3369 = vand.u32 2147483647, %v3365
    %v3370 = vsub.f32 0.0, %v3369
    %v3371 = vmul.f32 %v3370, 1.442695
    %v3372 = vpow.pop %v3371
    %vm3373 = vcmp.ge.f32.partialorder %v3365, 0.0
    %v3374 = vadd.f32 %v3372, 1.0
    %v3375 = vrcp.pop %v3374
    %v3376 = vmul.f32 %v3374, %v3375
    %v3377 = vsub.f32 1.0, %v3376
    %v3378 = vmul.f32 %v3375, %v3377
    %v3379 = vadd.f32 %v3375, %v3378
    %vm3380 = vweird.f32 %v3374
    %vm3381 = vweird.f32 %v3375
    %vm3382 = vmor %vm3380, %vm3381
    %v3383 = vsel %vm3382, %v3375, %v3379
    %v3384 = vand.u32 2147483647, %v3374
    %vm3385 = vcmp.eq.f32.partialorder %v3384, 8.507059e+37
    %v3386 = vand.u32 %v3374, 2147483648
    %v3387 = vor.u32 1.1754944e-38, %v3386
    %v3388 = vsel %vm3385, %v3387, %v3383
    %v3389 = vmul.f32 1.0, %v3388
    %v3390 = vmul.f32 %v3372, %v3388
    %v3391 = vsel %vm3373, %v3389, %v3390
    %v3392 = vadd.f32 %v3391, 0.01
    %v3393 = vmul.f32 %v3366, 6.2831855
    %v3394 = vmul.f32 %v3367, 5.0
    %v3395 = vtanh.pop %v3394
    %v3396 = vmul.f32 %v3368, 5.0
    %v3397 = vtanh.pop %v3396
    %v3398 = vand.u32 2147483647, %v3393
    %vm3399 = vcmp.le.f32.partialorder %v3398, 0.7853982
    %vm3400 = vcmp.lt.s32.totalorder %v3393, 0
    %v3401 = vand.u32 %v3393, 2139095040
    %v3402 = vshrl.u32 %v3401, 23
    %v3403 = vsub.s32 %v3402, 127
    %v3404 = vand.u32 2147483647, %v3393
    %v3405 = vand.u32 %v3404, 8388607
    %v3406 = vor.u32 %v3405, 8388608
    %v3407 = vsub.s32 0, %v3406
    %v3408 = vadd.s32 %v3403, 1
    %vm3409 = vcmp.gt.s32.totalorder %v3408, 0
    %v3410 = vsel %vm3409, %v3408, 0
    %v3411 = vshrl.u32 %v3410, 5
    %v3412 = vand.u32 %v3410, 31
    %v3413 = vsub.s32 32, %v3412
    %v3414 = vshrl.u32 683565275, %v3413
    %v3415 = vshll.u32 683565275, %v3412
    %v3416 = vshrl.u32 2475754826, %v3413
    %v3417 = vor.u32 %v3415, %v3416
    %v3418 = vshll.u32 2475754826, %v3412
    %v3419 = vshrl.u32 2131351028, %v3413
    %v3420 = vor.u32 %v3418, %v3419
    %v3421 = vshll.u32 2131351028, %v3412
    %v3422 = vshrl.u32 2102212464, %v3413
    %v3423 = vor.u32 %v3421, %v3422
    %v3424 = vshll.u32 2102212464, %v3412
    %v3425 = vshrl.u32 920167782, %v3413
    %v3426 = vor.u32 %v3424, %v3425
    %v3427 = vshll.u32 920167782, %v3412
    %v3428 = vshrl.u32 1326507024, %v3413
    %v3429 = vor.u32 %v3427, %v3428
    %vm3430 = vcmp.lt.s32.totalorder %v3411, 1
    %vm3431 = vcmp.lt.s32.totalorder %v3411, 2
    %vm3432 = vcmp.lt.s32.totalorder %v3411, 3
    %vm3433 = vcmp.lt.s32.totalorder %v3411, 4
    %v3434 = vsel %vm3430, %v3414, %v3417
    %v3435 = vsel %vm3433, %v3423, 2102212464
    %v3436 = vsel %vm3432, %v3420, %v3435
    %v3437 = vsel %vm3431, %v3434, %v3436
    %v3438 = vsel %vm3430, %v3417, %v3420
    %v3439 = vsel %vm3433, %v3426, 920167782
    %v3440 = vsel %vm3432, %v3423, %v3439
    %v3441 = vsel %vm3431, %v3438, %v3440
    %v3442 = vsel %vm3430, %v3420, %v3423
    %v3443 = vsel %vm3433, %v3429, 1326507024
    %v3444 = vsel %vm3432, %v3426, %v3443
    %v3445 = vsel %vm3431, %v3442, %v3444
    %v3446 = vshll.u32 %v3406, 8
    %v3447 = vand.u32 %v3446, 65535
    %v3448 = vshrl.u32 %v3446, 16
    %v3449 = vand.u32 %v3445, 65535
    %v3450 = vshrl.u32 %v3445, 16
    %v3451 = vmul.u32 %v3447, %v3449
    %v3452 = vmul.u32 %v3447, %v3450
    %v3453 = vmul.u32 %v3448, %v3449
    %v3454 = vmul.u32 %v3448, %v3450
    %v3455 = vshll.u32 %v3452, 16
    %v3456 = vshrl.u32 %v3452, 16
    %v3457 = vshll.u32 %v3453, 16
    %v3458 = vshrl.u32 %v3453, 16
    %vm3459 = vc.u32 %v3451, %v3455
    %v3460 = vsel %vm3459, 1, 0
    %v3461 = vadd.s32 %v3451, %v3455
    %v3462 = vadd.s32 %v3454, %v3460
    %vm3463 = vc.u32 %v3461, %v3457
    %v3464 = vsel %vm3463, 1, 0
    %v3465 = vadd.s32 %v3461, %v3457
    %v3466 = vadd.s32 %v3462, %v3464
    %v3467 = vadd.s32 %v3466, %v3456
    %v3468 = vadd.s32 %v3467, %v3458
    %v3469 = vand.u32 %v3446, 65535
    %v3470 = vshrl.u32 %v3446, 16
    %v3471 = vand.u32 %v3441, 65535
    %v3472 = vshrl.u32 %v3441, 16
    %v3473 = vmul.u32 %v3469, %v3471
    %v3474 = vmul.u32 %v3469, %v3472
    %v3475 = vmul.u32 %v3470, %v3471
    %v3476 = vmul.u32 %v3470, %v3472
    %v3477 = vshll.u32 %v3474, 16
    %v3478 = vshrl.u32 %v3474, 16
    %v3479 = vshll.u32 %v3475, 16
    %v3480 = vshrl.u32 %v3475, 16
    %vm3481 = vc.u32 %v3473, %v3477
    %v3482 = vsel %vm3481, 1, 0
    %v3483 = vadd.s32 %v3473, %v3477
    %v3484 = vadd.s32 %v3476, %v3482
    %vm3485 = vc.u32 %v3483, %v3479
    %v3486 = vsel %vm3485, 1, 0
    %v3487 = vadd.s32 %v3483, %v3479
    %v3488 = vadd.s32 %v3484, %v3486
    %v3489 = vadd.s32 %v3488, %v3478
    %v3490 = vadd.s32 %v3489, %v3480
    %v3491 = vmul.u32 %v3446, %v3437
    %v3492 = vadd.s32 %v3468, %v3487
    %vm3493 = vc.u32 %v3468, %v3487
    %v3494 = vadd.s32 %v3490, 1
    %v3495 = vsel %vm3493, %v3494, %v3490
    %v3496 = vadd.s32 %v3491, %v3495
    %v3497 = vadd.s32 %v3496, 536870912
    %v3498 = vshrl.u32 %v3497, 30
    %v3499 = vshll.u32 %v3498, 30
    %v3500 = vsub.s32 %v3496, %v3499
    %vm3501 = vcmp.lt.s32.totalorder %v3500, 0
    %v3502 = vsub.s32 0, %v3500
    %v3503 = vsel %vm3501, %v3502, %v3500
    %v3504 = vclz %v3503
    %v3505 = vsub.s32 %v3504, 2
    %vm3506 = vcmp.gt.s32.totalorder 0, %v3505
    %v3507 = vsel %vm3506, 0, %v3505
    %v3508 = vsub.s32 32, %v3507
    %v3509 = vshll.u32 %v3500, %v3507
    %v3510 = vshrl.u32 %v3492, %v3508
    %v3511 = vor.u32 %v3509, %v3510
    %v3512 = vsub.s32 4294967266, %v3507
    %v3513 = vadd.s32 %v3512, 127
    %v3514 = vshll.u32 %v3513, 23
    %v3515 = vor.u32 4788187, %v3514
    %v3516 = vand.u32 2147483647, %v3515
    %v3518 = vcvt.s32.f32 %v3511
    %v3519 = vmul.f32 %v3518, %v3516
    %v3520 = vxor.u32 %v3519, 2147483648
    %v3521 = vsel %vm3400, %v3520, %v3519
    %v3522 = vsub.s32 4, %v3498
    %v3523 = vsel %vm3400, %v3522, %v3498
    %v3524 = vsel %vm3399, %v3393, %v3521
    %v3525 = vsel %vm3399, 0, %v3523
    %v3526 = vmul.f32 %v3524, %v3524
    %v3527 = vmul.f32 %v3526, -0.001358992
    %v3528 = vadd.f32 %v3527, 0.041655596
    %v3529 = vmul.f32 %v3526, %v3528
    %v3530 = vadd.f32 %v3529, -0.4999988
    %v3531 = vmul.f32 %v3526, %v3530
    %v3532 = vadd.f32 1.0, %v3531
    %v3533 = vmul.f32 %v3524, %v3524
    %v3534 = vmul.f32 %v3533, -0.00019511016
    %v3535 = vadd.f32 %v3534, 0.008332121
    %v3536 = vmul.f32 %v3533, %v3535
    %v3537 = vadd.f32 %v3536, -0.16666654
    %v3538 = vmul.f32 %v3533, %v3537
    %v3539 = vadd.f32 %v3538, 1.0
    %v3540 = vmul.f32 %v3539, %v3524
    %vm3541 = vweird.f32 %v3393
    %v3542 = vand.u32 %v3525, 3
    %vm3543 = vcmp.lt.s32.totalorder %v3542, 2
    %vm3544 = vcmp.eq.s32.totalorder %v3542, 0
    %v3545 = vxor.u32 %v3540, 2147483648
    %v3546 = vsel %vm3544, %v3532, %v3545
    %vm3547 = vcmp.eq.s32.totalorder %v3542, 2
    %v3548 = vxor.u32 %v3532, 2147483648
    %v3549 = vsel %vm3547, %v3548, %v3540
    %v3550 = vsel %vm3543, %v3546, %v3549
    %v3551 = vsel %vm3541, nan, %v3550
    %v3552 = vand.u32 2147483647, %v3393
    %vm3553 = vcmp.le.f32.partialorder %v3552, 0.7853982
    %vm3554 = vcmp.lt.s32.totalorder %v3393, 0
    %v3555 = vand.u32 %v3393, 2139095040
    %v3556 = vshrl.u32 %v3555, 23
    %v3557 = vsub.s32 %v3556, 127
    %v3558 = vand.u32 2147483647, %v3393
    %v3559 = vand.u32 %v3558, 8388607
    %v3560 = vor.u32 %v3559, 8388608
    %v3561 = vsub.s32 0, %v3560
    %v3562 = vadd.s32 %v3557, 1
    %vm3563 = vcmp.gt.s32.totalorder %v3562, 0
    %v3564 = vsel %vm3563, %v3562, 0
    %v3565 = vshrl.u32 %v3564, 5
    %v3566 = vand.u32 %v3564, 31
    %v3567 = vsub.s32 32, %v3566
    %v3568 = vshrl.u32 683565275, %v3567
    %v3569 = vshll.u32 683565275, %v3566
    %v3570 = vshrl.u32 2475754826, %v3567
    %v3571 = vor.u32 %v3569, %v3570
    %v3572 = vshll.u32 2475754826, %v3566
    %v3573 = vshrl.u32 2131351028, %v3567
    %v3574 = vor.u32 %v3572, %v3573
    %v3575 = vshll.u32 2131351028, %v3566
    %v3576 = vshrl.u32 2102212464, %v3567
    %v3577 = vor.u32 %v3575, %v3576
    %v3578 = vshll.u32 2102212464, %v3566
    %v3579 = vshrl.u32 920167782, %v3567
    %v3580 = vor.u32 %v3578, %v3579
    %v3581 = vshll.u32 920167782, %v3566
    %v3582 = vshrl.u32 1326507024, %v3567
    %v3583 = vor.u32 %v3581, %v3582
    %vm3584 = vcmp.lt.s32.totalorder %v3565, 1
    %vm3585 = vcmp.lt.s32.totalorder %v3565, 2
    %vm3586 = vcmp.lt.s32.totalorder %v3565, 3
    %vm3587 = vcmp.lt.s32.totalorder %v3565, 4
    %v3588 = vsel %vm3584, %v3568, %v3571
    %v3589 = vsel %vm3587, %v3577, 2102212464
    %v3590 = vsel %vm3586, %v3574, %v3589
    %v3591 = vsel %vm3585, %v3588, %v3590
    %v3592 = vsel %vm3584, %v3571, %v3574
    %v3593 = vsel %vm3587, %v3580, 920167782
    %v3594 = vsel %vm3586, %v3577, %v3593
    %v3595 = vsel %vm3585, %v3592, %v3594
    %v3596 = vsel %vm3584, %v3574, %v3577
    %v3597 = vsel %vm3587, %v3583, 1326507024
    %v3598 = vsel %vm3586, %v3580, %v3597
    %v3599 = vsel %vm3585, %v3596, %v3598
    %v3600 = vshll.u32 %v3560, 8
    %v3601 = vand.u32 %v3600, 65535
    %v3602 = vshrl.u32 %v3600, 16
    %v3603 = vand.u32 %v3599, 65535
    %v3604 = vshrl.u32 %v3599, 16
    %v3605 = vmul.u32 %v3601, %v3603
    %v3606 = vmul.u32 %v3601, %v3604
    %v3607 = vmul.u32 %v3602, %v3603
    %v3608 = vmul.u32 %v3602, %v3604
    %v3609 = vshll.u32 %v3606, 16
    %v3610 = vshrl.u32 %v3606, 16
    %v3611 = vshll.u32 %v3607, 16
    %v3612 = vshrl.u32 %v3607, 16
    %vm3613 = vc.u32 %v3605, %v3609
    %v3614 = vsel %vm3613, 1, 0
    %v3615 = vadd.s32 %v3605, %v3609
    %v3616 = vadd.s32 %v3608, %v3614
    %vm3617 = vc.u32 %v3615, %v3611
    %v3618 = vsel %vm3617, 1, 0
    %v3619 = vadd.s32 %v3615, %v3611
    %v3620 = vadd.s32 %v3616, %v3618
    %v3621 = vadd.s32 %v3620, %v3610
    %v3622 = vadd.s32 %v3621, %v3612
    %v3623 = vand.u32 %v3600, 65535
    %v3624 = vshrl.u32 %v3600, 16
    %v3625 = vand.u32 %v3595, 65535
    %v3626 = vshrl.u32 %v3595, 16
    %v3627 = vmul.u32 %v3623, %v3625
    %v3628 = vmul.u32 %v3623, %v3626
    %v3629 = vmul.u32 %v3624, %v3625
    %v3630 = vmul.u32 %v3624, %v3626
    %v3631 = vshll.u32 %v3628, 16
    %v3632 = vshrl.u32 %v3628, 16
    %v3633 = vshll.u32 %v3629, 16
    %v3634 = vshrl.u32 %v3629, 16
    %vm3635 = vc.u32 %v3627, %v3631
    %v3636 = vsel %vm3635, 1, 0
    %v3637 = vadd.s32 %v3627, %v3631
    %v3638 = vadd.s32 %v3630, %v3636
    %vm3639 = vc.u32 %v3637, %v3633
    %v3640 = vsel %vm3639, 1, 0
    %v3641 = vadd.s32 %v3637, %v3633
    %v3642 = vadd.s32 %v3638, %v3640
    %v3643 = vadd.s32 %v3642, %v3632
    %v3644 = vadd.s32 %v3643, %v3634
    %v3645 = vmul.u32 %v3600, %v3591
    %v3646 = vadd.s32 %v3622, %v3641
    %vm3647 = vc.u32 %v3622, %v3641
    %v3648 = vadd.s32 %v3644, 1
    %v3649 = vsel %vm3647, %v3648, %v3644
    %v3650 = vadd.s32 %v3645, %v3649
    %v3651 = vadd.s32 %v3650, 536870912
    %v3652 = vshrl.u32 %v3651, 30
    %v3653 = vshll.u32 %v3652, 30
    %v3654 = vsub.s32 %v3650, %v3653
    %vm3655 = vcmp.lt.s32.totalorder %v3654, 0
    %v3656 = vsub.s32 0, %v3654
    %v3657 = vsel %vm3655, %v3656, %v3654
    %v3658 = vclz %v3657
    %v3659 = vsub.s32 %v3658, 2
    %vm3660 = vcmp.gt.s32.totalorder 0, %v3659
    %v3661 = vsel %vm3660, 0, %v3659
    %v3662 = vsub.s32 32, %v3661
    %v3663 = vshll.u32 %v3654, %v3661
    %v3664 = vshrl.u32 %v3646, %v3662
    %v3665 = vor.u32 %v3663, %v3664
    %v3666 = vsub.s32 4294967266, %v3661
    %v3667 = vadd.s32 %v3666, 127
    %v3668 = vshll.u32 %v3667, 23
    %v3669 = vor.u32 4788187, %v3668
    %v3670 = vand.u32 2147483647, %v3669
    %v3672 = vcvt.s32.f32 %v3665
    %v3673 = vmul.f32 %v3672, %v3670
    %v3674 = vxor.u32 %v3673, 2147483648
    %v3675 = vsel %vm3554, %v3674, %v3673
    %v3676 = vsub.s32 4, %v3652
    %v3677 = vsel %vm3554, %v3676, %v3652
    %v3678 = vsel %vm3553, %v3393, %v3675
    %v3679 = vsel %vm3553, 0, %v3677
    %v3680 = vmul.f32 %v3678, %v3678
    %v3681 = vmul.f32 %v3680, -0.001358992
    %v3682 = vadd.f32 %v3681, 0.041655596
    %v3683 = vmul.f32 %v3680, %v3682
    %v3684 = vadd.f32 %v3683, -0.4999988
    %v3685 = vmul.f32 %v3680, %v3684
    %v3686 = vadd.f32 1.0, %v3685
    %v3687 = vmul.f32 %v3678, %v3678
    %v3688 = vmul.f32 %v3687, -0.00019511016
    %v3689 = vadd.f32 %v3688, 0.008332121
    %v3690 = vmul.f32 %v3687, %v3689
    %v3691 = vadd.f32 %v3690, -0.16666654
    %v3692 = vmul.f32 %v3687, %v3691
    %v3693 = vadd.f32 %v3692, 1.0
    %v3694 = vmul.f32 %v3693, %v3678
    %vm3695 = vweird.f32 %v3393
    %v3696 = vadd.s32 %v3679, 3
    %v3697 = vand.u32 %v3696, 3
    %vm3698 = vcmp.lt.s32.totalorder %v3697, 2
    %vm3699 = vcmp.eq.s32.totalorder %v3697, 0
    %v3700 = vxor.u32 %v3694, 2147483648
    %v3701 = vsel %vm3699, %v3686, %v3700
    %vm3702 = vcmp.eq.s32.totalorder %v3697, 2
    %v3703 = vxor.u32 %v3686, 2147483648
    %v3704 = vsel %vm3702, %v3703, %v3694
    %v3705 = vsel %vm3698, %v3701, %v3704
    %v3706 = vsel %vm3695, nan, %v3705
    %v3707 = vmul.f32 %v3392, %v3551
    %v3708 = vsub.f32 0.0, %v3392
    %v3709 = vmul.f32 %v3708, %v3706
    %v3710 = vmul.f32 %v3392, %v3706
    %v3711 = vld [vmem:[#allocation16] sm:$0x1]
    %v3713 = vperm.slane %v3711, 0
    %v3715 = vadd.f32 %v3338, %v3713
    %v3716 = vand.u32 2147483647, %v3715
    %v3717 = vsub.f32 0.0, %v3716
    %v3718 = vmul.f32 %v3717, 1.442695
    %v3719 = vpow.pop %v3718
    %vm3720 = vcmp.ge.f32.partialorder %v3715, 0.0
    %v3721 = vadd.f32 %v3719, 1.0
    %v3722 = vrcp.pop %v3721
    %v3723 = vmul.f32 %v3721, %v3722
    %v3724 = vsub.f32 1.0, %v3723
    %v3725 = vmul.f32 %v3722, %v3724
    %v3726 = vadd.f32 %v3722, %v3725
    %vm3727 = vweird.f32 %v3721
    %vm3728 = vweird.f32 %v3722
    %vm3729 = vmor %vm3727, %vm3728
    %v3730 = vsel %vm3729, %v3722, %v3726
    %v3731 = vand.u32 2147483647, %v3721
    %vm3732 = vcmp.eq.f32.partialorder %v3731, 8.507059e+37
    %v3733 = vand.u32 %v3721, 2147483648
    %v3734 = vor.u32 1.1754944e-38, %v3733
    %v3735 = vsel %vm3732, %v3734, %v3730
    %v3736 = vmul.f32 1.0, %v3735
    %v3737 = vmul.f32 %v3719, %v3735
    %v3738 = vsel %vm3720, %v3736, %v3737
    %v3739 = vadd.f32 %v3738, 0.01
    %v3740 = vmul.f32 %v3715, 6.2831855
    %v3741 = vmul.f32 %v3715, 5.0
    %v3742 = vtanh.pop %v3741
    %v3743 = vand.u32 2147483647, %v3740
    %vm3744 = vcmp.le.f32.partialorder %v3743, 0.7853982
    %vm3745 = vcmp.lt.s32.totalorder %v3740, 0
    %v3746 = vand.u32 %v3740, 2139095040
    %v3747 = vshrl.u32 %v3746, 23
    %v3748 = vsub.s32 %v3747, 127
    %v3749 = vand.u32 2147483647, %v3740
    %v3750 = vand.u32 %v3749, 8388607
    %v3751 = vor.u32 %v3750, 8388608
    %v3752 = vsub.s32 0, %v3751
    %v3753 = vadd.s32 %v3748, 1
    %vm3754 = vcmp.gt.s32.totalorder %v3753, 0
    %v3755 = vsel %vm3754, %v3753, 0
    %v3756 = vshrl.u32 %v3755, 5
    %v3757 = vand.u32 %v3755, 31
    %v3758 = vsub.s32 32, %v3757
    %v3759 = vshrl.u32 683565275, %v3758
    %v3760 = vshll.u32 683565275, %v3757
    %v3761 = vshrl.u32 2475754826, %v3758
    %v3762 = vor.u32 %v3760, %v3761
    %v3763 = vshll.u32 2475754826, %v3757
    %v3764 = vshrl.u32 2131351028, %v3758
    %v3765 = vor.u32 %v3763, %v3764
    %v3766 = vshll.u32 2131351028, %v3757
    %v3767 = vshrl.u32 2102212464, %v3758
    %v3768 = vor.u32 %v3766, %v3767
    %v3769 = vshll.u32 2102212464, %v3757
    %v3770 = vshrl.u32 920167782, %v3758
    %v3771 = vor.u32 %v3769, %v3770
    %v3772 = vshll.u32 920167782, %v3757
    %v3773 = vshrl.u32 1326507024, %v3758
    %v3774 = vor.u32 %v3772, %v3773
    %vm3775 = vcmp.lt.s32.totalorder %v3756, 1
    %vm3776 = vcmp.lt.s32.totalorder %v3756, 2
    %vm3777 = vcmp.lt.s32.totalorder %v3756, 3
    %vm3778 = vcmp.lt.s32.totalorder %v3756, 4
    %v3779 = vsel %vm3775, %v3759, %v3762
    %v3780 = vsel %vm3778, %v3768, 2102212464
    %v3781 = vsel %vm3777, %v3765, %v3780
    %v3782 = vsel %vm3776, %v3779, %v3781
    %v3783 = vsel %vm3775, %v3762, %v3765
    %v3784 = vsel %vm3778, %v3771, 920167782
    %v3785 = vsel %vm3777, %v3768, %v3784
    %v3786 = vsel %vm3776, %v3783, %v3785
    %v3787 = vsel %vm3775, %v3765, %v3768
    %v3788 = vsel %vm3778, %v3774, 1326507024
    %v3789 = vsel %vm3777, %v3771, %v3788
    %v3790 = vsel %vm3776, %v3787, %v3789
    %v3791 = vshll.u32 %v3751, 8
    %v3792 = vand.u32 %v3791, 65535
    %v3793 = vshrl.u32 %v3791, 16
    %v3794 = vand.u32 %v3790, 65535
    %v3795 = vshrl.u32 %v3790, 16
    %v3796 = vmul.u32 %v3792, %v3794
    %v3797 = vmul.u32 %v3792, %v3795
    %v3798 = vmul.u32 %v3793, %v3794
    %v3799 = vmul.u32 %v3793, %v3795
    %v3800 = vshll.u32 %v3797, 16
    %v3801 = vshrl.u32 %v3797, 16
    %v3802 = vshll.u32 %v3798, 16
    %v3803 = vshrl.u32 %v3798, 16
    %vm3804 = vc.u32 %v3796, %v3800
    %v3805 = vsel %vm3804, 1, 0
    %v3806 = vadd.s32 %v3796, %v3800
    %v3807 = vadd.s32 %v3799, %v3805
    %vm3808 = vc.u32 %v3806, %v3802
    %v3809 = vsel %vm3808, 1, 0
    %v3810 = vadd.s32 %v3806, %v3802
    %v3811 = vadd.s32 %v3807, %v3809
    %v3812 = vadd.s32 %v3811, %v3801
    %v3813 = vadd.s32 %v3812, %v3803
    %v3814 = vand.u32 %v3791, 65535
    %v3815 = vshrl.u32 %v3791, 16
    %v3816 = vand.u32 %v3786, 65535
    %v3817 = vshrl.u32 %v3786, 16
    %v3818 = vmul.u32 %v3814, %v3816
    %v3819 = vmul.u32 %v3814, %v3817
    %v3820 = vmul.u32 %v3815, %v3816
    %v3821 = vmul.u32 %v3815, %v3817
    %v3822 = vshll.u32 %v3819, 16
    %v3823 = vshrl.u32 %v3819, 16
    %v3824 = vshll.u32 %v3820, 16
    %v3825 = vshrl.u32 %v3820, 16
    %vm3826 = vc.u32 %v3818, %v3822
    %v3827 = vsel %vm3826, 1, 0
    %v3828 = vadd.s32 %v3818, %v3822
    %v3829 = vadd.s32 %v3821, %v3827
    %vm3830 = vc.u32 %v3828, %v3824
    %v3831 = vsel %vm3830, 1, 0
    %v3832 = vadd.s32 %v3828, %v3824
    %v3833 = vadd.s32 %v3829, %v3831
    %v3834 = vadd.s32 %v3833, %v3823
    %v3835 = vadd.s32 %v3834, %v3825
    %v3836 = vmul.u32 %v3791, %v3782
    %v3837 = vadd.s32 %v3813, %v3832
    %vm3838 = vc.u32 %v3813, %v3832
    %v3839 = vadd.s32 %v3835, 1
    %v3840 = vsel %vm3838, %v3839, %v3835
    %v3841 = vadd.s32 %v3836, %v3840
    %v3842 = vadd.s32 %v3841, 536870912
    %v3843 = vshrl.u32 %v3842, 30
    %v3844 = vshll.u32 %v3843, 30
    %v3845 = vsub.s32 %v3841, %v3844
    %vm3846 = vcmp.lt.s32.totalorder %v3845, 0
    %v3847 = vsub.s32 0, %v3845
    %v3848 = vsel %vm3846, %v3847, %v3845
    %v3849 = vclz %v3848
    %v3850 = vsub.s32 %v3849, 2
    %vm3851 = vcmp.gt.s32.totalorder 0, %v3850
    %v3852 = vsel %vm3851, 0, %v3850
    %v3853 = vsub.s32 32, %v3852
    %v3854 = vshll.u32 %v3845, %v3852
    %v3855 = vshrl.u32 %v3837, %v3853
    %v3856 = vor.u32 %v3854, %v3855
    %v3857 = vsub.s32 4294967266, %v3852
    %v3858 = vadd.s32 %v3857, 127
    %v3859 = vshll.u32 %v3858, 23
    %v3860 = vor.u32 4788187, %v3859
    %v3861 = vand.u32 2147483647, %v3860
    %v3863 = vcvt.s32.f32 %v3856
    %v3864 = vmul.f32 %v3863, %v3861
    %v3865 = vxor.u32 %v3864, 2147483648
    %v3866 = vsel %vm3745, %v3865, %v3864
    %v3867 = vsub.s32 4, %v3843
    %v3868 = vsel %vm3745, %v3867, %v3843
    %v3869 = vsel %vm3744, %v3740, %v3866
    %v3870 = vsel %vm3744, 0, %v3868
    %v3871 = vmul.f32 %v3869, %v3869
    %v3872 = vmul.f32 %v3871, -0.001358992
    %v3873 = vadd.f32 %v3872, 0.041655596
    %v3874 = vmul.f32 %v3871, %v3873
    %v3875 = vadd.f32 %v3874, -0.4999988
    %v3876 = vmul.f32 %v3871, %v3875
    %v3877 = vadd.f32 1.0, %v3876
    %v3878 = vmul.f32 %v3869, %v3869
    %v3879 = vmul.f32 %v3878, -0.00019511016
    %v3880 = vadd.f32 %v3879, 0.008332121
    %v3881 = vmul.f32 %v3878, %v3880
    %v3882 = vadd.f32 %v3881, -0.16666654
    %v3883 = vmul.f32 %v3878, %v3882
    %v3884 = vadd.f32 %v3883, 1.0
    %v3885 = vmul.f32 %v3884, %v3869
    %vm3886 = vweird.f32 %v3740
    %v3887 = vand.u32 %v3870, 3
    %vm3888 = vcmp.lt.s32.totalorder %v3887, 2
    %vm3889 = vcmp.eq.s32.totalorder %v3887, 0
    %v3890 = vxor.u32 %v3885, 2147483648
    %v3891 = vsel %vm3889, %v3877, %v3890
    %vm3892 = vcmp.eq.s32.totalorder %v3887, 2
    %v3893 = vxor.u32 %v3877, 2147483648
    %v3894 = vsel %vm3892, %v3893, %v3885
    %v3895 = vsel %vm3888, %v3891, %v3894
    %v3896 = vsel %vm3886, nan, %v3895
    %v3897 = vand.u32 2147483647, %v3740
    %vm3898 = vcmp.le.f32.partialorder %v3897, 0.7853982
    %vm3899 = vcmp.lt.s32.totalorder %v3740, 0
    %v3900 = vand.u32 %v3740, 2139095040
    %v3901 = vshrl.u32 %v3900, 23
    %v3902 = vsub.s32 %v3901, 127
    %v3903 = vand.u32 2147483647, %v3740
    %v3904 = vand.u32 %v3903, 8388607
    %v3905 = vor.u32 %v3904, 8388608
    %v3906 = vsub.s32 0, %v3905
    %v3907 = vadd.s32 %v3902, 1
    %vm3908 = vcmp.gt.s32.totalorder %v3907, 0
    %v3909 = vsel %vm3908, %v3907, 0
    %v3910 = vshrl.u32 %v3909, 5
    %v3911 = vand.u32 %v3909, 31
    %v3912 = vsub.s32 32, %v3911
    %v3913 = vshrl.u32 683565275, %v3912
    %v3914 = vshll.u32 683565275, %v3911
    %v3915 = vshrl.u32 2475754826, %v3912
    %v3916 = vor.u32 %v3914, %v3915
    %v3917 = vshll.u32 2475754826, %v3911
    %v3918 = vshrl.u32 2131351028, %v3912
    %v3919 = vor.u32 %v3917, %v3918
    %v3920 = vshll.u32 2131351028, %v3911
    %v3921 = vshrl.u32 2102212464, %v3912
    %v3922 = vor.u32 %v3920, %v3921
    %v3923 = vshll.u32 2102212464, %v3911
    %v3924 = vshrl.u32 920167782, %v3912
    %v3925 = vor.u32 %v3923, %v3924
    %v3926 = vshll.u32 920167782, %v3911
    %v3927 = vshrl.u32 1326507024, %v3912
    %v3928 = vor.u32 %v3926, %v3927
    %vm3929 = vcmp.lt.s32.totalorder %v3910, 1
    %vm3930 = vcmp.lt.s32.totalorder %v3910, 2
    %vm3931 = vcmp.lt.s32.totalorder %v3910, 3
    %vm3932 = vcmp.lt.s32.totalorder %v3910, 4
    %v3933 = vsel %vm3929, %v3913, %v3916
    %v3934 = vsel %vm3932, %v3922, 2102212464
    %v3935 = vsel %vm3931, %v3919, %v3934
    %v3936 = vsel %vm3930, %v3933, %v3935
    %v3937 = vsel %vm3929, %v3916, %v3919
    %v3938 = vsel %vm3932, %v3925, 920167782
    %v3939 = vsel %vm3931, %v3922, %v3938
    %v3940 = vsel %vm3930, %v3937, %v3939
    %v3941 = vsel %vm3929, %v3919, %v3922
    %v3942 = vsel %vm3932, %v3928, 1326507024
    %v3943 = vsel %vm3931, %v3925, %v3942
    %v3944 = vsel %vm3930, %v3941, %v3943
    %v3945 = vshll.u32 %v3905, 8
    %v3946 = vand.u32 %v3945, 65535
    %v3947 = vshrl.u32 %v3945, 16
    %v3948 = vand.u32 %v3944, 65535
    %v3949 = vshrl.u32 %v3944, 16
    %v3950 = vmul.u32 %v3946, %v3948
    %v3951 = vmul.u32 %v3946, %v3949
    %v3952 = vmul.u32 %v3947, %v3948
    %v3953 = vmul.u32 %v3947, %v3949
    %v3954 = vshll.u32 %v3951, 16
    %v3955 = vshrl.u32 %v3951, 16
    %v3956 = vshll.u32 %v3952, 16
    %v3957 = vshrl.u32 %v3952, 16
    %vm3958 = vc.u32 %v3950, %v3954
    %v3959 = vsel %vm3958, 1, 0
    %v3960 = vadd.s32 %v3950, %v3954
    %v3961 = vadd.s32 %v3953, %v3959
    %vm3962 = vc.u32 %v3960, %v3956
    %v3963 = vsel %vm3962, 1, 0
    %v3964 = vadd.s32 %v3960, %v3956
    %v3965 = vadd.s32 %v3961, %v3963
    %v3966 = vadd.s32 %v3965, %v3955
    %v3967 = vadd.s32 %v3966, %v3957
    %v3968 = vand.u32 %v3945, 65535
    %v3969 = vshrl.u32 %v3945, 16
    %v3970 = vand.u32 %v3940, 65535
    %v3971 = vshrl.u32 %v3940, 16
    %v3972 = vmul.u32 %v3968, %v3970
    %v3973 = vmul.u32 %v3968, %v3971
    %v3974 = vmul.u32 %v3969, %v3970
    %v3975 = vmul.u32 %v3969, %v3971
    %v3976 = vshll.u32 %v3973, 16
    %v3977 = vshrl.u32 %v3973, 16
    %v3978 = vshll.u32 %v3974, 16
    %v3979 = vshrl.u32 %v3974, 16
    %vm3980 = vc.u32 %v3972, %v3976
    %v3981 = vsel %vm3980, 1, 0
    %v3982 = vadd.s32 %v3972, %v3976
    %v3983 = vadd.s32 %v3975, %v3981
    %vm3984 = vc.u32 %v3982, %v3978
    %v3985 = vsel %vm3984, 1, 0
    %v3986 = vadd.s32 %v3982, %v3978
    %v3987 = vadd.s32 %v3983, %v3985
    %v3988 = vadd.s32 %v3987, %v3977
    %v3989 = vadd.s32 %v3988, %v3979
    %v3990 = vmul.u32 %v3945, %v3936
    %v3991 = vadd.s32 %v3967, %v3986
    %vm3992 = vc.u32 %v3967, %v3986
    %v3993 = vadd.s32 %v3989, 1
    %v3994 = vsel %vm3992, %v3993, %v3989
    %v3995 = vadd.s32 %v3990, %v3994
    %v3996 = vadd.s32 %v3995, 536870912
    %v3997 = vshrl.u32 %v3996, 30
    %v3998 = vshll.u32 %v3997, 30
    %v3999 = vsub.s32 %v3995, %v3998
    %vm4000 = vcmp.lt.s32.totalorder %v3999, 0
    %v4001 = vsub.s32 0, %v3999
    %v4002 = vsel %vm4000, %v4001, %v3999
    %v4003 = vclz %v4002
    %v4004 = vsub.s32 %v4003, 2
    %vm4005 = vcmp.gt.s32.totalorder 0, %v4004
    %v4006 = vsel %vm4005, 0, %v4004
    %v4007 = vsub.s32 32, %v4006
    %v4008 = vshll.u32 %v3999, %v4006
    %v4009 = vshrl.u32 %v3991, %v4007
    %v4010 = vor.u32 %v4008, %v4009
    %v4011 = vsub.s32 4294967266, %v4006
    %v4012 = vadd.s32 %v4011, 127
    %v4013 = vshll.u32 %v4012, 23
    %v4014 = vor.u32 4788187, %v4013
    %v4015 = vand.u32 2147483647, %v4014
    %v4017 = vcvt.s32.f32 %v4010
    %v4018 = vmul.f32 %v4017, %v4015
    %v4019 = vxor.u32 %v4018, 2147483648
    %v4020 = vsel %vm3899, %v4019, %v4018
    %v4021 = vsub.s32 4, %v3997
    %v4022 = vsel %vm3899, %v4021, %v3997
    %v4023 = vsel %vm3898, %v3740, %v4020
    %v4024 = vsel %vm3898, 0, %v4022
    %v4025 = vmul.f32 %v4023, %v4023
    %v4026 = vmul.f32 %v4025, -0.001358992
    %v4027 = vadd.f32 %v4026, 0.041655596
    %v4028 = vmul.f32 %v4025, %v4027
    %v4029 = vadd.f32 %v4028, -0.4999988
    %v4030 = vmul.f32 %v4025, %v4029
    %v4031 = vadd.f32 1.0, %v4030
    %v4032 = vmul.f32 %v4023, %v4023
    %v4033 = vmul.f32 %v4032, -0.00019511016
    %v4034 = vadd.f32 %v4033, 0.008332121
    %v4035 = vmul.f32 %v4032, %v4034
    %v4036 = vadd.f32 %v4035, -0.16666654
    %v4037 = vmul.f32 %v4032, %v4036
    %v4038 = vadd.f32 %v4037, 1.0
    %v4039 = vmul.f32 %v4038, %v4023
    %vm4040 = vweird.f32 %v3740
    %v4041 = vadd.s32 %v4024, 3
    %v4042 = vand.u32 %v4041, 3
    %vm4043 = vcmp.lt.s32.totalorder %v4042, 2
    %vm4044 = vcmp.eq.s32.totalorder %v4042, 0
    %v4045 = vxor.u32 %v4039, 2147483648
    %v4046 = vsel %vm4044, %v4031, %v4045
    %vm4047 = vcmp.eq.s32.totalorder %v4042, 2
    %v4048 = vxor.u32 %v4031, 2147483648
    %v4049 = vsel %vm4047, %v4048, %v4039
    %v4050 = vsel %vm4043, %v4046, %v4049
    %v4051 = vsel %vm4040, nan, %v4050
    %v4052 = vld [vmem:[#allocation21] sm:$0xff]
    %4054 = vrot.lane.b32.xlu0 %v3896, 112
    %v4055 = vpop.permute.xlu0 %4054
    %v4057 = vmul.f32 %v3739, %v4055
    %vm4058 = vcmask 64512
    %v4060 = vsel %vm4058, %v4057, 0
    %4062 = vmatpush.msra.mxu0 0.0
    %4063 = vmatpush.msra.mxu0 0.0
    %4064 = vmatpush.msra.mxu0 0.0
    %4065 = vmatpush.msra.mxu0 0.0
    %4066 = vmatpush.msra.mxu0 0.0
    %4067 = vmatpush.msra.mxu0 0.0
    %4068 = vmatpush.msra.mxu0 0.0
    %4069 = vmatpush.msra.mxu0 0.0
    %4070 = vmatpush.msra.mxu0 0.0
    %4071 = vmatpush.msra.mxu0 0.0
    %4072 = vmatpush.msra.mxu0 0.0
    %4073 = vmatpush.msra.mxu0 0.0
    %4074 = vmatpush.msra.mxu0 0.0
    %4075 = vmatpush.msra.mxu0 0.0
    %4076 = vmatpush.msra.mxu0 0.0
    %4077 = vmatpush.msra.mxu0 %v4052
    %4078 = vmatmul.f32.gmra.mxu0 %v4060
    %v4079 = vpop.f32.mrf.mxu0
    %v4080 = vadd.f32 0.0, %v4079
    %4081 = vdwg.mxu0
    %v4082 = vsub.f32 0.0, %v3739
    %4084 = vrot.lane.b32.xlu0 %v4051, 112
    %v4085 = vpop.permute.xlu0 %4084
    %v4087 = vmul.f32 %v4082, %v4085
    %v4089 = vsel %vm4058, %v4087, 0
    %4091 = vmatpush.msra.mxu0 0.0
    %4092 = vmatpush.msra.mxu0 0.0
    %4093 = vmatpush.msra.mxu0 0.0
    %4094 = vmatpush.msra.mxu0 0.0
    %4095 = vmatpush.msra.mxu0 0.0
    %4096 = vmatpush.msra.mxu0 0.0
    %4097 = vmatpush.msra.mxu0 0.0
    %4098 = vmatpush.msra.mxu0 0.0
    %4099 = vmatpush.msra.mxu0 0.0
    %4100 = vmatpush.msra.mxu0 0.0
    %4101 = vmatpush.msra.mxu0 0.0
    %4102 = vmatpush.msra.mxu0 0.0
    %4103 = vmatpush.msra.mxu0 0.0
    %4104 = vmatpush.msra.mxu0 0.0
    %4105 = vmatpush.msra.mxu0 0.0
    %4106 = vmatpush.msra.mxu0 %v4052
    %4107 = vmatmul.f32.gmra.mxu0 %v4089
    %v4108 = vpop.f32.mrf.mxu0
    %v4109 = vadd.f32 0.0, %v4108
    %4110 = vdwg.mxu0
    %4112 = vrot.lane.b32.xlu0 %v3742, 96
    %v4113 = vpop.permute.xlu0 %4112
    %v4114 = vsel %vm4058, %v4113, 0
    %4116 = vmatpush.msra.mxu0 0.0
    %4117 = vmatpush.msra.mxu0 0.0
    %4118 = vmatpush.msra.mxu0 0.0
    %4119 = vmatpush.msra.mxu0 0.0
    %4120 = vmatpush.msra.mxu0 0.0
    %4121 = vmatpush.msra.mxu0 0.0
    %4122 = vmatpush.msra.mxu0 0.0
    %4123 = vmatpush.msra.mxu0 0.0
    %4124 = vmatpush.msra.mxu0 0.0
    %4125 = vmatpush.msra.mxu0 0.0
    %4126 = vmatpush.msra.mxu0 0.0
    %4127 = vmatpush.msra.mxu0 0.0
    %4128 = vmatpush.msra.mxu0 0.0
    %4129 = vmatpush.msra.mxu0 0.0
    %4130 = vmatpush.msra.mxu0 0.0
    %4131 = vmatpush.msra.mxu0 %v4052
    %4132 = vmatmul.f32.gmra.mxu0 %v4114
    %v4133 = vpop.f32.mrf.mxu0
    %v4134 = vadd.f32 0.0, %v4133
    %4135 = vdwg.mxu0
    %v4136 = vmul.f32 %v3739, %v4085
    %v4138 = vsel %vm4058, %v4136, 0
    %4140 = vmatpush.msra.mxu0 0.0
    %4141 = vmatpush.msra.mxu0 0.0
    %4142 = vmatpush.msra.mxu0 0.0
    %4143 = vmatpush.msra.mxu0 0.0
    %4144 = vmatpush.msra.mxu0 0.0
    %4145 = vmatpush.msra.mxu0 0.0
    %4146 = vmatpush.msra.mxu0 0.0
    %4147 = vmatpush.msra.mxu0 0.0
    %4148 = vmatpush.msra.mxu0 0.0
    %4149 = vmatpush.msra.mxu0 0.0
    %4150 = vmatpush.msra.mxu0 0.0
    %4151 = vmatpush.msra.mxu0 0.0
    %4152 = vmatpush.msra.mxu0 0.0
    %4153 = vmatpush.msra.mxu0 0.0
    %4154 = vmatpush.msra.mxu0 0.0
    %4155 = vmatpush.msra.mxu0 %v4052
    %4156 = vmatmul.f32.gmra.mxu0 %v4138
    %v4157 = vpop.f32.mrf.mxu0
    %v4158 = vadd.f32 0.0, %v4157
    %4159 = vdwg.mxu0
    %4160 = vrot.lane.b32.xlu0 %v3742, 88
    %v4161 = vpop.permute.xlu0 %4160
    %v4162 = vsel %vm4058, %v4161, 0
    %4164 = vmatpush.msra.mxu0 0.0
    %4165 = vmatpush.msra.mxu0 0.0
    %4166 = vmatpush.msra.mxu0 0.0
    %4167 = vmatpush.msra.mxu0 0.0
    %4168 = vmatpush.msra.mxu0 0.0
    %4169 = vmatpush.msra.mxu0 0.0
    %4170 = vmatpush.msra.mxu0 0.0
    %4171 = vmatpush.msra.mxu0 0.0
    %4172 = vmatpush.msra.mxu0 0.0
    %4173 = vmatpush.msra.mxu0 0.0
    %4174 = vmatpush.msra.mxu0 0.0
    %4175 = vmatpush.msra.mxu0 0.0
    %4176 = vmatpush.msra.mxu0 0.0
    %4177 = vmatpush.msra.mxu0 0.0
    %4178 = vmatpush.msra.mxu0 0.0
    %4179 = vmatpush.msra.mxu0 %v4052
    %4180 = vmatmul.f32.gmra.mxu0 %v4162
    %v4181 = vpop.f32.mrf.mxu0
    %v4182 = vadd.f32 0.0, %v4181
    %4183 = vdwg.mxu0
    %v4184 = vmul.f32 %v4080, %v3707
    %v4185 = vmul.f32 %v4109, %v3710
    %v4186 = vadd.f32 %v4184, %v4185
    %v4187 = vmul.f32 %v4080, %v3709
    %v4188 = vmul.f32 %v4109, %v3707
    %v4189 = vadd.f32 %v4187, %v4188
    %v4190 = vmul.f32 %v4080, %v3395
    %v4191 = vmul.f32 %v4109, %v3397
    %v4192 = vadd.f32 %v4190, %v4191
    %v4193 = vadd.f32 %v4192, %v4134
    %v4194 = vmul.f32 %v4158, %v3707
    %v4195 = vmul.f32 %v4080, %v3710
    %v4196 = vadd.f32 %v4194, %v4195
    %v4197 = vmul.f32 %v4158, %v3709
    %v4198 = vadd.f32 %v4197, %v4184
    %v4199 = vmul.f32 %v4158, %v3395
    %v4200 = vmul.f32 %v4080, %v3397
    %v4201 = vadd.f32 %v4199, %v4200
    %v4202 = vadd.f32 %v4201, %v4182
    %v4203 = vld [vmem:[#allocation19] sm:$0x1]
    %v4205 = vperm.slane %v4203, 0
    %v4207 = vadd.f32 %v3178, %v4205
    %v4208 = vld [vmem:[#allocation18] sm:$0x1]
    %v4210 = vperm.slane %v4208, 0
    %4211 = vrot.lane.b32.xlu0 %v4210, 48
    %v4212 = vpop.permute.xlu0 %4211
    %v4214 = vadd.f32 %v3338, %v4212
    %v4215 = vsub.f32 0.0, %v4214
    %v4216 = vmax.f32 %v4215, 0.0
    %v4217 = vand.u32 2147483647, %v4214
    %v4218 = vsub.f32 0.0, %v4217
    %v4219 = vmul.f32 %v4218, 1.442695
    %v4220 = vpow.pop %v4219
    %v4221 = vadd.f32 %v4220, 1.0
    %v4222 = vlog2.pop %v4221
    %v4223 = vmul.f32 %v4222, 0.6931472
    %v4224 = vmul.f32 -0.5, %v4220
    %v4225 = vadd.f32 %v4224, 1.0
    %v4226 = vmul.f32 %v4225, %v4220
    %v4227 = vand.u32 2147483647, %v4220
    %vm4228 = vcmp.lt.f32.partialorder %v4227, 0.0004427343
    %v4229 = vsel %vm4228, %v4226, %v4223
    %v4230 = vadd.f32 %v4216, %v4229
    %v4231 = vsub.f32 0.0, %v4230
    %v4232 = vsub.f32 0.0, %v4207
    %v4233 = vmax.f32 %v4232, 0.0
    %v4234 = vand.u32 2147483647, %v4207
    %v4235 = vsub.f32 0.0, %v4234
    %v4236 = vmul.f32 %v4235, 1.442695
    %v4237 = vpow.pop %v4236
    %v4238 = vadd.f32 %v4237, 1.0
    %v4239 = vlog2.pop %v4238
    %v4240 = vmul.f32 %v4239, 0.6931472
    %v4241 = vmul.f32 -0.5, %v4237
    %v4242 = vadd.f32 %v4241, 1.0
    %v4243 = vmul.f32 %v4242, %v4237
    %v4244 = vand.u32 2147483647, %v4237
    %vm4245 = vcmp.lt.f32.partialorder %v4244, 0.0004427343
    %v4246 = vsel %vm4245, %v4243, %v4240
    %v4247 = vadd.f32 %v4233, %v4246
    %v4248 = vsub.f32 0.0, %v4247
    %4250 = vrot.lane.b32.xlu0 %v4231, 80
    %v4251 = vpop.permute.xlu0 %4250
    %v4252 = vsel %vm4058, %v4251, 0
    %4254 = vmatpush.msra.mxu0 0.0
    %4255 = vmatpush.msra.mxu0 0.0
    %4256 = vmatpush.msra.mxu0 0.0
    %4257 = vmatpush.msra.mxu0 0.0
    %4258 = vmatpush.msra.mxu0 0.0
    %4259 = vmatpush.msra.mxu0 0.0
    %4260 = vmatpush.msra.mxu0 0.0
    %4261 = vmatpush.msra.mxu0 0.0
    %4262 = vmatpush.msra.mxu0 0.0
    %4263 = vmatpush.msra.mxu0 0.0
    %4264 = vmatpush.msra.mxu0 0.0
    %4265 = vmatpush.msra.mxu0 0.0
    %4266 = vmatpush.msra.mxu0 0.0
    %4267 = vmatpush.msra.mxu0 0.0
    %4268 = vmatpush.msra.mxu0 0.0
    %4269 = vmatpush.msra.mxu0 %v4052
    %4270 = vmatmul.f32.gmra.mxu0 %v4252
    %v4271 = vpop.f32.mrf.mxu0
    %v4272 = vadd.f32 %v4248, %v4271
    %4273 = vdwg.mxu0
    %4274 = vst [vmem:[%s15] sm:$0xff] %v4186
    %4275 = vst [vmem:[%s15 + $0x8] sm:$0xff] %v4189
    %4276 = vst [vmem:[%s15 + $0x10] sm:$0xff] %v4193
    %4277 = vst [vmem:[%s15 + $0x18] sm:$0xff] %v4196
    %4278 = vst [vmem:[%s15 + $0x20] sm:$0xff] %v4198
    %4279 = vst [vmem:[%s15 + $0x28] sm:$0xff] %v4202
    %4280 = vst [vmem:[%s15 + $0x30] sm:$0xff] %v4272
    %4281 = vst [vmem:[%s15 + $0x38] sm:$0xff] %v4207
    %4283 = vrot.lane.b32.xlu0 %v4214, 80
    %v4284 = vpop.permute.xlu0 %4283
    %4286 = vst.msk [vmem:[%s16] sm:$0xff] %vm4058, %v4284
    // Predicated region
    $region110: #{capsule_layer_forward.1} parent=1 // pred_check
      _
    $region111: #{capsule_layer_forward.1} parent=1 // pred_check_branch
      %4288 = sbr.rel (0) target = $region113
    $region112: #{capsule_layer_forward.1} parent=1 // pred_region
      _
    $region113: #{capsule_layer_forward.1} parent=1 // pred_fallthru
      _
    // Predicated region
    $region114: #{capsule_layer_forward.1} parent=1 // pred_check
      _
    $region115: #{capsule_layer_forward.1} parent=1 // pred_check_branch
      %4290 = sbr.rel (0) target = $region117
    $region116: #{capsule_layer_forward.1} parent=1 // pred_region
      _
    $region117: #{capsule_layer_forward.1} parent=1 // pred_fallthru
      _
    // Predicated region
    $region118: #{capsule_layer_forward.1} parent=1 // pred_check
      _
    $region119: #{capsule_layer_forward.1} parent=1 // pred_check_branch
      %4292 = sbr.rel (0) target = $region121
    $region120: #{capsule_layer_forward.1} parent=1 // pred_region
      _
    $region121: #{capsule_layer_forward.1} parent=1 // pred_fallthru
      _
    // Predicated region
    $region122: #{capsule_layer_forward.1} parent=1 // pred_check
      _
    $region123: #{capsule_layer_forward.1} parent=1 // pred_check_branch
      %4294 = sbr.rel (0) target = $region125
    $region124: #{capsule_layer_forward.1} parent=1 // pred_region
      _
    $region125: #{capsule_layer_forward.1} parent=1 // pred_fallthru
      _
    // Predicated region
    $region126: #{capsule_layer_forward.1} parent=1 // pred_check
      _
    $region127: #{capsule_layer_forward.1} parent=1 // pred_check_branch
      %4296 = sbr.rel (0) target = $region129
    $region128: #{capsule_layer_forward.1} parent=1 // pred_region
      _
    $region129: #{capsule_layer_forward.1} parent=1 // pred_fallthru
      _
    // Predicated region
    $region130: #{capsule_layer_forward.1} parent=1 // pred_check
      _
    $region131: #{capsule_layer_forward.1} parent=1 // pred_check_branch
      %4298 = sbr.rel (0) target = $region133
    $region132: #{capsule_layer_forward.1} parent=1 // pred_region
      _
    $region133: #{capsule_layer_forward.1} parent=1 // pred_fallthru
      _
    // Predicated region
    $region134: #{capsule_layer_forward.1} parent=1 // pred_check
      _
    $region135: #{capsule_layer_forward.1} parent=1 // pred_check_branch
      %4300 = sbr.rel (0) target = $region137
    $region136: #{capsule_layer_forward.1} parent=1 // pred_region
      _
    $region137: #{capsule_layer_forward.1} parent=1 // pred_fallthru
      _
    // Predicated region
    $region138: #{capsule_layer_forward.1} parent=1 // pred_check
      _
    $region139: #{capsule_layer_forward.1} parent=1 // pred_check_branch
      %4302 = sbr.rel (0) target = $region141
    $region140: #{capsule_layer_forward.1} parent=1 // pred_region
      _
    $region141: #{capsule_layer_forward.1} parent=1 // pred_fallthru
      _
    %4303 = vsyncpa [#allocation3], 1
    %4304 = vsyncpa [#allocation5], 1
    %4305 = vsyncpa [#allocation8], 1
    %4306 = vsyncpa [#allocation11], 1
    %4307 = vsyncpa [#allocation14], 1
    %4308 = vsyncpa [#allocation17], 1
    %4309 = vsyncpa [#allocation20], 1

</llo_original>
